<compile_context>
chip_gen: v7x
topology: tpu7x:2x2x1
jax: 0.10.0
libtpu: 0.0.40
codegen_flags: <defaults>
</compile_context>

<pallas_src>
import jax
import jax.numpy as jnp
from jax.experimental import pallas as pl
from jax.experimental.pallas import tpu as pltpu

# Small hyperparameters consistent with the module structure
VOCAB = 65
VOCAB_PAD = 128          # lane-dense logits slab; sliced back to VOCAB in wrapper
N_EMBED = 64
N_HEAD = 4
HEAD = N_EMBED // N_HEAD
N_LAYER = 2
BLOCK_SIZE = 16          # sequence length T
BATCH = 2
LN_EPS = 1e-5

# Set True on v6e/v7x for ~2x MXU rate (breaks exact fp32 parity with reference).
USE_BF16_MATMUL = False


def _c(a):
    """Optionally cast MXU operands to bf16 (accumulation stays f32)."""
    return a.astype(jnp.bfloat16) if USE_BF16_MATMUL else a


def _layernorm(h, g, b):
    mu = jnp.mean(h, axis=-1, keepdims=True)
    var = jnp.mean((h - mu) ** 2, axis=-1, keepdims=True)
    return (h - mu) * jax.lax.rsqrt(var + LN_EPS) * g + b


def bigram_fused_kernel(tok_ref, pos_ref, amask_ref, hsel_ref,
                        wq_ref, wk_ref, wv_ref, wo_ref, bo_ref,
                        g1_ref, be1_ref, g2_ref, be2_ref,
                        w1_ref, b1_ref, w2_ref, b2_ref,
                        wh_ref, bh_ref,
                        x_out_ref, logits_ref):
    """Whole forward in one invocation.

    Activations are (R, C) with R = B*T flattened rows.
    amask_ref : (H*R, R) additive mask, 0 where (same sequence & causal), -1e30 else,
                tiled over the head row-blocks.
    hsel_ref  : (H*R, C) head-select 0/1 mask: row block h keeps channels of head h.
    """
    tok = tok_ref[...]                              # (R, C) token embeddings
    x = tok + pos_ref[...]                          # fused positional add
    R = x.shape[0]
    amask = amask_ref[...]                          # loaded once, outside the loop
    hsel = hsel_ref[...]

    for l in range(N_LAYER):                        # unrolled; weights stay in VMEM
        # --- multi-head self-attention ---
        h = _layernorm(x, g1_ref[l], be1_ref[l])
        # three lane-dense (R,C)@(C,C) matmuls; attention scale folded into wq
        q = jnp.dot(_c(h), _c(wq_ref[l]), preferred_element_type=jnp.float32)
        k = jnp.dot(_c(h), _c(wk_ref[l]), preferred_element_type=jnp.float32)
        v = jnp.dot(_c(h), _c(wv_ref[l]), preferred_element_type=jnp.float32)

        # fold heads into rows: row block h of q_rep holds only head-h channels
        q_rep = jnp.concatenate([q] * N_HEAD, axis=0) * hsel          # (H*R, C)

        # one matmul for all heads' scores: S[h*R+q, k] = q_h[q] . k_h[k]
        s = jax.lax.dot_general(
            _c(q_rep), _c(k), (((1,), (1,)), ((), ())),
            preferred_element_type=jnp.float32) + amask                # (H*R, R)
        s = s - jnp.max(s, axis=-1, keepdims=True)
        p = jnp.exp(s)
        p = p * pl.reciprocal(jnp.sum(p, axis=-1, keepdims=True), approx=True)

        # one matmul for all heads' attention outputs, then head-select & fold back
        o_full = jnp.dot(_c(p), _c(v),
                         preferred_element_type=jnp.float32) * hsel    # (H*R, C)
        o = o_full[0:R]
        for hh in range(1, N_HEAD):
            o = o + o_full[hh * R:(hh + 1) * R]                        # (R, C) == concat(heads)

        # single output projection matmul (wo in natural (H*D, C) layout)
        sa = jnp.dot(_c(o), _c(wo_ref[l]),
                     preferred_element_type=jnp.float32) + bo_ref[l]
        # TODO(synk): nn.Dropout(0.2) layers are identity here (eval semantics).
        x = x + sa

        # --- feed-forward ---
        h2 = _layernorm(x, g2_ref[l], be2_ref[l])
        ff = jnp.dot(_c(h2), _c(w1_ref[l]),
                     preferred_element_type=jnp.float32) + b1_ref[l]
        ff = jnp.maximum(ff, 0.0)
        ff = jnp.dot(_c(ff), _c(w2_ref[l]),
                     preferred_element_type=jnp.float32) + b2_ref[l]
        x = x + ff

    x_out_ref[...] = x
    # lm_head consumes token embeddings (as in the reference); ln_f is never
    # applied in forward().  Vocab zero-padded to 128 -> lane-dense stores.
    logits_ref[...] = jnp.dot(_c(tok), _c(wh_ref[...]),
                              preferred_element_type=jnp.float32) + bh_ref[...]


def fused_forward(tok_flat, pos_flat, amask_fold, head_sel, kp):
    R, C = tok_flat.shape
    vmem = pl.BlockSpec(memory_space=pltpu.MemorySpace.VMEM)   # whole array in VMEM
    args = (tok_flat, pos_flat, amask_fold, head_sel,
            kp["wq"], kp["wk"], kp["wv"], kp["wo"], kp["bo"],
            kp["g1"], kp["be1"], kp["g2"], kp["be2"],
            kp["w1"], kp["b1"], kp["w2"], kp["b2"],
            kp["wh"], kp["bh"])
    return pl.pallas_call(
        bigram_fused_kernel,
        out_shape=(jax.ShapeDtypeStruct((R, C), jnp.float32),
                   jax.ShapeDtypeStruct((R, VOCAB_PAD), jnp.float32)),
        in_specs=[vmem] * len(args),
        out_specs=(vmem, vmem),
    )(*args)


def init_params(key):
    keys = jax.random.split(key, 3)

    def dense(k, shape, scale=0.02):
        return (scale * jax.random.normal(k, shape)).astype(jnp.float32)

    params = {
        "tok_table": dense(keys[0], (VOCAB, N_EMBED)),
        "pos_table": dense(keys[1], (BLOCK_SIZE, N_EMBED)),
        "w_head": dense(keys[2], (N_EMBED, VOCAB)),
        "b_head": jnp.zeros((1, VOCAB), jnp.float32),
        "blocks": [],
    }
    for l in range(N_LAYER):
        ks = jax.random.split(jax.random.fold_in(key, 100 + l), 6)
        params["blocks"].append({
            "wq": dense(ks[0], (N_EMBED, N_EMBED)),
            "wk": dense(ks[1], (N_EMBED, N_EMBED)),
            "wv": dense(ks[2], (N_EMBED, N_EMBED)),
            "wo": dense(ks[3], (N_EMBED, N_EMBED)),
            "bo": jnp.zeros((1, N_EMBED), jnp.float32),
            "g1": jnp.ones((1, N_EMBED), jnp.float32),
            "be1": jnp.zeros((1, N_EMBED), jnp.float32),
            "g2": jnp.ones((1, N_EMBED), jnp.float32),
            "be2": jnp.zeros((1, N_EMBED), jnp.float32),
            "w1": dense(ks[4], (N_EMBED, 4 * N_EMBED)),
            "b1": jnp.zeros((1, 4 * N_EMBED), jnp.float32),
            "w2": dense(ks[5], (4 * N_EMBED, N_EMBED)),
            "b2": jnp.zeros((1, N_EMBED), jnp.float32),
        })
    return params


def pack_params(params):
    """Stack per-layer weights on a leading L axis, fold the attention scale
    into wq, and zero-pad the lm_head to a lane-dense vocab.  Called ONCE at
    init (hoisted out of the jitted per-call path)."""
    scale = N_EMBED ** -0.5          # reference: wei = q @ k.T * C**-0.5, C = n_embed

    def stack(name):
        return jnp.stack([blk[name] for blk in params["blocks"]])

    kp = {
        "tok_table": params["tok_table"],
        "pos_table": params["pos_table"],
        "wq": stack("wq") * scale,                   # (L, C, C), scale folded in
        "wk": stack("wk"),
        "wv": stack("wv"),
        "wo": stack("wo"),                           # natural (H*D, C) layout
        "bo": stack("bo"), "g1": stack("g1"), "be1": stack("be1"),
        "g2": stack("g2"), "be2": stack("be2"),
        "w1": stack("w1"), "b1": stack("b1"),
        "w2": stack("w2"), "b2": stack("b2"),
        # vocab zero-padded 65 -> 128 for lane-dense logits stores
        "wh": jnp.zeros((N_EMBED, VOCAB_PAD), jnp.float32).at[:, :VOCAB].set(params["w_head"]),
        "bh": jnp.zeros((1, VOCAB_PAD), jnp.float32).at[:, :VOCAB].set(params["b_head"]),
    }
    return kp


def make_masks(batch, T):
    """Built ONCE outside the jitted path.
    amask_fold: (H*R, R) additive (same-sequence & causal) mask, tiled per head.
    head_sel  : (H*R, C) 0/1 mask selecting head h's channels in row block h."""
    R = batch * T
    r = jnp.arange(R)
    allowed = ((r[:, None] // T) == (r[None, :] // T)) & (r[None, :] <= r[:, None])
    amask = jnp.where(allowed, 0.0, -1e30).astype(jnp.float32)           # (R, R)
    amask_fold = jnp.tile(amask, (N_HEAD, 1))                            # (H*R, R)

    c = jnp.arange(N_EMBED)
    h_of_row = jnp.repeat(jnp.arange(N_HEAD), R)                         # (H*R,)
    head_sel = (h_of_row[:, None] == (c[None, :] // HEAD)).astype(jnp.float32)
    return amask_fold, head_sel


def bigram_forward(kp, idx, amask_fold, head_sel, targets=None):
    """Mirrors BigramLanguageModel.forward: returns (logits, loss, x).  As in
    the reference, logits depend only on token_emb and ln_f is never applied;
    x (the transformer output) is computed by forward() but not used for the
    logits — it is returned here only for inspection."""
    Bb, T = idx.shape
    R = Bb * T
    tok_emb = jnp.take(kp["tok_table"], idx, axis=0)            # (B, T, C) gather (glue)
    tok_flat = tok_emb.reshape(R, N_EMBED)
    pos_flat = jnp.broadcast_to(kp["pos_table"][:T][None],
                                (Bb, T, N_EMBED)).reshape(R, N_EMBED)

    x_flat, logits_pad = fused_forward(tok_flat, pos_flat, amask_fold, head_sel, kp)

    x = x_flat.reshape(Bb, T, N_EMBED)
    logits = logits_pad[:, :VOCAB].reshape(Bb, T, VOCAB)

    if targets is None:
        loss = None
    else:
        lg = logits.reshape(Bb * T, VOCAB)
        tg = targets.reshape(Bb * T)
        logz = jax.nn.logsumexp(lg, axis=-1)
        picked = jnp.take_along_axis(lg, tg[:, None], axis=-1)[:, 0]
        loss = jnp.mean(logz - picked)
    return logits, loss, x


if __name__ == "__main__":
    key = jax.random.PRNGKey(0)
    pkey, ikey = jax.random.split(key)
    params = init_params(pkey)

    # Hoisted one-time setup (NOT in the jitted per-call path)
    kp = pack_params(params)
    amask_fold, head_sel = make_masks(BATCH, BLOCK_SIZE)

    idx = jax.random.randint(ikey, (BATCH, BLOCK_SIZE), 0, VOCAB, dtype=jnp.int32)

    forward = jax.jit(lambda p, i, m, s: bigram_forward(p, i, m, s, None))
    logits, loss, x = forward(kp, idx, amask_fold, head_sel)
    jax.block_until_ready((logits, x))

    assert logits.shape == (BATCH, BLOCK_SIZE, VOCAB)
    assert x.shape == (BATCH, BLOCK_SIZE, N_EMBED)
    assert loss is None
    assert bool(jnp.all(jnp.isfinite(logits))) and bool(jnp.all(jnp.isfinite(x)))
    print("KERNEL_OK")
</pallas_src>

<mosaic_0001>
module attributes {stable_mosaic.version = 11 : i64} {
  func.func @bigram_fused_kernel(%arg0: memref<32x64xf32, #tpu.memory_space<vmem>>, %arg1: memref<32x64xf32, #tpu.memory_space<vmem>>, %arg2: memref<128x32xf32, #tpu.memory_space<vmem>>, %arg3: memref<128x64xf32, #tpu.memory_space<vmem>>, %arg4: memref<2x64x64xf32, #tpu.memory_space<vmem>>, %arg5: memref<2x64x64xf32, #tpu.memory_space<vmem>>, %arg6: memref<2x64x64xf32, #tpu.memory_space<vmem>>, %arg7: memref<2x64x64xf32, #tpu.memory_space<vmem>>, %arg8: memref<2x1x64xf32, #tpu.memory_space<vmem>>, %arg9: memref<2x1x64xf32, #tpu.memory_space<vmem>>, %arg10: memref<2x1x64xf32, #tpu.memory_space<vmem>>, %arg11: memref<2x1x64xf32, #tpu.memory_space<vmem>>, %arg12: memref<2x1x64xf32, #tpu.memory_space<vmem>>, %arg13: memref<2x64x256xf32, #tpu.memory_space<vmem>>, %arg14: memref<2x1x256xf32, #tpu.memory_space<vmem>>, %arg15: memref<2x256x64xf32, #tpu.memory_space<vmem>>, %arg16: memref<2x1x64xf32, #tpu.memory_space<vmem>>, %arg17: memref<64x128xf32, #tpu.memory_space<vmem>>, %arg18: memref<1x128xf32, #tpu.memory_space<vmem>>, %arg19: memref<32x64xf32, #tpu.memory_space<vmem>>, %arg20: memref<32x128xf32, #tpu.memory_space<vmem>>) attributes {dimension_semantics = [], scalar_prefetch = 0 : i64, scratch_operands = 0 : i64, tpu.core_type = #tpu.core_type<tc>} {
    %c0 = arith.constant 0 : index
    %c0_0 = arith.constant 0 : index
    %0 = vector.load %arg0[%c0, %c0_0] : memref<32x64xf32, #tpu.memory_space<vmem>>, vector<32x64xf32>
    %c0_1 = arith.constant 0 : index
    %c0_2 = arith.constant 0 : index
    %1 = vector.load %arg1[%c0_1, %c0_2] : memref<32x64xf32, #tpu.memory_space<vmem>>, vector<32x64xf32>
    %2 = arith.addf %0, %1 : vector<32x64xf32>
    %c0_3 = arith.constant 0 : index
    %c0_4 = arith.constant 0 : index
    %3 = vector.load %arg2[%c0_3, %c0_4] : memref<128x32xf32, #tpu.memory_space<vmem>>, vector<128x32xf32>
    %c0_5 = arith.constant 0 : index
    %c0_6 = arith.constant 0 : index
    %4 = vector.load %arg3[%c0_5, %c0_6] : memref<128x64xf32, #tpu.memory_space<vmem>>, vector<128x64xf32>
    %c0_7 = arith.constant 0 : index
    %c0_8 = arith.constant 0 : index
    %c0_9 = arith.constant 0 : index
    %5 = vector.load %arg9[%c0_7, %c0_8, %c0_9] : memref<2x1x64xf32, #tpu.memory_space<vmem>>, vector<1x1x64xf32>
    %6 = vector.shape_cast %5 : vector<1x1x64xf32> to vector<1x64xf32>
    %c0_10 = arith.constant 0 : index
    %c0_11 = arith.constant 0 : index
    %c0_12 = arith.constant 0 : index
    %7 = vector.load %arg10[%c0_10, %c0_11, %c0_12] : memref<2x1x64xf32, #tpu.memory_space<vmem>>, vector<1x1x64xf32>
    %8 = vector.shape_cast %7 : vector<1x1x64xf32> to vector<1x64xf32>
    %cst = arith.constant dense<0.000000e+00> : vector<32xf32>
    %9 = vector.multi_reduction <add>, %2, %cst [1] : vector<32x64xf32> to vector<32xf32>
    %10 = vector.shape_cast %9 : vector<32xf32> to vector<32x1xf32>
    %cst_13 = arith.constant 6.400000e+01 : f32
    %11 = vector.broadcast %cst_13 : f32 to vector<32x1xf32>
    %12 = arith.divf %10, %11 : vector<32x1xf32>
    %13 = vector.broadcast %12 : vector<32x1xf32> to vector<32x64xf32>
    %14 = arith.subf %2, %13 : vector<32x64xf32>
    %15 = arith.mulf %14, %14 : vector<32x64xf32>
    %cst_14 = arith.constant dense<0.000000e+00> : vector<32xf32>
    %16 = vector.multi_reduction <add>, %15, %cst_14 [1] : vector<32x64xf32> to vector<32xf32>
    %17 = vector.shape_cast %16 : vector<32xf32> to vector<32x1xf32>
    %cst_15 = arith.constant 6.400000e+01 : f32
    %18 = vector.broadcast %cst_15 : f32 to vector<32x1xf32>
    %19 = arith.divf %17, %18 : vector<32x1xf32>
    %20 = vector.broadcast %12 : vector<32x1xf32> to vector<32x64xf32>
    %21 = arith.subf %2, %20 : vector<32x64xf32>
    %cst_16 = arith.constant 9.99999974E-6 : f32
    %22 = vector.broadcast %cst_16 : f32 to vector<32x1xf32>
    %23 = arith.addf %19, %22 : vector<32x1xf32>
    %24 = math.rsqrt %23 : vector<32x1xf32>
    %25 = vector.broadcast %24 : vector<32x1xf32> to vector<32x64xf32>
    %26 = arith.mulf %21, %25 : vector<32x64xf32>
    %27 = vector.broadcast %6 : vector<1x64xf32> to vector<32x64xf32>
    %28 = arith.mulf %26, %27 : vector<32x64xf32>
    %29 = vector.broadcast %8 : vector<1x64xf32> to vector<32x64xf32>
    %30 = arith.addf %28, %29 : vector<32x64xf32>
    %c0_17 = arith.constant 0 : index
    %c0_18 = arith.constant 0 : index
    %c0_19 = arith.constant 0 : index
    %31 = vector.load %arg4[%c0_17, %c0_18, %c0_19] : memref<2x64x64xf32, #tpu.memory_space<vmem>>, vector<1x64x64xf32>
    %32 = vector.shape_cast %31 : vector<1x64x64xf32> to vector<64x64xf32>
    %cst_20 = arith.constant dense<0.000000e+00> : vector<32x64xf32>
    %33 = tpu.matmul %30, %32, %cst_20 {dimension_numbers = #tpu.dot_dimension_numbers<[1], [0], [0], [1], [0, 0, 1, 1], [], []>} : vector<32x64xf32>, vector<64x64xf32>, vector<32x64xf32> -> vector<32x64xf32>
    %c0_21 = arith.constant 0 : index
    %c0_22 = arith.constant 0 : index
    %c0_23 = arith.constant 0 : index
    %34 = vector.load %arg5[%c0_21, %c0_22, %c0_23] : memref<2x64x64xf32, #tpu.memory_space<vmem>>, vector<1x64x64xf32>
    %35 = vector.shape_cast %34 : vector<1x64x64xf32> to vector<64x64xf32>
    %cst_24 = arith.constant dense<0.000000e+00> : vector<32x64xf32>
    %36 = tpu.matmul %30, %35, %cst_24 {dimension_numbers = #tpu.dot_dimension_numbers<[1], [0], [0], [1], [0, 0, 1, 1], [], []>} : vector<32x64xf32>, vector<64x64xf32>, vector<32x64xf32> -> vector<32x64xf32>
    %c0_25 = arith.constant 0 : index
    %c0_26 = arith.constant 0 : index
    %c0_27 = arith.constant 0 : index
    %37 = vector.load %arg6[%c0_25, %c0_26, %c0_27] : memref<2x64x64xf32, #tpu.memory_space<vmem>>, vector<1x64x64xf32>
    %38 = vector.shape_cast %37 : vector<1x64x64xf32> to vector<64x64xf32>
    %cst_28 = arith.constant dense<0.000000e+00> : vector<32x64xf32>
    %39 = tpu.matmul %30, %38, %cst_28 {dimension_numbers = #tpu.dot_dimension_numbers<[1], [0], [0], [1], [0, 0, 1, 1], [], []>} : vector<32x64xf32>, vector<64x64xf32>, vector<32x64xf32> -> vector<32x64xf32>
    %40 = tpu.concatenate %33, %33, %33, %33 in 0 : vector<32x64xf32>, vector<32x64xf32>, vector<32x64xf32>, vector<32x64xf32> -> vector<128x64xf32>
    %41 = arith.mulf %40, %4 : vector<128x64xf32>
    %cst_29 = arith.constant dense<0.000000e+00> : vector<128x32xf32>
    %42 = tpu.matmul %41, %36, %cst_29 {dimension_numbers = #tpu.dot_dimension_numbers<[1], [1], [0], [0], [0, 0, 1, 0], [], []>} : vector<128x64xf32>, vector<32x64xf32>, vector<128x32xf32> -> vector<128x32xf32>
    %43 = arith.addf %42, %3 : vector<128x32xf32>
    %cst_30 = arith.constant dense<0xFF800000> : vector<128xf32>
    %44 = vector.multi_reduction <maximumf>, %43, %cst_30 [1] : vector<128x32xf32> to vector<128xf32>
    %45 = vector.shape_cast %44 : vector<128xf32> to vector<128x1xf32>
    %46 = vector.broadcast %45 : vector<128x1xf32> to vector<128x32xf32>
    %47 = arith.subf %43, %46 : vector<128x32xf32>
    %48 = math.exp %47 : vector<128x32xf32>
    %cst_31 = arith.constant dense<0.000000e+00> : vector<128xf32>
    %49 = vector.multi_reduction <add>, %48, %cst_31 [1] : vector<128x32xf32> to vector<128xf32>
    %50 = vector.shape_cast %49 : vector<128xf32> to vector<128x1xf32>
    %51 = tpu.reciprocal %50 {approx = true} : vector<128x1xf32> -> vector<128x1xf32>
    %52 = vector.broadcast %51 : vector<128x1xf32> to vector<128x32xf32>
    %53 = arith.mulf %48, %52 : vector<128x32xf32>
    %cst_32 = arith.constant dense<0.000000e+00> : vector<128x64xf32>
    %54 = tpu.matmul %53, %39, %cst_32 {dimension_numbers = #tpu.dot_dimension_numbers<[1], [0], [0], [1], [0, 0, 1, 1], [], []>} : vector<128x32xf32>, vector<32x64xf32>, vector<128x64xf32> -> vector<128x64xf32>
    %55 = arith.mulf %54, %4 : vector<128x64xf32>
    %56 = vector.extract_strided_slice %55 {offsets = [0, 0], sizes = [32, 64], strides = [1, 1]} : vector<128x64xf32> to vector<32x64xf32>
    %57 = vector.extract_strided_slice %55 {offsets = [32, 0], sizes = [32, 64], strides = [1, 1]} : vector<128x64xf32> to vector<32x64xf32>
    %58 = arith.addf %56, %57 : vector<32x64xf32>
    %59 = vector.extract_strided_slice %55 {offsets = [64, 0], sizes = [32, 64], strides = [1, 1]} : vector<128x64xf32> to vector<32x64xf32>
    %60 = arith.addf %58, %59 : vector<32x64xf32>
    %61 = vector.extract_strided_slice %55 {offsets = [96, 0], sizes = [32, 64], strides = [1, 1]} : vector<128x64xf32> to vector<32x64xf32>
    %62 = arith.addf %60, %61 : vector<32x64xf32>
    %c0_33 = arith.constant 0 : index
    %c0_34 = arith.constant 0 : index
    %c0_35 = arith.constant 0 : index
    %63 = vector.load %arg7[%c0_33, %c0_34, %c0_35] : memref<2x64x64xf32, #tpu.memory_space<vmem>>, vector<1x64x64xf32>
    %64 = vector.shape_cast %63 : vector<1x64x64xf32> to vector<64x64xf32>
    %cst_36 = arith.constant dense<0.000000e+00> : vector<32x64xf32>
    %65 = tpu.matmul %62, %64, %cst_36 {dimension_numbers = #tpu.dot_dimension_numbers<[1], [0], [0], [1], [0, 0, 1, 1], [], []>} : vector<32x64xf32>, vector<64x64xf32>, vector<32x64xf32> -> vector<32x64xf32>
    %c0_37 = arith.constant 0 : index
    %c0_38 = arith.constant 0 : index
    %c0_39 = arith.constant 0 : index
    %66 = vector.load %arg8[%c0_37, %c0_38, %c0_39] : memref<2x1x64xf32, #tpu.memory_space<vmem>>, vector<1x1x64xf32>
    %67 = vector.shape_cast %66 : vector<1x1x64xf32> to vector<1x64xf32>
    %68 = vector.broadcast %67 : vector<1x64xf32> to vector<32x64xf32>
    %69 = arith.addf %65, %68 : vector<32x64xf32>
    %70 = arith.addf %2, %69 : vector<32x64xf32>
    %c0_40 = arith.constant 0 : index
    %c0_41 = arith.constant 0 : index
    %c0_42 = arith.constant 0 : index
    %71 = vector.load %arg11[%c0_40, %c0_41, %c0_42] : memref<2x1x64xf32, #tpu.memory_space<vmem>>, vector<1x1x64xf32>
    %72 = vector.shape_cast %71 : vector<1x1x64xf32> to vector<1x64xf32>
    %c0_43 = arith.constant 0 : index
    %c0_44 = arith.constant 0 : index
    %c0_45 = arith.constant 0 : index
    %73 = vector.load %arg12[%c0_43, %c0_44, %c0_45] : memref<2x1x64xf32, #tpu.memory_space<vmem>>, vector<1x1x64xf32>
    %74 = vector.shape_cast %73 : vector<1x1x64xf32> to vector<1x64xf32>
    %cst_46 = arith.constant dense<0.000000e+00> : vector<32xf32>
    %75 = vector.multi_reduction <add>, %70, %cst_46 [1] : vector<32x64xf32> to vector<32xf32>
    %76 = vector.shape_cast %75 : vector<32xf32> to vector<32x1xf32>
    %cst_47 = arith.constant 6.400000e+01 : f32
    %77 = vector.broadcast %cst_47 : f32 to vector<32x1xf32>
    %78 = arith.divf %76, %77 : vector<32x1xf32>
    %79 = vector.broadcast %78 : vector<32x1xf32> to vector<32x64xf32>
    %80 = arith.subf %70, %79 : vector<32x64xf32>
    %81 = arith.mulf %80, %80 : vector<32x64xf32>
    %cst_48 = arith.constant dense<0.000000e+00> : vector<32xf32>
    %82 = vector.multi_reduction <add>, %81, %cst_48 [1] : vector<32x64xf32> to vector<32xf32>
    %83 = vector.shape_cast %82 : vector<32xf32> to vector<32x1xf32>
    %cst_49 = arith.constant 6.400000e+01 : f32
    %84 = vector.broadcast %cst_49 : f32 to vector<32x1xf32>
    %85 = arith.divf %83, %84 : vector<32x1xf32>
    %86 = vector.broadcast %78 : vector<32x1xf32> to vector<32x64xf32>
    %87 = arith.subf %70, %86 : vector<32x64xf32>
    %cst_50 = arith.constant 9.99999974E-6 : f32
    %88 = vector.broadcast %cst_50 : f32 to vector<32x1xf32>
    %89 = arith.addf %85, %88 : vector<32x1xf32>
    %90 = math.rsqrt %89 : vector<32x1xf32>
    %91 = vector.broadcast %90 : vector<32x1xf32> to vector<32x64xf32>
    %92 = arith.mulf %87, %91 : vector<32x64xf32>
    %93 = vector.broadcast %72 : vector<1x64xf32> to vector<32x64xf32>
    %94 = arith.mulf %92, %93 : vector<32x64xf32>
    %95 = vector.broadcast %74 : vector<1x64xf32> to vector<32x64xf32>
    %96 = arith.addf %94, %95 : vector<32x64xf32>
    %c0_51 = arith.constant 0 : index
    %c0_52 = arith.constant 0 : index
    %c0_53 = arith.constant 0 : index
    %97 = vector.load %arg13[%c0_51, %c0_52, %c0_53] : memref<2x64x256xf32, #tpu.memory_space<vmem>>, vector<1x64x256xf32>
    %98 = vector.shape_cast %97 : vector<1x64x256xf32> to vector<64x256xf32>
    %cst_54 = arith.constant dense<0.000000e+00> : vector<32x256xf32>
    %99 = tpu.matmul %96, %98, %cst_54 {dimension_numbers = #tpu.dot_dimension_numbers<[1], [0], [0], [1], [0, 0, 1, 1], [], []>} : vector<32x64xf32>, vector<64x256xf32>, vector<32x256xf32> -> vector<32x256xf32>
    %c0_55 = arith.constant 0 : index
    %c0_56 = arith.constant 0 : index
    %c0_57 = arith.constant 0 : index
    %100 = vector.load %arg14[%c0_55, %c0_56, %c0_57] : memref<2x1x256xf32, #tpu.memory_space<vmem>>, vector<1x1x256xf32>
    %101 = vector.shape_cast %100 : vector<1x1x256xf32> to vector<1x256xf32>
    %102 = vector.broadcast %101 : vector<1x256xf32> to vector<32x256xf32>
    %103 = arith.addf %99, %102 : vector<32x256xf32>
    %cst_58 = arith.constant 0.000000e+00 : f32
    %104 = vector.broadcast %cst_58 : f32 to vector<32x256xf32>
    %105 = arith.maximumf %103, %104 : vector<32x256xf32>
    %c0_59 = arith.constant 0 : index
    %c0_60 = arith.constant 0 : index
    %c0_61 = arith.constant 0 : index
    %106 = vector.load %arg15[%c0_59, %c0_60, %c0_61] : memref<2x256x64xf32, #tpu.memory_space<vmem>>, vector<1x256x64xf32>
    %107 = vector.shape_cast %106 : vector<1x256x64xf32> to vector<256x64xf32>
    %cst_62 = arith.constant dense<0.000000e+00> : vector<32x64xf32>
    %108 = tpu.matmul %105, %107, %cst_62 {dimension_numbers = #tpu.dot_dimension_numbers<[1], [0], [0], [1], [0, 0, 1, 1], [], []>} : vector<32x256xf32>, vector<256x64xf32>, vector<32x64xf32> -> vector<32x64xf32>
    %c0_63 = arith.constant 0 : index
    %c0_64 = arith.constant 0 : index
    %c0_65 = arith.constant 0 : index
    %109 = vector.load %arg16[%c0_63, %c0_64, %c0_65] : memref<2x1x64xf32, #tpu.memory_space<vmem>>, vector<1x1x64xf32>
    %110 = vector.shape_cast %109 : vector<1x1x64xf32> to vector<1x64xf32>
    %111 = vector.broadcast %110 : vector<1x64xf32> to vector<32x64xf32>
    %112 = arith.addf %108, %111 : vector<32x64xf32>
    %113 = arith.addf %70, %112 : vector<32x64xf32>
    %c1 = arith.constant 1 : index
    %c0_66 = arith.constant 0 : index
    %c0_67 = arith.constant 0 : index
    %114 = vector.load %arg9[%c1, %c0_66, %c0_67] : memref<2x1x64xf32, #tpu.memory_space<vmem>>, vector<1x1x64xf32>
    %115 = vector.shape_cast %114 : vector<1x1x64xf32> to vector<1x64xf32>
    %c1_68 = arith.constant 1 : index
    %c0_69 = arith.constant 0 : index
    %c0_70 = arith.constant 0 : index
    %116 = vector.load %arg10[%c1_68, %c0_69, %c0_70] : memref<2x1x64xf32, #tpu.memory_space<vmem>>, vector<1x1x64xf32>
    %117 = vector.shape_cast %116 : vector<1x1x64xf32> to vector<1x64xf32>
    %cst_71 = arith.constant dense<0.000000e+00> : vector<32xf32>
    %118 = vector.multi_reduction <add>, %113, %cst_71 [1] : vector<32x64xf32> to vector<32xf32>
    %119 = vector.shape_cast %118 : vector<32xf32> to vector<32x1xf32>
    %cst_72 = arith.constant 6.400000e+01 : f32
    %120 = vector.broadcast %cst_72 : f32 to vector<32x1xf32>
    %121 = arith.divf %119, %120 : vector<32x1xf32>
    %122 = vector.broadcast %121 : vector<32x1xf32> to vector<32x64xf32>
    %123 = arith.subf %113, %122 : vector<32x64xf32>
    %124 = arith.mulf %123, %123 : vector<32x64xf32>
    %cst_73 = arith.constant dense<0.000000e+00> : vector<32xf32>
    %125 = vector.multi_reduction <add>, %124, %cst_73 [1] : vector<32x64xf32> to vector<32xf32>
    %126 = vector.shape_cast %125 : vector<32xf32> to vector<32x1xf32>
    %cst_74 = arith.constant 6.400000e+01 : f32
    %127 = vector.broadcast %cst_74 : f32 to vector<32x1xf32>
    %128 = arith.divf %126, %127 : vector<32x1xf32>
    %129 = vector.broadcast %121 : vector<32x1xf32> to vector<32x64xf32>
    %130 = arith.subf %113, %129 : vector<32x64xf32>
    %cst_75 = arith.constant 9.99999974E-6 : f32
    %131 = vector.broadcast %cst_75 : f32 to vector<32x1xf32>
    %132 = arith.addf %128, %131 : vector<32x1xf32>
    %133 = math.rsqrt %132 : vector<32x1xf32>
    %134 = vector.broadcast %133 : vector<32x1xf32> to vector<32x64xf32>
    %135 = arith.mulf %130, %134 : vector<32x64xf32>
    %136 = vector.broadcast %115 : vector<1x64xf32> to vector<32x64xf32>
    %137 = arith.mulf %135, %136 : vector<32x64xf32>
    %138 = vector.broadcast %117 : vector<1x64xf32> to vector<32x64xf32>
    %139 = arith.addf %137, %138 : vector<32x64xf32>
    %c1_76 = arith.constant 1 : index
    %c0_77 = arith.constant 0 : index
    %c0_78 = arith.constant 0 : index
    %140 = vector.load %arg4[%c1_76, %c0_77, %c0_78] : memref<2x64x64xf32, #tpu.memory_space<vmem>>, vector<1x64x64xf32>
    %141 = vector.shape_cast %140 : vector<1x64x64xf32> to vector<64x64xf32>
    %cst_79 = arith.constant dense<0.000000e+00> : vector<32x64xf32>
    %142 = tpu.matmul %139, %141, %cst_79 {dimension_numbers = #tpu.dot_dimension_numbers<[1], [0], [0], [1], [0, 0, 1, 1], [], []>} : vector<32x64xf32>, vector<64x64xf32>, vector<32x64xf32> -> vector<32x64xf32>
    %c1_80 = arith.constant 1 : index
    %c0_81 = arith.constant 0 : index
    %c0_82 = arith.constant 0 : index
    %143 = vector.load %arg5[%c1_80, %c0_81, %c0_82] : memref<2x64x64xf32, #tpu.memory_space<vmem>>, vector<1x64x64xf32>
    %144 = vector.shape_cast %143 : vector<1x64x64xf32> to vector<64x64xf32>
    %cst_83 = arith.constant dense<0.000000e+00> : vector<32x64xf32>
    %145 = tpu.matmul %139, %144, %cst_83 {dimension_numbers = #tpu.dot_dimension_numbers<[1], [0], [0], [1], [0, 0, 1, 1], [], []>} : vector<32x64xf32>, vector<64x64xf32>, vector<32x64xf32> -> vector<32x64xf32>
    %c1_84 = arith.constant 1 : index
    %c0_85 = arith.constant 0 : index
    %c0_86 = arith.constant 0 : index
    %146 = vector.load %arg6[%c1_84, %c0_85, %c0_86] : memref<2x64x64xf32, #tpu.memory_space<vmem>>, vector<1x64x64xf32>
    %147 = vector.shape_cast %146 : vector<1x64x64xf32> to vector<64x64xf32>
    %cst_87 = arith.constant dense<0.000000e+00> : vector<32x64xf32>
    %148 = tpu.matmul %139, %147, %cst_87 {dimension_numbers = #tpu.dot_dimension_numbers<[1], [0], [0], [1], [0, 0, 1, 1], [], []>} : vector<32x64xf32>, vector<64x64xf32>, vector<32x64xf32> -> vector<32x64xf32>
    %149 = tpu.concatenate %142, %142, %142, %142 in 0 : vector<32x64xf32>, vector<32x64xf32>, vector<32x64xf32>, vector<32x64xf32> -> vector<128x64xf32>
    %150 = arith.mulf %149, %4 : vector<128x64xf32>
    %cst_88 = arith.constant dense<0.000000e+00> : vector<128x32xf32>
    %151 = tpu.matmul %150, %145, %cst_88 {dimension_numbers = #tpu.dot_dimension_numbers<[1], [1], [0], [0], [0, 0, 1, 0], [], []>} : vector<128x64xf32>, vector<32x64xf32>, vector<128x32xf32> -> vector<128x32xf32>
    %152 = arith.addf %151, %3 : vector<128x32xf32>
    %cst_89 = arith.constant dense<0xFF800000> : vector<128xf32>
    %153 = vector.multi_reduction <maximumf>, %152, %cst_89 [1] : vector<128x32xf32> to vector<128xf32>
    %154 = vector.shape_cast %153 : vector<128xf32> to vector<128x1xf32>
    %155 = vector.broadcast %154 : vector<128x1xf32> to vector<128x32xf32>
    %156 = arith.subf %152, %155 : vector<128x32xf32>
    %157 = math.exp %156 : vector<128x32xf32>
    %cst_90 = arith.constant dense<0.000000e+00> : vector<128xf32>
    %158 = vector.multi_reduction <add>, %157, %cst_90 [1] : vector<128x32xf32> to vector<128xf32>
    %159 = vector.shape_cast %158 : vector<128xf32> to vector<128x1xf32>
    %160 = tpu.reciprocal %159 {approx = true} : vector<128x1xf32> -> vector<128x1xf32>
    %161 = vector.broadcast %160 : vector<128x1xf32> to vector<128x32xf32>
    %162 = arith.mulf %157, %161 : vector<128x32xf32>
    %cst_91 = arith.constant dense<0.000000e+00> : vector<128x64xf32>
    %163 = tpu.matmul %162, %148, %cst_91 {dimension_numbers = #tpu.dot_dimension_numbers<[1], [0], [0], [1], [0, 0, 1, 1], [], []>} : vector<128x32xf32>, vector<32x64xf32>, vector<128x64xf32> -> vector<128x64xf32>
    %164 = arith.mulf %163, %4 : vector<128x64xf32>
    %165 = vector.extract_strided_slice %164 {offsets = [0, 0], sizes = [32, 64], strides = [1, 1]} : vector<128x64xf32> to vector<32x64xf32>
    %166 = vector.extract_strided_slice %164 {offsets = [32, 0], sizes = [32, 64], strides = [1, 1]} : vector<128x64xf32> to vector<32x64xf32>
    %167 = arith.addf %165, %166 : vector<32x64xf32>
    %168 = vector.extract_strided_slice %164 {offsets = [64, 0], sizes = [32, 64], strides = [1, 1]} : vector<128x64xf32> to vector<32x64xf32>
    %169 = arith.addf %167, %168 : vector<32x64xf32>
    %170 = vector.extract_strided_slice %164 {offsets = [96, 0], sizes = [32, 64], strides = [1, 1]} : vector<128x64xf32> to vector<32x64xf32>
    %171 = arith.addf %169, %170 : vector<32x64xf32>
    %c1_92 = arith.constant 1 : index
    %c0_93 = arith.constant 0 : index
    %c0_94 = arith.constant 0 : index
    %172 = vector.load %arg7[%c1_92, %c0_93, %c0_94] : memref<2x64x64xf32, #tpu.memory_space<vmem>>, vector<1x64x64xf32>
    %173 = vector.shape_cast %172 : vector<1x64x64xf32> to vector<64x64xf32>
    %cst_95 = arith.constant dense<0.000000e+00> : vector<32x64xf32>
    %174 = tpu.matmul %171, %173, %cst_95 {dimension_numbers = #tpu.dot_dimension_numbers<[1], [0], [0], [1], [0, 0, 1, 1], [], []>} : vector<32x64xf32>, vector<64x64xf32>, vector<32x64xf32> -> vector<32x64xf32>
    %c1_96 = arith.constant 1 : index
    %c0_97 = arith.constant 0 : index
    %c0_98 = arith.constant 0 : index
    %175 = vector.load %arg8[%c1_96, %c0_97, %c0_98] : memref<2x1x64xf32, #tpu.memory_space<vmem>>, vector<1x1x64xf32>
    %176 = vector.shape_cast %175 : vector<1x1x64xf32> to vector<1x64xf32>
    %177 = vector.broadcast %176 : vector<1x64xf32> to vector<32x64xf32>
    %178 = arith.addf %174, %177 : vector<32x64xf32>
    %179 = arith.addf %113, %178 : vector<32x64xf32>
    %c1_99 = arith.constant 1 : index
    %c0_100 = arith.constant 0 : index
    %c0_101 = arith.constant 0 : index
    %180 = vector.load %arg11[%c1_99, %c0_100, %c0_101] : memref<2x1x64xf32, #tpu.memory_space<vmem>>, vector<1x1x64xf32>
    %181 = vector.shape_cast %180 : vector<1x1x64xf32> to vector<1x64xf32>
    %c1_102 = arith.constant 1 : index
    %c0_103 = arith.constant 0 : index
    %c0_104 = arith.constant 0 : index
    %182 = vector.load %arg12[%c1_102, %c0_103, %c0_104] : memref<2x1x64xf32, #tpu.memory_space<vmem>>, vector<1x1x64xf32>
    %183 = vector.shape_cast %182 : vector<1x1x64xf32> to vector<1x64xf32>
    %cst_105 = arith.constant dense<0.000000e+00> : vector<32xf32>
    %184 = vector.multi_reduction <add>, %179, %cst_105 [1] : vector<32x64xf32> to vector<32xf32>
    %185 = vector.shape_cast %184 : vector<32xf32> to vector<32x1xf32>
    %cst_106 = arith.constant 6.400000e+01 : f32
    %186 = vector.broadcast %cst_106 : f32 to vector<32x1xf32>
    %187 = arith.divf %185, %186 : vector<32x1xf32>
    %188 = vector.broadcast %187 : vector<32x1xf32> to vector<32x64xf32>
    %189 = arith.subf %179, %188 : vector<32x64xf32>
    %190 = arith.mulf %189, %189 : vector<32x64xf32>
    %cst_107 = arith.constant dense<0.000000e+00> : vector<32xf32>
    %191 = vector.multi_reduction <add>, %190, %cst_107 [1] : vector<32x64xf32> to vector<32xf32>
    %192 = vector.shape_cast %191 : vector<32xf32> to vector<32x1xf32>
    %cst_108 = arith.constant 6.400000e+01 : f32
    %193 = vector.broadcast %cst_108 : f32 to vector<32x1xf32>
    %194 = arith.divf %192, %193 : vector<32x1xf32>
    %195 = vector.broadcast %187 : vector<32x1xf32> to vector<32x64xf32>
    %196 = arith.subf %179, %195 : vector<32x64xf32>
    %cst_109 = arith.constant 9.99999974E-6 : f32
    %197 = vector.broadcast %cst_109 : f32 to vector<32x1xf32>
    %198 = arith.addf %194, %197 : vector<32x1xf32>
    %199 = math.rsqrt %198 : vector<32x1xf32>
    %200 = vector.broadcast %199 : vector<32x1xf32> to vector<32x64xf32>
    %201 = arith.mulf %196, %200 : vector<32x64xf32>
    %202 = vector.broadcast %181 : vector<1x64xf32> to vector<32x64xf32>
    %203 = arith.mulf %201, %202 : vector<32x64xf32>
    %204 = vector.broadcast %183 : vector<1x64xf32> to vector<32x64xf32>
    %205 = arith.addf %203, %204 : vector<32x64xf32>
    %c1_110 = arith.constant 1 : index
    %c0_111 = arith.constant 0 : index
    %c0_112 = arith.constant 0 : index
    %206 = vector.load %arg13[%c1_110, %c0_111, %c0_112] : memref<2x64x256xf32, #tpu.memory_space<vmem>>, vector<1x64x256xf32>
    %207 = vector.shape_cast %206 : vector<1x64x256xf32> to vector<64x256xf32>
    %cst_113 = arith.constant dense<0.000000e+00> : vector<32x256xf32>
    %208 = tpu.matmul %205, %207, %cst_113 {dimension_numbers = #tpu.dot_dimension_numbers<[1], [0], [0], [1], [0, 0, 1, 1], [], []>} : vector<32x64xf32>, vector<64x256xf32>, vector<32x256xf32> -> vector<32x256xf32>
    %c1_114 = arith.constant 1 : index
    %c0_115 = arith.constant 0 : index
    %c0_116 = arith.constant 0 : index
    %209 = vector.load %arg14[%c1_114, %c0_115, %c0_116] : memref<2x1x256xf32, #tpu.memory_space<vmem>>, vector<1x1x256xf32>
    %210 = vector.shape_cast %209 : vector<1x1x256xf32> to vector<1x256xf32>
    %211 = vector.broadcast %210 : vector<1x256xf32> to vector<32x256xf32>
    %212 = arith.addf %208, %211 : vector<32x256xf32>
    %cst_117 = arith.constant 0.000000e+00 : f32
    %213 = vector.broadcast %cst_117 : f32 to vector<32x256xf32>
    %214 = arith.maximumf %212, %213 : vector<32x256xf32>
    %c1_118 = arith.constant 1 : index
    %c0_119 = arith.constant 0 : index
    %c0_120 = arith.constant 0 : index
    %215 = vector.load %arg15[%c1_118, %c0_119, %c0_120] : memref<2x256x64xf32, #tpu.memory_space<vmem>>, vector<1x256x64xf32>
    %216 = vector.shape_cast %215 : vector<1x256x64xf32> to vector<256x64xf32>
    %cst_121 = arith.constant dense<0.000000e+00> : vector<32x64xf32>
    %217 = tpu.matmul %214, %216, %cst_121 {dimension_numbers = #tpu.dot_dimension_numbers<[1], [0], [0], [1], [0, 0, 1, 1], [], []>} : vector<32x256xf32>, vector<256x64xf32>, vector<32x64xf32> -> vector<32x64xf32>
    %c1_122 = arith.constant 1 : index
    %c0_123 = arith.constant 0 : index
    %c0_124 = arith.constant 0 : index
    %218 = vector.load %arg16[%c1_122, %c0_123, %c0_124] : memref<2x1x64xf32, #tpu.memory_space<vmem>>, vector<1x1x64xf32>
    %219 = vector.shape_cast %218 : vector<1x1x64xf32> to vector<1x64xf32>
    %220 = vector.broadcast %219 : vector<1x64xf32> to vector<32x64xf32>
    %221 = arith.addf %217, %220 : vector<32x64xf32>
    %222 = arith.addf %179, %221 : vector<32x64xf32>
    %c0_125 = arith.constant 0 : index
    %c0_126 = arith.constant 0 : index
    %223 = vector.load %arg19[%c0_125, %c0_126] : memref<32x64xf32, #tpu.memory_space<vmem>>, vector<32x64xf32>
    tpu.vector_store %arg19[%c0_125, %c0_126], %222 {strides = array<i32>} : memref<32x64xf32, #tpu.memory_space<vmem>>, vector<32x64xf32>,
    %c0_127 = arith.constant 0 : index
    %c0_128 = arith.constant 0 : index
    %224 = vector.load %arg17[%c0_127, %c0_128] : memref<64x128xf32, #tpu.memory_space<vmem>>, vector<64x128xf32>
    %cst_129 = arith.constant dense<0.000000e+00> : vector<32x128xf32>
    %225 = tpu.matmul %0, %224, %cst_129 {dimension_numbers = #tpu.dot_dimension_numbers<[1], [0], [0], [1], [0, 0, 1, 1], [], []>} : vector<32x64xf32>, vector<64x128xf32>, vector<32x128xf32> -> vector<32x128xf32>
    %c0_130 = arith.constant 0 : index
    %c0_131 = arith.constant 0 : index
    %226 = vector.load %arg18[%c0_130, %c0_131] : memref<1x128xf32, #tpu.memory_space<vmem>>, vector<1x128xf32>
    %227 = vector.broadcast %226 : vector<1x128xf32> to vector<32x128xf32>
    %228 = arith.addf %225, %227 : vector<32x128xf32>
    %c0_132 = arith.constant 0 : index
    %c0_133 = arith.constant 0 : index
    %229 = vector.load %arg20[%c0_132, %c0_133] : memref<32x128xf32, #tpu.memory_space<vmem>>, vector<32x128xf32>
    tpu.vector_store %arg20[%c0_132, %c0_133], %228 {strides = array<i32>} : memref<32x128xf32, #tpu.memory_space<vmem>>, vector<32x128xf32>,
    return
  }
}

</mosaic_0001>

<llo_original>
// kernel: _lambda_.1
$region0: #{_lambda_.1}
  #allocation0 [shape = 'u32[]', space=smem, size = 0x4, offset = 0x4, fixed_abs, tag = 'smem constant byte address 0x4 - core index']
  #allocation1 [shape = 'u32[144,128]{1,0:T(1,128)}', space=vmem, size = 0x12000, scoped, tag = 'internal scratch']
  %s0 = inlined_call_operand.vmem [shape: f32[32,64], index: 0, kind: input, shape index: {}]
  %s1 = inlined_call_operand.vmem [shape: f32[32,64], index: 1, kind: input, shape index: {}]
  %s2 = inlined_call_operand.vmem [shape: f32[128,32], index: 2, kind: input, shape index: {}]
  %s3 = inlined_call_operand.vmem [shape: f32[128,64], index: 3, kind: input, shape index: {}]
  %s4 = inlined_call_operand.vmem [shape: f32[2,64,64], index: 4, kind: input, shape index: {}]
  %s5 = inlined_call_operand.vmem [shape: f32[2,64,64], index: 5, kind: input, shape index: {}]
  %s6 = inlined_call_operand.vmem [shape: f32[2,64,64], index: 6, kind: input, shape index: {}]
  %s7 = inlined_call_operand.vmem [shape: f32[2,64,64], index: 7, kind: input, shape index: {}]
  %s8 = inlined_call_operand.vmem [shape: f32[2,1,64], index: 8, kind: input, shape index: {}]
  %s9 = inlined_call_operand.vmem [shape: f32[2,1,64], index: 9, kind: input, shape index: {}]
  %s10 = inlined_call_operand.vmem [shape: f32[2,1,64], index: 10, kind: input, shape index: {}]
  %s11 = inlined_call_operand.vmem [shape: f32[2,1,64], index: 11, kind: input, shape index: {}]
  %s12 = inlined_call_operand.vmem [shape: f32[2,1,64], index: 12, kind: input, shape index: {}]
  %s13 = inlined_call_operand.vmem [shape: f32[2,64,256], index: 13, kind: input, shape index: {}]
  %s14 = inlined_call_operand.vmem [shape: f32[2,1,256], index: 14, kind: input, shape index: {}]
  %s15 = inlined_call_operand.vmem [shape: f32[2,256,64], index: 15, kind: input, shape index: {}]
  %s16 = inlined_call_operand.vmem [shape: f32[2,1,64], index: 16, kind: input, shape index: {}]
  %s17 = inlined_call_operand.vmem [shape: f32[64,128], index: 17, kind: input, shape index: {}]
  %s18 = inlined_call_operand.vmem [shape: f32[1,128], index: 18, kind: input, shape index: {}]
  %s19 = inlined_call_operand.hbm [shape: f32[32,64], index: 19, kind: output, shape index: {0}]
  %s20 = inlined_call_operand.hbm [shape: f32[32,128], index: 20, kind: output, shape index: {1}]
  %21 = xla_tuple %s19, %s20
  %s22 = sld [smem:[#allocation0]]
  $region94: #{_lambda_.1} parent=0
    _
  %s24 = ssub.s32 1, %s22
  %s25 = scalar_select 0, %s24, %s22
  $region1: #{_lambda_.1} parent=0
    #allocation2 [shape = 'u8[16384]{0}', space=vmem, size = 0x4000, scoped, tag = 'output window, operand 0, single buffered']
    #allocation3 [shape = 's32[1]{0}', space=sflag, size = 0x4, scoped, tag = 'scoped memory for _lambda_.1']
    #allocation4 [shape = 'u8[16384]{0}', space=vmem, size = 0x4000, scoped, tag = 'output window, operand 1, single buffered']
    #allocation5 [shape = 's32[1]{0}', space=sflag, size = 0x4, scoped, tag = 'scoped memory for _lambda_.1']
    %26 = vsyncpa [#allocation3], 0
    %27 = vsyncpa [#allocation5], 0
    // Predicated region
    $region2: #{_lambda_.1} parent=1 // pred_check
      _
    $region3: #{_lambda_.1} parent=1 // pred_check_branch
      %29 = sbr.rel (0) target = $region5
    $region4: #{_lambda_.1} parent=1 // pred_region
      _
    $region5: #{_lambda_.1} parent=1 // pred_fallthru
      _
    // Predicated region
    $region6: #{_lambda_.1} parent=1 // pred_check
      _
    $region7: #{_lambda_.1} parent=1 // pred_check_branch
      %31 = sbr.rel (0) target = $region9
    $region8: #{_lambda_.1} parent=1 // pred_region
      _
    $region9: #{_lambda_.1} parent=1 // pred_fallthru
      _
    // Predicated region
    $region10: #{_lambda_.1} parent=1 // pred_check
      _
    $region11: #{_lambda_.1} parent=1 // pred_check_branch
      %33 = sbr.rel (0) target = $region13
    $region12: #{_lambda_.1} parent=1 // pred_region
      _
    $region13: #{_lambda_.1} parent=1 // pred_fallthru
      _
    // Predicated region
    $region14: #{_lambda_.1} parent=1 // pred_check
      _
    $region15: #{_lambda_.1} parent=1 // pred_check_branch
      %35 = sbr.rel (0) target = $region17
    $region16: #{_lambda_.1} parent=1 // pred_region
      _
    $region17: #{_lambda_.1} parent=1 // pred_fallthru
      _
    // Predicated region
    $region18: #{_lambda_.1} parent=1 // pred_check
      _
    $region19: #{_lambda_.1} parent=1 // pred_check_branch
      %37 = sbr.rel (0) target = $region21
    $region20: #{_lambda_.1} parent=1 // pred_region
      _
    $region21: #{_lambda_.1} parent=1 // pred_fallthru
      _
    // Predicated region
    $region22: #{_lambda_.1} parent=1 // pred_check
      _
    $region23: #{_lambda_.1} parent=1 // pred_check_branch
      %39 = sbr.rel (0) target = $region25
    $region24: #{_lambda_.1} parent=1 // pred_region
      _
    $region25: #{_lambda_.1} parent=1 // pred_fallthru
      _
    // Predicated region
    $region26: #{_lambda_.1} parent=1 // pred_check
      _
    $region27: #{_lambda_.1} parent=1 // pred_check_branch
      %41 = sbr.rel (0) target = $region29
    $region28: #{_lambda_.1} parent=1 // pred_region
      _
    $region29: #{_lambda_.1} parent=1 // pred_fallthru
      _
    // Predicated region
    $region30: #{_lambda_.1} parent=1 // pred_check
      _
    $region31: #{_lambda_.1} parent=1 // pred_check_branch
      %43 = sbr.rel (0) target = $region33
    $region32: #{_lambda_.1} parent=1 // pred_region
      _
    $region33: #{_lambda_.1} parent=1 // pred_fallthru
      _
    // Predicated region
    $region34: #{_lambda_.1} parent=1 // pred_check
      _
    $region35: #{_lambda_.1} parent=1 // pred_check_branch
      %45 = sbr.rel (0) target = $region37
    $region36: #{_lambda_.1} parent=1 // pred_region
      _
    $region37: #{_lambda_.1} parent=1 // pred_fallthru
      _
    // Predicated region
    $region38: #{_lambda_.1} parent=1 // pred_check
      _
    $region39: #{_lambda_.1} parent=1 // pred_check_branch
      %47 = sbr.rel (0) target = $region41
    $region40: #{_lambda_.1} parent=1 // pred_region
      _
    $region41: #{_lambda_.1} parent=1 // pred_fallthru
      _
    // Predicated region
    $region42: #{_lambda_.1} parent=1 // pred_check
      _
    $region43: #{_lambda_.1} parent=1 // pred_check_branch
      %49 = sbr.rel (0) target = $region45
    $region44: #{_lambda_.1} parent=1 // pred_region
      _
    $region45: #{_lambda_.1} parent=1 // pred_fallthru
      _
    // Predicated region
    $region46: #{_lambda_.1} parent=1 // pred_check
      _
    $region47: #{_lambda_.1} parent=1 // pred_check_branch
      %51 = sbr.rel (0) target = $region49
    $region48: #{_lambda_.1} parent=1 // pred_region
      _
    $region49: #{_lambda_.1} parent=1 // pred_fallthru
      _
    // Predicated region
    $region50: #{_lambda_.1} parent=1 // pred_check
      _
    $region51: #{_lambda_.1} parent=1 // pred_check_branch
      %53 = sbr.rel (0) target = $region53
    $region52: #{_lambda_.1} parent=1 // pred_region
      _
    $region53: #{_lambda_.1} parent=1 // pred_fallthru
      _
    // Predicated region
    $region54: #{_lambda_.1} parent=1 // pred_check
      _
    $region55: #{_lambda_.1} parent=1 // pred_check_branch
      %55 = sbr.rel (0) target = $region57
    $region56: #{_lambda_.1} parent=1 // pred_region
      _
    $region57: #{_lambda_.1} parent=1 // pred_fallthru
      _
    // Predicated region
    $region58: #{_lambda_.1} parent=1 // pred_check
      _
    $region59: #{_lambda_.1} parent=1 // pred_check_branch
      %57 = sbr.rel (0) target = $region61
    $region60: #{_lambda_.1} parent=1 // pred_region
      _
    $region61: #{_lambda_.1} parent=1 // pred_fallthru
      _
    // Predicated region
    $region62: #{_lambda_.1} parent=1 // pred_check
      _
    $region63: #{_lambda_.1} parent=1 // pred_check_branch
      %59 = sbr.rel (0) target = $region65
    $region64: #{_lambda_.1} parent=1 // pred_region
      _
    $region65: #{_lambda_.1} parent=1 // pred_fallthru
      _
    // Predicated region
    $region66: #{_lambda_.1} parent=1 // pred_check
      _
    $region67: #{_lambda_.1} parent=1 // pred_check_branch
      %61 = sbr.rel (0) target = $region69
    $region68: #{_lambda_.1} parent=1 // pred_region
      _
    $region69: #{_lambda_.1} parent=1 // pred_fallthru
      _
    // Predicated region
    $region70: #{_lambda_.1} parent=1 // pred_check
      _
    $region71: #{_lambda_.1} parent=1 // pred_check_branch
      %63 = sbr.rel (0) target = $region73
    $region72: #{_lambda_.1} parent=1 // pred_region
      _
    $region73: #{_lambda_.1} parent=1 // pred_fallthru
      _
    // Predicated region
    $region74: #{_lambda_.1} parent=1 // pred_check
      _
    $region75: #{_lambda_.1} parent=1 // pred_check_branch
      %65 = sbr.rel (0) target = $region77
    $region76: #{_lambda_.1} parent=1 // pred_region
      _
    $region77: #{_lambda_.1} parent=1 // pred_fallthru
      _
    %v66 = vld [vmem:[%s0] sm:$0xff]
    %v67 = vld [vmem:[%s0 + $0x8] sm:$0xff]
    %v68 = vld [vmem:[%s0 + $0x10] sm:$0xff]
    %v69 = vld [vmem:[%s0 + $0x18] sm:$0xff]
    %v70 = vld [vmem:[%s1] sm:$0xff]
    %v71 = vld [vmem:[%s1 + $0x8] sm:$0xff]
    %v72 = vld [vmem:[%s1 + $0x10] sm:$0xff]
    %v73 = vld [vmem:[%s1 + $0x18] sm:$0xff]
    %v74 = vadd.f32 %v66, %v70
    %v75 = vadd.f32 %v67, %v71
    %v76 = vadd.f32 %v68, %v72
    %v77 = vadd.f32 %v69, %v73
    %v78 = vld [vmem:[%s2] sm:$0xff]
    %v79 = vld [vmem:[%s2 + $0x8] sm:$0xff]
    %v80 = vld [vmem:[%s2 + $0x10] sm:$0xff]
    %v81 = vld [vmem:[%s2 + $0x18] sm:$0xff]
    %v82 = vld [vmem:[%s2 + $0x20] sm:$0xff]
    %v83 = vld [vmem:[%s2 + $0x28] sm:$0xff]
    %v84 = vld [vmem:[%s2 + $0x30] sm:$0xff]
    %v85 = vld [vmem:[%s2 + $0x38] sm:$0xff]
    %v86 = vld [vmem:[%s2 + $0x40] sm:$0xff]
    %v87 = vld [vmem:[%s2 + $0x48] sm:$0xff]
    %v88 = vld [vmem:[%s2 + $0x50] sm:$0xff]
    %v89 = vld [vmem:[%s2 + $0x58] sm:$0xff]
    %v90 = vld [vmem:[%s2 + $0x60] sm:$0xff]
    %v91 = vld [vmem:[%s2 + $0x68] sm:$0xff]
    %v92 = vld [vmem:[%s2 + $0x70] sm:$0xff]
    %v93 = vld [vmem:[%s2 + $0x78] sm:$0xff]
    %v94 = vld [vmem:[%s3] sm:$0xff]
    %v95 = vld [vmem:[%s3 + $0x8] sm:$0xff]
    %v96 = vld [vmem:[%s3 + $0x10] sm:$0xff]
    %v97 = vld [vmem:[%s3 + $0x18] sm:$0xff]
    %v98 = vld [vmem:[%s3 + $0x20] sm:$0xff]
    %v99 = vld [vmem:[%s3 + $0x28] sm:$0xff]
    %v100 = vld [vmem:[%s3 + $0x30] sm:$0xff]
    %v101 = vld [vmem:[%s3 + $0x38] sm:$0xff]
    %v102 = vld [vmem:[%s3 + $0x40] sm:$0xff]
    %v103 = vld [vmem:[%s3 + $0x48] sm:$0xff]
    %v104 = vld [vmem:[%s3 + $0x50] sm:$0xff]
    %v105 = vld [vmem:[%s3 + $0x58] sm:$0xff]
    %v106 = vld [vmem:[%s3 + $0x60] sm:$0xff]
    %v107 = vld [vmem:[%s3 + $0x68] sm:$0xff]
    %v108 = vld [vmem:[%s3 + $0x70] sm:$0xff]
    %v109 = vld [vmem:[%s3 + $0x78] sm:$0xff]
    %v110 = vld [vmem:[%s9] sm:$0x1]
    %v111 = vld [vmem:[%s10] sm:$0x1]
    %vm112 = vcmask 523264
    %v113 = vsel %vm112, %v74, 0.0
    %114 = vadd.xlane.f32.xlu0 %v113
    %v115 = vpop.xlane.xlu0 %114
    %v116 = vsel %vm112, %v75, 0.0
    %117 = vadd.xlane.f32.xlu0 %v116
    %v118 = vpop.xlane.xlu0 %117
    %v119 = vsel %vm112, %v76, 0.0
    %120 = vadd.xlane.f32.xlu0 %v119
    %v121 = vpop.xlane.xlu0 %120
    %v122 = vsel %vm112, %v77, 0.0
    %123 = vadd.xlane.f32.xlu0 %v122
    %v124 = vpop.xlane.xlu0 %123
    %v125 = vrcp.pop 64.0
    %v126 = vmul.f32 %v115, %v125
    %v127 = vmul.f32 %v118, %v125
    %v128 = vmul.f32 %v121, %v125
    %v129 = vmul.f32 %v124, %v125
    %v130 = vsub.f32 %v74, %v126
    %v131 = vsub.f32 %v75, %v127
    %v132 = vsub.f32 %v76, %v128
    %v133 = vsub.f32 %v77, %v129
    %v134 = vmul.f32 %v130, %v130
    %v135 = vmul.f32 %v131, %v131
    %v136 = vmul.f32 %v132, %v132
    %v137 = vmul.f32 %v133, %v133
    %v138 = vsel %vm112, %v134, 0.0
    %139 = vadd.xlane.f32.xlu0 %v138
    %v140 = vpop.xlane.xlu0 %139
    %v141 = vsel %vm112, %v135, 0.0
    %142 = vadd.xlane.f32.xlu0 %v141
    %v143 = vpop.xlane.xlu0 %142
    %v144 = vsel %vm112, %v136, 0.0
    %145 = vadd.xlane.f32.xlu0 %v144
    %v146 = vpop.xlane.xlu0 %145
    %v147 = vsel %vm112, %v137, 0.0
    %148 = vadd.xlane.f32.xlu0 %v147
    %v149 = vpop.xlane.xlu0 %148
    %v150 = vmul.f32 %v140, %v125
    %v151 = vmul.f32 %v143, %v125
    %v152 = vmul.f32 %v146, %v125
    %v153 = vmul.f32 %v149, %v125
    %v154 = vadd.f32 %v150, 1e-05
    %v155 = vadd.f32 %v151, 1e-05
    %v156 = vadd.f32 %v152, 1e-05
    %v157 = vadd.f32 %v153, 1e-05
    %v158 = vrsqrt.pop %v154
    %v159 = vrsqrt.pop %v155
    %v160 = vrsqrt.pop %v156
    %v161 = vrsqrt.pop %v157
    %v162 = vmul.f32 %v130, %v158
    %v163 = vmul.f32 %v131, %v159
    %v164 = vmul.f32 %v132, %v160
    %v165 = vmul.f32 %v133, %v161
    %v167 = vlaneseq
    %v168 = vshrl.u32 %v167, 7
    %v169 = vsub.s32 0, %v168
    %v170 = vrot.slane %v110, %v169
    %v172 = vmul.f32 %v162, %v170
    %v173 = vmul.f32 %v163, %v170
    %v174 = vmul.f32 %v164, %v170
    %v175 = vmul.f32 %v165, %v170
    %v177 = vlaneseq
    %v178 = vshrl.u32 %v177, 7
    %v179 = vsub.s32 0, %v178
    %v180 = vrot.slane %v111, %v179
    %v182 = vadd.f32 %v172, %v180
    %v183 = vadd.f32 %v173, %v180
    %v184 = vadd.f32 %v174, %v180
    %v185 = vadd.f32 %v175, %v180
    %v186 = vld [vmem:[%s4] sm:$0xff]
    %v187 = vld [vmem:[%s4 + $0x8] sm:$0xff]
    %v188 = vld [vmem:[%s4 + $0x10] sm:$0xff]
    %v189 = vld [vmem:[%s4 + $0x18] sm:$0xff]
    %v190 = vld [vmem:[%s4 + $0x20] sm:$0xff]
    %v191 = vld [vmem:[%s4 + $0x28] sm:$0xff]
    %v192 = vld [vmem:[%s4 + $0x30] sm:$0xff]
    %v193 = vld [vmem:[%s4 + $0x38] sm:$0xff]
    %v195 = vsel %vm112, %v182, 0
    %v198 = vsel %vm112, %v183, 0
    %v201 = vsel %vm112, %v184, 0
    %v204 = vsel %vm112, %v185, 0
    %206 = vmatprep.subr.mxu0 0.0
    %207 = vmatpush1.msra.mxu0 %v186
    %208 = vmatprep.subr.mxu0 0.0
    %209 = vmatpush1.msra.mxu0 %v187
    %210 = vmatprep.subr.mxu0 0.0
    %211 = vmatpush1.msra.mxu0 %v188
    %212 = vmatprep.subr.mxu0 0.0
    %213 = vmatpush1.msra.mxu0 %v189
    %214 = vmatprep.subr.mxu0 0.0
    %215 = vmatpush1.msra.mxu0 %v190
    %216 = vmatprep.subr.mxu0 0.0
    %217 = vmatpush1.msra.mxu0 %v191
    %218 = vmatprep.subr.mxu0 0.0
    %219 = vmatpush1.msra.mxu0 %v192
    %220 = vmatprep.subr.mxu0 0.0
    %221 = vmatpush1.msra.mxu0 %v193
    %222 = vmatprep.subr.mxu0 0.0
    %223 = vmatpush1.msra.mxu0 0.0
    %224 = vmatprep.subr.mxu0 0.0
    %225 = vmatpush1.msra.mxu0 0.0
    %226 = vmatprep.subr.mxu0 0.0
    %227 = vmatpush1.msra.mxu0 0.0
    %228 = vmatprep.subr.mxu0 0.0
    %229 = vmatpush1.msra.mxu0 0.0
    %230 = vmatprep.subr.mxu0 0.0
    %231 = vmatpush1.msra.mxu0 0.0
    %232 = vmatprep.subr.mxu0 0.0
    %233 = vmatpush1.msra.mxu0 0.0
    %234 = vmatprep.subr.mxu0 0.0
    %235 = vmatpush1.msra.mxu0 0.0
    %236 = vmatprep.subr.mxu0 0.0
    %237 = vmatpush1.msra.mxu0 0.0
    %238 = vmatprep.subr.mxu0 0.0
    %239 = vmatpush1.msra.mxu0 0.0
    %240 = vmatprep.subr.mxu0 0.0
    %241 = vmatpush1.msra.mxu0 0.0
    %242 = vmatprep.subr.mxu0 0.0
    %243 = vmatpush1.msra.mxu0 0.0
    %244 = vmatprep.subr.mxu0 0.0
    %245 = vmatpush1.msra.mxu0 0.0
    %246 = vmatprep.subr.mxu0 0.0
    %247 = vmatpush1.msra.mxu0 0.0
    %248 = vmatprep.subr.mxu0 0.0
    %249 = vmatpush1.msra.mxu0 0.0
    %250 = vmatprep.subr.mxu0 0.0
    %251 = vmatpush1.msra.mxu0 0.0
    %252 = vmatprep.subr.mxu0 0.0
    %253 = vmatpush1.msra.mxu0 0.0
    %254 = vmatprep.subr.mxu0 0.0
    %255 = vmatpush1.msra.mxu0 0.0
    %256 = vmatprep.subr.mxu0 0.0
    %257 = vmatpush1.msra.mxu0 0.0
    %258 = vmatprep.subr.mxu0 0.0
    %259 = vmatpush1.msra.mxu0 0.0
    %260 = vmatprep.subr.mxu0 0.0
    %261 = vmatpush1.msra.mxu0 0.0
    %262 = vmatprep.subr.mxu0 0.0
    %263 = vmatpush1.msra.mxu0 0.0
    %264 = vmatprep.subr.mxu0 0.0
    %265 = vmatpush1.msra.mxu0 0.0
    %266 = vmatprep.subr.mxu0 0.0
    %267 = vmatpush1.msra.mxu0 0.0
    %268 = vmatprep.subr.mxu0 0.0
    %269 = vmatpush1.msra.mxu0 0.0
    %270 = vmatprep.mubr.f32.mxu0 0.0
    %271 = vmatmul.mubr.f32.gmra.mrb[0].mxu0 %v195
    %v272 = vpop.f32.mrb[0].mxu0
    %v273 = vadd.f32 0.0, %v272
    %v274 = vpop.f32.mrb[0].mxu0
    %275 = vmatprep.mubr.f32.mxu0 0.0
    %276 = vmatmul.mubr.f32.gmra.mrb[0].mxu0 %v198
    %v277 = vpop.f32.mrb[0].mxu0
    %v278 = vadd.f32 0.0, %v277
    %v279 = vpop.f32.mrb[0].mxu0
    %280 = vmatprep.mubr.f32.mxu0 0.0
    %281 = vmatmul.mubr.f32.gmra.mrb[0].mxu0 %v201
    %v282 = vpop.f32.mrb[0].mxu0
    %v283 = vadd.f32 0.0, %v282
    %v284 = vpop.f32.mrb[0].mxu0
    %285 = vmatprep.mubr.f32.mxu0 0.0
    %286 = vmatmul.mubr.f32.gmra.mrb[0].mxu0 %v204
    %v287 = vpop.f32.mrb[0].mxu0
    %v288 = vadd.f32 0.0, %v287
    %v289 = vpop.f32.mrb[0].mxu0
    %290 = vdwg.mxu0
    %v291 = vld [vmem:[%s5] sm:$0xff]
    %v292 = vld [vmem:[%s5 + $0x8] sm:$0xff]
    %v293 = vld [vmem:[%s5 + $0x10] sm:$0xff]
    %v294 = vld [vmem:[%s5 + $0x18] sm:$0xff]
    %v295 = vld [vmem:[%s5 + $0x20] sm:$0xff]
    %v296 = vld [vmem:[%s5 + $0x28] sm:$0xff]
    %v297 = vld [vmem:[%s5 + $0x30] sm:$0xff]
    %v298 = vld [vmem:[%s5 + $0x38] sm:$0xff]
    %299 = vmatprep.subr.mxu0 0.0
    %300 = vmatpush1.msra.mxu0 %v291
    %301 = vmatprep.subr.mxu0 0.0
    %302 = vmatpush1.msra.mxu0 %v292
    %303 = vmatprep.subr.mxu0 0.0
    %304 = vmatpush1.msra.mxu0 %v293
    %305 = vmatprep.subr.mxu0 0.0
    %306 = vmatpush1.msra.mxu0 %v294
    %307 = vmatprep.subr.mxu0 0.0
    %308 = vmatpush1.msra.mxu0 %v295
    %309 = vmatprep.subr.mxu0 0.0
    %310 = vmatpush1.msra.mxu0 %v296
    %311 = vmatprep.subr.mxu0 0.0
    %312 = vmatpush1.msra.mxu0 %v297
    %313 = vmatprep.subr.mxu0 0.0
    %314 = vmatpush1.msra.mxu0 %v298
    %315 = vmatprep.subr.mxu0 0.0
    %316 = vmatpush1.msra.mxu0 0.0
    %317 = vmatprep.subr.mxu0 0.0
    %318 = vmatpush1.msra.mxu0 0.0
    %319 = vmatprep.subr.mxu0 0.0
    %320 = vmatpush1.msra.mxu0 0.0
    %321 = vmatprep.subr.mxu0 0.0
    %322 = vmatpush1.msra.mxu0 0.0
    %323 = vmatprep.subr.mxu0 0.0
    %324 = vmatpush1.msra.mxu0 0.0
    %325 = vmatprep.subr.mxu0 0.0
    %326 = vmatpush1.msra.mxu0 0.0
    %327 = vmatprep.subr.mxu0 0.0
    %328 = vmatpush1.msra.mxu0 0.0
    %329 = vmatprep.subr.mxu0 0.0
    %330 = vmatpush1.msra.mxu0 0.0
    %331 = vmatprep.subr.mxu0 0.0
    %332 = vmatpush1.msra.mxu0 0.0
    %333 = vmatprep.subr.mxu0 0.0
    %334 = vmatpush1.msra.mxu0 0.0
    %335 = vmatprep.subr.mxu0 0.0
    %336 = vmatpush1.msra.mxu0 0.0
    %337 = vmatprep.subr.mxu0 0.0
    %338 = vmatpush1.msra.mxu0 0.0
    %339 = vmatprep.subr.mxu0 0.0
    %340 = vmatpush1.msra.mxu0 0.0
    %341 = vmatprep.subr.mxu0 0.0
    %342 = vmatpush1.msra.mxu0 0.0
    %343 = vmatprep.subr.mxu0 0.0
    %344 = vmatpush1.msra.mxu0 0.0
    %345 = vmatprep.subr.mxu0 0.0
    %346 = vmatpush1.msra.mxu0 0.0
    %347 = vmatprep.subr.mxu0 0.0
    %348 = vmatpush1.msra.mxu0 0.0
    %349 = vmatprep.subr.mxu0 0.0
    %350 = vmatpush1.msra.mxu0 0.0
    %351 = vmatprep.subr.mxu0 0.0
    %352 = vmatpush1.msra.mxu0 0.0
    %353 = vmatprep.subr.mxu0 0.0
    %354 = vmatpush1.msra.mxu0 0.0
    %355 = vmatprep.subr.mxu0 0.0
    %356 = vmatpush1.msra.mxu0 0.0
    %357 = vmatprep.subr.mxu0 0.0
    %358 = vmatpush1.msra.mxu0 0.0
    %359 = vmatprep.subr.mxu0 0.0
    %360 = vmatpush1.msra.mxu0 0.0
    %361 = vmatprep.subr.mxu0 0.0
    %362 = vmatpush1.msra.mxu0 0.0
    %363 = vmatprep.mubr.f32.mxu0 0.0
    %364 = vmatmul.mubr.f32.gmra.mrb[0].mxu0 %v195
    %v365 = vpop.f32.mrb[0].mxu0
    %v366 = vadd.f32 0.0, %v365
    %v367 = vpop.f32.mrb[0].mxu0
    %368 = vmatprep.mubr.f32.mxu0 0.0
    %369 = vmatmul.mubr.f32.gmra.mrb[0].mxu0 %v198
    %v370 = vpop.f32.mrb[0].mxu0
    %v371 = vadd.f32 0.0, %v370
    %v372 = vpop.f32.mrb[0].mxu0
    %373 = vmatprep.mubr.f32.mxu0 0.0
    %374 = vmatmul.mubr.f32.gmra.mrb[0].mxu0 %v201
    %v375 = vpop.f32.mrb[0].mxu0
    %v376 = vadd.f32 0.0, %v375
    %v377 = vpop.f32.mrb[0].mxu0
    %378 = vmatprep.mubr.f32.mxu0 0.0
    %379 = vmatmul.mubr.f32.gmra.mrb[0].mxu0 %v204
    %v380 = vpop.f32.mrb[0].mxu0
    %v381 = vadd.f32 0.0, %v380
    %v382 = vpop.f32.mrb[0].mxu0
    %383 = vdwg.mxu0
    %v384 = vld [vmem:[%s6] sm:$0xff]
    %v385 = vld [vmem:[%s6 + $0x8] sm:$0xff]
    %v386 = vld [vmem:[%s6 + $0x10] sm:$0xff]
    %v387 = vld [vmem:[%s6 + $0x18] sm:$0xff]
    %v388 = vld [vmem:[%s6 + $0x20] sm:$0xff]
    %v389 = vld [vmem:[%s6 + $0x28] sm:$0xff]
    %v390 = vld [vmem:[%s6 + $0x30] sm:$0xff]
    %v391 = vld [vmem:[%s6 + $0x38] sm:$0xff]
    %392 = vmatprep.subr.mxu0 0.0
    %393 = vmatpush1.msra.mxu0 %v384
    %394 = vmatprep.subr.mxu0 0.0
    %395 = vmatpush1.msra.mxu0 %v385
    %396 = vmatprep.subr.mxu0 0.0
    %397 = vmatpush1.msra.mxu0 %v386
    %398 = vmatprep.subr.mxu0 0.0
    %399 = vmatpush1.msra.mxu0 %v387
    %400 = vmatprep.subr.mxu0 0.0
    %401 = vmatpush1.msra.mxu0 %v388
    %402 = vmatprep.subr.mxu0 0.0
    %403 = vmatpush1.msra.mxu0 %v389
    %404 = vmatprep.subr.mxu0 0.0
    %405 = vmatpush1.msra.mxu0 %v390
    %406 = vmatprep.subr.mxu0 0.0
    %407 = vmatpush1.msra.mxu0 %v391
    %408 = vmatprep.subr.mxu0 0.0
    %409 = vmatpush1.msra.mxu0 0.0
    %410 = vmatprep.subr.mxu0 0.0
    %411 = vmatpush1.msra.mxu0 0.0
    %412 = vmatprep.subr.mxu0 0.0
    %413 = vmatpush1.msra.mxu0 0.0
    %414 = vmatprep.subr.mxu0 0.0
    %415 = vmatpush1.msra.mxu0 0.0
    %416 = vmatprep.subr.mxu0 0.0
    %417 = vmatpush1.msra.mxu0 0.0
    %418 = vmatprep.subr.mxu0 0.0
    %419 = vmatpush1.msra.mxu0 0.0
    %420 = vmatprep.subr.mxu0 0.0
    %421 = vmatpush1.msra.mxu0 0.0
    %422 = vmatprep.subr.mxu0 0.0
    %423 = vmatpush1.msra.mxu0 0.0
    %424 = vmatprep.subr.mxu0 0.0
    %425 = vmatpush1.msra.mxu0 0.0
    %426 = vmatprep.subr.mxu0 0.0
    %427 = vmatpush1.msra.mxu0 0.0
    %428 = vmatprep.subr.mxu0 0.0
    %429 = vmatpush1.msra.mxu0 0.0
    %430 = vmatprep.subr.mxu0 0.0
    %431 = vmatpush1.msra.mxu0 0.0
    %432 = vmatprep.subr.mxu0 0.0
    %433 = vmatpush1.msra.mxu0 0.0
    %434 = vmatprep.subr.mxu0 0.0
    %435 = vmatpush1.msra.mxu0 0.0
    %436 = vmatprep.subr.mxu0 0.0
    %437 = vmatpush1.msra.mxu0 0.0
    %438 = vmatprep.subr.mxu0 0.0
    %439 = vmatpush1.msra.mxu0 0.0
    %440 = vmatprep.subr.mxu0 0.0
    %441 = vmatpush1.msra.mxu0 0.0
    %442 = vmatprep.subr.mxu0 0.0
    %443 = vmatpush1.msra.mxu0 0.0
    %444 = vmatprep.subr.mxu0 0.0
    %445 = vmatpush1.msra.mxu0 0.0
    %446 = vmatprep.subr.mxu0 0.0
    %447 = vmatpush1.msra.mxu0 0.0
    %448 = vmatprep.subr.mxu0 0.0
    %449 = vmatpush1.msra.mxu0 0.0
    %450 = vmatprep.subr.mxu0 0.0
    %451 = vmatpush1.msra.mxu0 0.0
    %452 = vmatprep.subr.mxu0 0.0
    %453 = vmatpush1.msra.mxu0 0.0
    %454 = vmatprep.subr.mxu0 0.0
    %455 = vmatpush1.msra.mxu0 0.0
    %456 = vmatprep.mubr.f32.mxu0 0.0
    %457 = vmatmul.mubr.f32.gmra.mrb[0].mxu0 %v195
    %v458 = vpop.f32.mrb[0].mxu0
    %v459 = vadd.f32 0.0, %v458
    %v460 = vpop.f32.mrb[0].mxu0
    %461 = vmatprep.mubr.f32.mxu0 0.0
    %462 = vmatmul.mubr.f32.gmra.mrb[0].mxu0 %v198
    %v463 = vpop.f32.mrb[0].mxu0
    %v464 = vadd.f32 0.0, %v463
    %v465 = vpop.f32.mrb[0].mxu0
    %466 = vmatprep.mubr.f32.mxu0 0.0
    %467 = vmatmul.mubr.f32.gmra.mrb[0].mxu0 %v201
    %v468 = vpop.f32.mrb[0].mxu0
    %v469 = vadd.f32 0.0, %v468
    %v470 = vpop.f32.mrb[0].mxu0
    %471 = vmatprep.mubr.f32.mxu0 0.0
    %472 = vmatmul.mubr.f32.gmra.mrb[0].mxu0 %v204
    %v473 = vpop.f32.mrb[0].mxu0
    %v474 = vadd.f32 0.0, %v473
    %v475 = vpop.f32.mrb[0].mxu0
    %476 = vdwg.mxu0
    %v477 = vmul.f32 %v273, %v94
    %v478 = vmul.f32 %v278, %v95
    %v479 = vmul.f32 %v283, %v96
    %v480 = vmul.f32 %v288, %v97
    %v481 = vmul.f32 %v273, %v98
    %v482 = vmul.f32 %v278, %v99
    %v483 = vmul.f32 %v283, %v100
    %v484 = vmul.f32 %v288, %v101
    %v485 = vmul.f32 %v273, %v102
    %v486 = vmul.f32 %v278, %v103
    %v487 = vmul.f32 %v283, %v104
    %v488 = vmul.f32 %v288, %v105
    %v489 = vmul.f32 %v273, %v106
    %v490 = vmul.f32 %v278, %v107
    %v491 = vmul.f32 %v283, %v108
    %v492 = vmul.f32 %v288, %v109
    %v494 = vsel %vm112, %v477, 0
    %v497 = vsel %vm112, %v478, 0
    %v500 = vsel %vm112, %v479, 0
    %v503 = vsel %vm112, %v480, 0
    %v506 = vsel %vm112, %v481, 0
    %v509 = vsel %vm112, %v482, 0
    %v512 = vsel %vm112, %v483, 0
    %v515 = vsel %vm112, %v484, 0
    %v518 = vsel %vm112, %v485, 0
    %v521 = vsel %vm112, %v486, 0
    %v524 = vsel %vm112, %v487, 0
    %v527 = vsel %vm112, %v488, 0
    %v530 = vsel %vm112, %v489, 0
    %v533 = vsel %vm112, %v490, 0
    %v536 = vsel %vm112, %v491, 0
    %v539 = vsel %vm112, %v492, 0
    %v542 = vsel %vm112, %v366, 0
    %v545 = vsel %vm112, %v371, 0
    %v548 = vsel %vm112, %v376, 0
    %v551 = vsel %vm112, %v381, 0
    %553 = vmatprep.subr.mxu0 0.0
    %554 = vmatpush1.xpose.msra.mxu0 %v542
    %555 = vmatprep.subr.mxu0 0.0
    %556 = vmatpush1.xpose.msra.mxu0 %v545
    %557 = vmatprep.subr.mxu0 0.0
    %558 = vmatpush1.xpose.msra.mxu0 %v548
    %559 = vmatprep.subr.mxu0 0.0
    %560 = vmatpush1.xpose.msra.mxu0 %v551
    %561 = vmatprep.subr.mxu0 0.0
    %562 = vmatpush1.xpose.msra.mxu0 0.0
    %563 = vmatprep.subr.mxu0 0.0
    %564 = vmatpush1.xpose.msra.mxu0 0.0
    %565 = vmatprep.subr.mxu0 0.0
    %566 = vmatpush1.xpose.msra.mxu0 0.0
    %567 = vmatprep.subr.mxu0 0.0
    %568 = vmatpush1.xpose.msra.mxu0 0.0
    %569 = vmatprep.subr.mxu0 0.0
    %570 = vmatpush1.xpose.msra.mxu0 0.0
    %571 = vmatprep.subr.mxu0 0.0
    %572 = vmatpush1.xpose.msra.mxu0 0.0
    %573 = vmatprep.subr.mxu0 0.0
    %574 = vmatpush1.xpose.msra.mxu0 0.0
    %575 = vmatprep.subr.mxu0 0.0
    %576 = vmatpush1.xpose.msra.mxu0 0.0
    %577 = vmatprep.subr.mxu0 0.0
    %578 = vmatpush1.xpose.msra.mxu0 0.0
    %579 = vmatprep.subr.mxu0 0.0
    %580 = vmatpush1.xpose.msra.mxu0 0.0
    %581 = vmatprep.subr.mxu0 0.0
    %582 = vmatpush1.xpose.msra.mxu0 0.0
    %583 = vmatprep.subr.mxu0 0.0
    %584 = vmatpush1.xpose.msra.mxu0 0.0
    %585 = vmatprep.subr.mxu0 0.0
    %586 = vmatpush1.xpose.msra.mxu0 0.0
    %587 = vmatprep.subr.mxu0 0.0
    %588 = vmatpush1.xpose.msra.mxu0 0.0
    %589 = vmatprep.subr.mxu0 0.0
    %590 = vmatpush1.xpose.msra.mxu0 0.0
    %591 = vmatprep.subr.mxu0 0.0
    %592 = vmatpush1.xpose.msra.mxu0 0.0
    %593 = vmatprep.subr.mxu0 0.0
    %594 = vmatpush1.xpose.msra.mxu0 0.0
    %595 = vmatprep.subr.mxu0 0.0
    %596 = vmatpush1.xpose.msra.mxu0 0.0
    %597 = vmatprep.subr.mxu0 0.0
    %598 = vmatpush1.xpose.msra.mxu0 0.0
    %599 = vmatprep.subr.mxu0 0.0
    %600 = vmatpush1.xpose.msra.mxu0 0.0
    %601 = vmatprep.subr.mxu0 0.0
    %602 = vmatpush1.xpose.msra.mxu0 0.0
    %603 = vmatprep.subr.mxu0 0.0
    %604 = vmatpush1.xpose.msra.mxu0 0.0
    %605 = vmatprep.subr.mxu0 0.0
    %606 = vmatpush1.xpose.msra.mxu0 0.0
    %607 = vmatprep.subr.mxu0 0.0
    %608 = vmatpush1.xpose.msra.mxu0 0.0
    %609 = vmatprep.subr.mxu0 0.0
    %610 = vmatpush1.xpose.msra.mxu0 0.0
    %611 = vmatprep.subr.mxu0 0.0
    %612 = vmatpush1.xpose.msra.mxu0 0.0
    %613 = vmatprep.subr.mxu0 0.0
    %614 = vmatpush1.xpose.msra.mxu0 0.0
    %615 = vmatprep.subr.mxu0 0.0
    %616 = vmatpush1.xpose.msra.mxu0 0.0
    %617 = vmatprep.mubr.f32.mxu0 0.0
    %618 = vmatmul.mubr.f32.gmra.mrb[0].mxu0 %v494
    %v619 = vpop.f32.mrb[0].mxu0
    %v620 = vadd.f32 %v78, %v619
    %v621 = vpop.f32.mrb[0].mxu0
    %622 = vmatprep.mubr.f32.mxu0 0.0
    %623 = vmatmul.mubr.f32.gmra.mrb[0].mxu0 %v497
    %v624 = vpop.f32.mrb[0].mxu0
    %v625 = vadd.f32 %v79, %v624
    %v626 = vpop.f32.mrb[0].mxu0
    %627 = vmatprep.mubr.f32.mxu0 0.0
    %628 = vmatmul.mubr.f32.gmra.mrb[0].mxu0 %v500
    %v629 = vpop.f32.mrb[0].mxu0
    %v630 = vadd.f32 %v80, %v629
    %v631 = vpop.f32.mrb[0].mxu0
    %632 = vmatprep.mubr.f32.mxu0 0.0
    %633 = vmatmul.mubr.f32.gmra.mrb[0].mxu0 %v503
    %v634 = vpop.f32.mrb[0].mxu0
    %v635 = vadd.f32 %v81, %v634
    %v636 = vpop.f32.mrb[0].mxu0
    %637 = vmatprep.mubr.f32.mxu0 0.0
    %638 = vmatmul.mubr.f32.gmra.mrb[0].mxu0 %v506
    %v639 = vpop.f32.mrb[0].mxu0
    %v640 = vadd.f32 %v82, %v639
    %v641 = vpop.f32.mrb[0].mxu0
    %642 = vmatprep.mubr.f32.mxu0 0.0
    %643 = vmatmul.mubr.f32.gmra.mrb[0].mxu0 %v509
    %v644 = vpop.f32.mrb[0].mxu0
    %v645 = vadd.f32 %v83, %v644
    %v646 = vpop.f32.mrb[0].mxu0
    %647 = vmatprep.mubr.f32.mxu0 0.0
    %648 = vmatmul.mubr.f32.gmra.mrb[0].mxu0 %v512
    %v649 = vpop.f32.mrb[0].mxu0
    %v650 = vadd.f32 %v84, %v649
    %v651 = vpop.f32.mrb[0].mxu0
    %652 = vmatprep.mubr.f32.mxu0 0.0
    %653 = vmatmul.mubr.f32.gmra.mrb[0].mxu0 %v515
    %v654 = vpop.f32.mrb[0].mxu0
    %v655 = vadd.f32 %v85, %v654
    %v656 = vpop.f32.mrb[0].mxu0
    %657 = vmatprep.mubr.f32.mxu0 0.0
    %658 = vmatmul.mubr.f32.gmra.mrb[0].mxu0 %v518
    %v659 = vpop.f32.mrb[0].mxu0
    %v660 = vadd.f32 %v86, %v659
    %v661 = vpop.f32.mrb[0].mxu0
    %662 = vmatprep.mubr.f32.mxu0 0.0
    %663 = vmatmul.mubr.f32.gmra.mrb[0].mxu0 %v521
    %v664 = vpop.f32.mrb[0].mxu0
    %v665 = vadd.f32 %v87, %v664
    %v666 = vpop.f32.mrb[0].mxu0
    %667 = vmatprep.mubr.f32.mxu0 0.0
    %668 = vmatmul.mubr.f32.gmra.mrb[0].mxu0 %v524
    %v669 = vpop.f32.mrb[0].mxu0
    %v670 = vadd.f32 %v88, %v669
    %v671 = vpop.f32.mrb[0].mxu0
    %672 = vmatprep.mubr.f32.mxu0 0.0
    %673 = vmatmul.mubr.f32.gmra.mrb[0].mxu0 %v527
    %v674 = vpop.f32.mrb[0].mxu0
    %v675 = vadd.f32 %v89, %v674
    %v676 = vpop.f32.mrb[0].mxu0
    %677 = vmatprep.mubr.f32.mxu0 0.0
    %678 = vmatmul.mubr.f32.gmra.mrb[0].mxu0 %v530
    %v679 = vpop.f32.mrb[0].mxu0
    %v680 = vadd.f32 %v90, %v679
    %v681 = vpop.f32.mrb[0].mxu0
    %682 = vmatprep.mubr.f32.mxu0 0.0
    %683 = vmatmul.mubr.f32.gmra.mrb[0].mxu0 %v533
    %v684 = vpop.f32.mrb[0].mxu0
    %v685 = vadd.f32 %v91, %v684
    %v686 = vpop.f32.mrb[0].mxu0
    %687 = vmatprep.mubr.f32.mxu0 0.0
    %688 = vmatmul.mubr.f32.gmra.mrb[0].mxu0 %v536
    %v689 = vpop.f32.mrb[0].mxu0
    %v690 = vadd.f32 %v92, %v689
    %v691 = vpop.f32.mrb[0].mxu0
    %692 = vmatprep.mubr.f32.mxu0 0.0
    %693 = vmatmul.mubr.f32.gmra.mrb[0].mxu0 %v539
    %v694 = vpop.f32.mrb[0].mxu0
    %v695 = vadd.f32 %v93, %v694
    %v696 = vpop.f32.mrb[0].mxu0
    %697 = vdwg.mxu0
    %vm698 = vcmask 261120
    %v699 = vsel %vm698, %v620, -inf
    %700 = vmax.xlane.f32.xlu0 %v699
    %v701 = vpop.xlane.xlu0 %700
    %v702 = vsel %vm698, %v625, -inf
    %703 = vmax.xlane.f32.xlu0 %v702
    %v704 = vpop.xlane.xlu0 %703
    %v705 = vsel %vm698, %v630, -inf
    %706 = vmax.xlane.f32.xlu0 %v705
    %v707 = vpop.xlane.xlu0 %706
    %v708 = vsel %vm698, %v635, -inf
    %709 = vmax.xlane.f32.xlu0 %v708
    %v710 = vpop.xlane.xlu0 %709
    %v711 = vsel %vm698, %v640, -inf
    %712 = vmax.xlane.f32.xlu0 %v711
    %v713 = vpop.xlane.xlu0 %712
    %v714 = vsel %vm698, %v645, -inf
    %715 = vmax.xlane.f32.xlu0 %v714
    %v716 = vpop.xlane.xlu0 %715
    %v717 = vsel %vm698, %v650, -inf
    %718 = vmax.xlane.f32.xlu0 %v717
    %v719 = vpop.xlane.xlu0 %718
    %v720 = vsel %vm698, %v655, -inf
    %721 = vmax.xlane.f32.xlu0 %v720
    %v722 = vpop.xlane.xlu0 %721
    %v723 = vsel %vm698, %v660, -inf
    %724 = vmax.xlane.f32.xlu0 %v723
    %v725 = vpop.xlane.xlu0 %724
    %v726 = vsel %vm698, %v665, -inf
    %727 = vmax.xlane.f32.xlu0 %v726
    %v728 = vpop.xlane.xlu0 %727
    %v729 = vsel %vm698, %v670, -inf
    %730 = vmax.xlane.f32.xlu0 %v729
    %v731 = vpop.xlane.xlu0 %730
    %v732 = vsel %vm698, %v675, -inf
    %733 = vmax.xlane.f32.xlu0 %v732
    %v734 = vpop.xlane.xlu0 %733
    %v735 = vsel %vm698, %v680, -inf
    %736 = vmax.xlane.f32.xlu0 %v735
    %v737 = vpop.xlane.xlu0 %736
    %v738 = vsel %vm698, %v685, -inf
    %739 = vmax.xlane.f32.xlu0 %v738
    %v740 = vpop.xlane.xlu0 %739
    %v741 = vsel %vm698, %v690, -inf
    %742 = vmax.xlane.f32.xlu0 %v741
    %v743 = vpop.xlane.xlu0 %742
    %v744 = vsel %vm698, %v695, -inf
    %745 = vmax.xlane.f32.xlu0 %v744
    %v746 = vpop.xlane.xlu0 %745
    %v747 = vsub.f32 %v620, %v701
    %v748 = vsub.f32 %v625, %v704
    %v749 = vsub.f32 %v630, %v707
    %v750 = vsub.f32 %v635, %v710
    %v751 = vsub.f32 %v640, %v713
    %v752 = vsub.f32 %v645, %v716
    %v753 = vsub.f32 %v650, %v719
    %v754 = vsub.f32 %v655, %v722
    %v755 = vsub.f32 %v660, %v725
    %v756 = vsub.f32 %v665, %v728
    %v757 = vsub.f32 %v670, %v731
    %v758 = vsub.f32 %v675, %v734
    %v759 = vsub.f32 %v680, %v737
    %v760 = vsub.f32 %v685, %v740
    %v761 = vsub.f32 %v690, %v743
    %v762 = vsub.f32 %v695, %v746
    %v763 = vmul.f32 %v747, 1.442695
    %v764 = vpow.pop %v763
    %v765 = vmul.f32 %v748, 1.442695
    %v766 = vpow.pop %v765
    %v767 = vmul.f32 %v749, 1.442695
    %v768 = vpow.pop %v767
    %v769 = vmul.f32 %v750, 1.442695
    %v770 = vpow.pop %v769
    %v771 = vmul.f32 %v751, 1.442695
    %v772 = vpow.pop %v771
    %v773 = vmul.f32 %v752, 1.442695
    %v774 = vpow.pop %v773
    %v775 = vmul.f32 %v753, 1.442695
    %v776 = vpow.pop %v775
    %v777 = vmul.f32 %v754, 1.442695
    %v778 = vpow.pop %v777
    %v779 = vmul.f32 %v755, 1.442695
    %v780 = vpow.pop %v779
    %v781 = vmul.f32 %v756, 1.442695
    %v782 = vpow.pop %v781
    %v783 = vmul.f32 %v757, 1.442695
    %v784 = vpow.pop %v783
    %v785 = vmul.f32 %v758, 1.442695
    %v786 = vpow.pop %v785
    %v787 = vmul.f32 %v759, 1.442695
    %v788 = vpow.pop %v787
    %v789 = vmul.f32 %v760, 1.442695
    %v790 = vpow.pop %v789
    %v791 = vmul.f32 %v761, 1.442695
    %v792 = vpow.pop %v791
    %v793 = vmul.f32 %v762, 1.442695
    %v794 = vpow.pop %v793
    %v795 = vsel %vm698, %v764, 0.0
    %796 = vadd.xlane.f32.xlu0 %v795
    %v797 = vpop.xlane.xlu0 %796
    %v798 = vsel %vm698, %v766, 0.0
    %799 = vadd.xlane.f32.xlu0 %v798
    %v800 = vpop.xlane.xlu0 %799
    %v801 = vsel %vm698, %v768, 0.0
    %802 = vadd.xlane.f32.xlu0 %v801
    %v803 = vpop.xlane.xlu0 %802
    %v804 = vsel %vm698, %v770, 0.0
    %805 = vadd.xlane.f32.xlu0 %v804
    %v806 = vpop.xlane.xlu0 %805
    %v807 = vsel %vm698, %v772, 0.0
    %808 = vadd.xlane.f32.xlu0 %v807
    %v809 = vpop.xlane.xlu0 %808
    %v810 = vsel %vm698, %v774, 0.0
    %811 = vadd.xlane.f32.xlu0 %v810
    %v812 = vpop.xlane.xlu0 %811
    %v813 = vsel %vm698, %v776, 0.0
    %814 = vadd.xlane.f32.xlu0 %v813
    %v815 = vpop.xlane.xlu0 %814
    %v816 = vsel %vm698, %v778, 0.0
    %817 = vadd.xlane.f32.xlu0 %v816
    %v818 = vpop.xlane.xlu0 %817
    %v819 = vsel %vm698, %v780, 0.0
    %820 = vadd.xlane.f32.xlu0 %v819
    %v821 = vpop.xlane.xlu0 %820
    %v822 = vsel %vm698, %v782, 0.0
    %823 = vadd.xlane.f32.xlu0 %v822
    %v824 = vpop.xlane.xlu0 %823
    %v825 = vsel %vm698, %v784, 0.0
    %826 = vadd.xlane.f32.xlu0 %v825
    %v827 = vpop.xlane.xlu0 %826
    %v828 = vsel %vm698, %v786, 0.0
    %829 = vadd.xlane.f32.xlu0 %v828
    %v830 = vpop.xlane.xlu0 %829
    %v831 = vsel %vm698, %v788, 0.0
    %832 = vadd.xlane.f32.xlu0 %v831
    %v833 = vpop.xlane.xlu0 %832
    %v834 = vsel %vm698, %v790, 0.0
    %835 = vadd.xlane.f32.xlu0 %v834
    %v836 = vpop.xlane.xlu0 %835
    %v837 = vsel %vm698, %v792, 0.0
    %838 = vadd.xlane.f32.xlu0 %v837
    %v839 = vpop.xlane.xlu0 %838
    %v840 = vsel %vm698, %v794, 0.0
    %841 = vadd.xlane.f32.xlu0 %v840
    %v842 = vpop.xlane.xlu0 %841
    %v843 = vrcp.pop %v797
    %v844 = vrcp.pop %v800
    %v845 = vrcp.pop %v803
    %v846 = vrcp.pop %v806
    %v847 = vrcp.pop %v809
    %v848 = vrcp.pop %v812
    %v849 = vrcp.pop %v815
    %v850 = vrcp.pop %v818
    %v851 = vrcp.pop %v821
    %v852 = vrcp.pop %v824
    %v853 = vrcp.pop %v827
    %v854 = vrcp.pop %v830
    %v855 = vrcp.pop %v833
    %v856 = vrcp.pop %v836
    %v857 = vrcp.pop %v839
    %v858 = vrcp.pop %v842
    %v859 = vmul.f32 %v764, %v843
    %v860 = vmul.f32 %v766, %v844
    %v861 = vmul.f32 %v768, %v845
    %v862 = vmul.f32 %v770, %v846
    %v863 = vmul.f32 %v772, %v847
    %v864 = vmul.f32 %v774, %v848
    %v865 = vmul.f32 %v776, %v849
    %v866 = vmul.f32 %v778, %v850
    %v867 = vmul.f32 %v780, %v851
    %v868 = vmul.f32 %v782, %v852
    %v869 = vmul.f32 %v784, %v853
    %v870 = vmul.f32 %v786, %v854
    %v871 = vmul.f32 %v788, %v855
    %v872 = vmul.f32 %v790, %v856
    %v873 = vmul.f32 %v792, %v857
    %v874 = vmul.f32 %v794, %v858
    %v876 = vsel %vm698, %v859, 0
    %v879 = vsel %vm698, %v860, 0
    %v882 = vsel %vm698, %v861, 0
    %v885 = vsel %vm698, %v862, 0
    %v888 = vsel %vm698, %v863, 0
    %v891 = vsel %vm698, %v864, 0
    %v894 = vsel %vm698, %v865, 0
    %v897 = vsel %vm698, %v866, 0
    %v900 = vsel %vm698, %v867, 0
    %v903 = vsel %vm698, %v868, 0
    %v906 = vsel %vm698, %v869, 0
    %v909 = vsel %vm698, %v870, 0
    %v912 = vsel %vm698, %v871, 0
    %v915 = vsel %vm698, %v872, 0
    %v918 = vsel %vm698, %v873, 0
    %v921 = vsel %vm698, %v874, 0
    %923 = vmatprep.subr.mxu0 0.0
    %924 = vmatpush1.msra.mxu0 %v459
    %925 = vmatprep.subr.mxu0 0.0
    %926 = vmatpush1.msra.mxu0 %v464
    %927 = vmatprep.subr.mxu0 0.0
    %928 = vmatpush1.msra.mxu0 %v469
    %929 = vmatprep.subr.mxu0 0.0
    %930 = vmatpush1.msra.mxu0 %v474
    %931 = vmatprep.subr.mxu0 0.0
    %932 = vmatpush1.msra.mxu0 0.0
    %933 = vmatprep.subr.mxu0 0.0
    %934 = vmatpush1.msra.mxu0 0.0
    %935 = vmatprep.subr.mxu0 0.0
    %936 = vmatpush1.msra.mxu0 0.0
    %937 = vmatprep.subr.mxu0 0.0
    %938 = vmatpush1.msra.mxu0 0.0
    %939 = vmatprep.subr.mxu0 0.0
    %940 = vmatpush1.msra.mxu0 0.0
    %941 = vmatprep.subr.mxu0 0.0
    %942 = vmatpush1.msra.mxu0 0.0
    %943 = vmatprep.subr.mxu0 0.0
    %944 = vmatpush1.msra.mxu0 0.0
    %945 = vmatprep.subr.mxu0 0.0
    %946 = vmatpush1.msra.mxu0 0.0
    %947 = vmatprep.subr.mxu0 0.0
    %948 = vmatpush1.msra.mxu0 0.0
    %949 = vmatprep.subr.mxu0 0.0
    %950 = vmatpush1.msra.mxu0 0.0
    %951 = vmatprep.subr.mxu0 0.0
    %952 = vmatpush1.msra.mxu0 0.0
    %953 = vmatprep.subr.mxu0 0.0
    %954 = vmatpush1.msra.mxu0 0.0
    %955 = vmatprep.subr.mxu0 0.0
    %956 = vmatpush1.msra.mxu0 0.0
    %957 = vmatprep.subr.mxu0 0.0
    %958 = vmatpush1.msra.mxu0 0.0
    %959 = vmatprep.subr.mxu0 0.0
    %960 = vmatpush1.msra.mxu0 0.0
    %961 = vmatprep.subr.mxu0 0.0
    %962 = vmatpush1.msra.mxu0 0.0
    %963 = vmatprep.subr.mxu0 0.0
    %964 = vmatpush1.msra.mxu0 0.0
    %965 = vmatprep.subr.mxu0 0.0
    %966 = vmatpush1.msra.mxu0 0.0
    %967 = vmatprep.subr.mxu0 0.0
    %968 = vmatpush1.msra.mxu0 0.0
    %969 = vmatprep.subr.mxu0 0.0
    %970 = vmatpush1.msra.mxu0 0.0
    %971 = vmatprep.subr.mxu0 0.0
    %972 = vmatpush1.msra.mxu0 0.0
    %973 = vmatprep.subr.mxu0 0.0
    %974 = vmatpush1.msra.mxu0 0.0
    %975 = vmatprep.subr.mxu0 0.0
    %976 = vmatpush1.msra.mxu0 0.0
    %977 = vmatprep.subr.mxu0 0.0
    %978 = vmatpush1.msra.mxu0 0.0
    %979 = vmatprep.subr.mxu0 0.0
    %980 = vmatpush1.msra.mxu0 0.0
    %981 = vmatprep.subr.mxu0 0.0
    %982 = vmatpush1.msra.mxu0 0.0
    %983 = vmatprep.subr.mxu0 0.0
    %984 = vmatpush1.msra.mxu0 0.0
    %985 = vmatprep.subr.mxu0 0.0
    %986 = vmatpush1.msra.mxu0 0.0
    %987 = vmatprep.mubr.f32.mxu0 0.0
    %988 = vmatmul.mubr.f32.gmra.mrb[0].mxu0 %v876
    %v989 = vpop.f32.mrb[0].mxu0
    %v990 = vadd.f32 0.0, %v989
    %v991 = vpop.f32.mrb[0].mxu0
    %992 = vmatprep.mubr.f32.mxu0 0.0
    %993 = vmatmul.mubr.f32.gmra.mrb[0].mxu0 %v879
    %v994 = vpop.f32.mrb[0].mxu0
    %v995 = vadd.f32 0.0, %v994
    %v996 = vpop.f32.mrb[0].mxu0
    %997 = vmatprep.mubr.f32.mxu0 0.0
    %998 = vmatmul.mubr.f32.gmra.mrb[0].mxu0 %v882
    %v999 = vpop.f32.mrb[0].mxu0
    %v1000 = vadd.f32 0.0, %v999
    %v1001 = vpop.f32.mrb[0].mxu0
    %1002 = vmatprep.mubr.f32.mxu0 0.0
    %1003 = vmatmul.mubr.f32.gmra.mrb[0].mxu0 %v885
    %v1004 = vpop.f32.mrb[0].mxu0
    %v1005 = vadd.f32 0.0, %v1004
    %v1006 = vpop.f32.mrb[0].mxu0
    %1007 = vmatprep.mubr.f32.mxu0 0.0
    %1008 = vmatmul.mubr.f32.gmra.mrb[0].mxu0 %v888
    %v1009 = vpop.f32.mrb[0].mxu0
    %v1010 = vadd.f32 0.0, %v1009
    %v1011 = vpop.f32.mrb[0].mxu0
    %1012 = vmatprep.mubr.f32.mxu0 0.0
    %1013 = vmatmul.mubr.f32.gmra.mrb[0].mxu0 %v891
    %v1014 = vpop.f32.mrb[0].mxu0
    %v1015 = vadd.f32 0.0, %v1014
    %v1016 = vpop.f32.mrb[0].mxu0
    %1017 = vmatprep.mubr.f32.mxu0 0.0
    %1018 = vmatmul.mubr.f32.gmra.mrb[0].mxu0 %v894
    %v1019 = vpop.f32.mrb[0].mxu0
    %v1020 = vadd.f32 0.0, %v1019
    %v1021 = vpop.f32.mrb[0].mxu0
    %1022 = vmatprep.mubr.f32.mxu0 0.0
    %1023 = vmatmul.mubr.f32.gmra.mrb[0].mxu0 %v897
    %v1024 = vpop.f32.mrb[0].mxu0
    %v1025 = vadd.f32 0.0, %v1024
    %v1026 = vpop.f32.mrb[0].mxu0
    %1027 = vmatprep.mubr.f32.mxu0 0.0
    %1028 = vmatmul.mubr.f32.gmra.mrb[0].mxu0 %v900
    %v1029 = vpop.f32.mrb[0].mxu0
    %v1030 = vadd.f32 0.0, %v1029
    %v1031 = vpop.f32.mrb[0].mxu0
    %1032 = vmatprep.mubr.f32.mxu0 0.0
    %1033 = vmatmul.mubr.f32.gmra.mrb[0].mxu0 %v903
    %v1034 = vpop.f32.mrb[0].mxu0
    %v1035 = vadd.f32 0.0, %v1034
    %v1036 = vpop.f32.mrb[0].mxu0
    %1037 = vmatprep.mubr.f32.mxu0 0.0
    %1038 = vmatmul.mubr.f32.gmra.mrb[0].mxu0 %v906
    %v1039 = vpop.f32.mrb[0].mxu0
    %v1040 = vadd.f32 0.0, %v1039
    %v1041 = vpop.f32.mrb[0].mxu0
    %1042 = vmatprep.mubr.f32.mxu0 0.0
    %1043 = vmatmul.mubr.f32.gmra.mrb[0].mxu0 %v909
    %v1044 = vpop.f32.mrb[0].mxu0
    %v1045 = vadd.f32 0.0, %v1044
    %v1046 = vpop.f32.mrb[0].mxu0
    %1047 = vmatprep.mubr.f32.mxu0 0.0
    %1048 = vmatmul.mubr.f32.gmra.mrb[0].mxu0 %v912
    %v1049 = vpop.f32.mrb[0].mxu0
    %v1050 = vadd.f32 0.0, %v1049
    %v1051 = vpop.f32.mrb[0].mxu0
    %1052 = vmatprep.mubr.f32.mxu0 0.0
    %1053 = vmatmul.mubr.f32.gmra.mrb[0].mxu0 %v915
    %v1054 = vpop.f32.mrb[0].mxu0
    %v1055 = vadd.f32 0.0, %v1054
    %v1056 = vpop.f32.mrb[0].mxu0
    %1057 = vmatprep.mubr.f32.mxu0 0.0
    %1058 = vmatmul.mubr.f32.gmra.mrb[0].mxu0 %v918
    %v1059 = vpop.f32.mrb[0].mxu0
    %v1060 = vadd.f32 0.0, %v1059
    %v1061 = vpop.f32.mrb[0].mxu0
    %1062 = vmatprep.mubr.f32.mxu0 0.0
    %1063 = vmatmul.mubr.f32.gmra.mrb[0].mxu0 %v921
    %v1064 = vpop.f32.mrb[0].mxu0
    %v1065 = vadd.f32 0.0, %v1064
    %v1066 = vpop.f32.mrb[0].mxu0
    %1067 = vdwg.mxu0
    %v1068 = vmul.f32 %v990, %v94
    %v1069 = vmul.f32 %v995, %v95
    %v1070 = vmul.f32 %v1000, %v96
    %v1071 = vmul.f32 %v1005, %v97
    %v1072 = vmul.f32 %v1010, %v98
    %v1073 = vmul.f32 %v1015, %v99
    %v1074 = vmul.f32 %v1020, %v100
    %v1075 = vmul.f32 %v1025, %v101
    %v1076 = vmul.f32 %v1030, %v102
    %v1077 = vmul.f32 %v1035, %v103
    %v1078 = vmul.f32 %v1040, %v104
    %v1079 = vmul.f32 %v1045, %v105
    %v1080 = vmul.f32 %v1050, %v106
    %v1081 = vmul.f32 %v1055, %v107
    %v1082 = vmul.f32 %v1060, %v108
    %v1083 = vmul.f32 %v1065, %v109
    %v1084 = vadd.f32 %v1068, %v1072
    %v1085 = vadd.f32 %v1069, %v1073
    %v1086 = vadd.f32 %v1070, %v1074
    %v1087 = vadd.f32 %v1071, %v1075
    %v1088 = vadd.f32 %v1084, %v1076
    %v1089 = vadd.f32 %v1085, %v1077
    %v1090 = vadd.f32 %v1086, %v1078
    %v1091 = vadd.f32 %v1087, %v1079
    %v1092 = vadd.f32 %v1088, %v1080
    %v1093 = vadd.f32 %v1089, %v1081
    %v1094 = vadd.f32 %v1090, %v1082
    %v1095 = vadd.f32 %v1091, %v1083
    %v1096 = vld [vmem:[%s7] sm:$0xff]
    %v1097 = vld [vmem:[%s7 + $0x8] sm:$0xff]
    %v1098 = vld [vmem:[%s7 + $0x10] sm:$0xff]
    %v1099 = vld [vmem:[%s7 + $0x18] sm:$0xff]
    %v1100 = vld [vmem:[%s7 + $0x20] sm:$0xff]
    %v1101 = vld [vmem:[%s7 + $0x28] sm:$0xff]
    %v1102 = vld [vmem:[%s7 + $0x30] sm:$0xff]
    %v1103 = vld [vmem:[%s7 + $0x38] sm:$0xff]
    %v1104 = vld [vmem:[%s8] sm:$0x1]
    %v1106 = vlaneseq
    %v1107 = vshrl.u32 %v1106, 7
    %v1108 = vsub.s32 0, %v1107
    %v1109 = vrot.slane %v1104, %v1108
    %v1112 = vsel %vm112, %v1092, 0
    %v1115 = vsel %vm112, %v1093, 0
    %v1118 = vsel %vm112, %v1094, 0
    %v1121 = vsel %vm112, %v1095, 0
    %1123 = vmatprep.subr.mxu0 0.0
    %1124 = vmatpush1.msra.mxu0 %v1096
    %1125 = vmatprep.subr.mxu0 0.0
    %1126 = vmatpush1.msra.mxu0 %v1097
    %1127 = vmatprep.subr.mxu0 0.0
    %1128 = vmatpush1.msra.mxu0 %v1098
    %1129 = vmatprep.subr.mxu0 0.0
    %1130 = vmatpush1.msra.mxu0 %v1099
    %1131 = vmatprep.subr.mxu0 0.0
    %1132 = vmatpush1.msra.mxu0 %v1100
    %1133 = vmatprep.subr.mxu0 0.0
    %1134 = vmatpush1.msra.mxu0 %v1101
    %1135 = vmatprep.subr.mxu0 0.0
    %1136 = vmatpush1.msra.mxu0 %v1102
    %1137 = vmatprep.subr.mxu0 0.0
    %1138 = vmatpush1.msra.mxu0 %v1103
    %1139 = vmatprep.subr.mxu0 0.0
    %1140 = vmatpush1.msra.mxu0 0.0
    %1141 = vmatprep.subr.mxu0 0.0
    %1142 = vmatpush1.msra.mxu0 0.0
    %1143 = vmatprep.subr.mxu0 0.0
    %1144 = vmatpush1.msra.mxu0 0.0
    %1145 = vmatprep.subr.mxu0 0.0
    %1146 = vmatpush1.msra.mxu0 0.0
    %1147 = vmatprep.subr.mxu0 0.0
    %1148 = vmatpush1.msra.mxu0 0.0
    %1149 = vmatprep.subr.mxu0 0.0
    %1150 = vmatpush1.msra.mxu0 0.0
    %1151 = vmatprep.subr.mxu0 0.0
    %1152 = vmatpush1.msra.mxu0 0.0
    %1153 = vmatprep.subr.mxu0 0.0
    %1154 = vmatpush1.msra.mxu0 0.0
    %1155 = vmatprep.subr.mxu0 0.0
    %1156 = vmatpush1.msra.mxu0 0.0
    %1157 = vmatprep.subr.mxu0 0.0
    %1158 = vmatpush1.msra.mxu0 0.0
    %1159 = vmatprep.subr.mxu0 0.0
    %1160 = vmatpush1.msra.mxu0 0.0
    %1161 = vmatprep.subr.mxu0 0.0
    %1162 = vmatpush1.msra.mxu0 0.0
    %1163 = vmatprep.subr.mxu0 0.0
    %1164 = vmatpush1.msra.mxu0 0.0
    %1165 = vmatprep.subr.mxu0 0.0
    %1166 = vmatpush1.msra.mxu0 0.0
    %1167 = vmatprep.subr.mxu0 0.0
    %1168 = vmatpush1.msra.mxu0 0.0
    %1169 = vmatprep.subr.mxu0 0.0
    %1170 = vmatpush1.msra.mxu0 0.0
    %1171 = vmatprep.subr.mxu0 0.0
    %1172 = vmatpush1.msra.mxu0 0.0
    %1173 = vmatprep.subr.mxu0 0.0
    %1174 = vmatpush1.msra.mxu0 0.0
    %1175 = vmatprep.subr.mxu0 0.0
    %1176 = vmatpush1.msra.mxu0 0.0
    %1177 = vmatprep.subr.mxu0 0.0
    %1178 = vmatpush1.msra.mxu0 0.0
    %1179 = vmatprep.subr.mxu0 0.0
    %1180 = vmatpush1.msra.mxu0 0.0
    %1181 = vmatprep.subr.mxu0 0.0
    %1182 = vmatpush1.msra.mxu0 0.0
    %1183 = vmatprep.subr.mxu0 0.0
    %1184 = vmatpush1.msra.mxu0 0.0
    %1185 = vmatprep.subr.mxu0 0.0
    %1186 = vmatpush1.msra.mxu0 0.0
    %1187 = vmatprep.mubr.f32.mxu0 0.0
    %1188 = vmatmul.mubr.f32.gmra.mrb[0].mxu0 %v1112
    %v1189 = vpop.f32.mrb[0].mxu0
    %v1190 = vadd.f32 %v1109, %v1189
    %v1191 = vpop.f32.mrb[0].mxu0
    %1192 = vmatprep.mubr.f32.mxu0 0.0
    %1193 = vmatmul.mubr.f32.gmra.mrb[0].mxu0 %v1115
    %v1194 = vpop.f32.mrb[0].mxu0
    %v1195 = vadd.f32 %v1109, %v1194
    %v1196 = vpop.f32.mrb[0].mxu0
    %1197 = vmatprep.mubr.f32.mxu0 0.0
    %1198 = vmatmul.mubr.f32.gmra.mrb[0].mxu0 %v1118
    %v1199 = vpop.f32.mrb[0].mxu0
    %v1200 = vadd.f32 %v1109, %v1199
    %v1201 = vpop.f32.mrb[0].mxu0
    %1202 = vmatprep.mubr.f32.mxu0 0.0
    %1203 = vmatmul.mubr.f32.gmra.mrb[0].mxu0 %v1121
    %v1204 = vpop.f32.mrb[0].mxu0
    %v1205 = vadd.f32 %v1109, %v1204
    %v1206 = vpop.f32.mrb[0].mxu0
    %1207 = vdwg.mxu0
    %v1208 = vadd.f32 %v74, %v1190
    %v1209 = vadd.f32 %v75, %v1195
    %v1210 = vadd.f32 %v76, %v1200
    %v1211 = vadd.f32 %v77, %v1205
    %v1212 = vld [vmem:[%s11] sm:$0x1]
    %v1213 = vld [vmem:[%s12] sm:$0x1]
    %v1214 = vsel %vm112, %v1208, 0.0
    %1215 = vadd.xlane.f32.xlu0 %v1214
    %v1216 = vpop.xlane.xlu0 %1215
    %v1217 = vsel %vm112, %v1209, 0.0
    %1218 = vadd.xlane.f32.xlu0 %v1217
    %v1219 = vpop.xlane.xlu0 %1218
    %v1220 = vsel %vm112, %v1210, 0.0
    %1221 = vadd.xlane.f32.xlu0 %v1220
    %v1222 = vpop.xlane.xlu0 %1221
    %v1223 = vsel %vm112, %v1211, 0.0
    %1224 = vadd.xlane.f32.xlu0 %v1223
    %v1225 = vpop.xlane.xlu0 %1224
    %v1226 = vmul.f32 %v1216, %v125
    %v1227 = vmul.f32 %v1219, %v125
    %v1228 = vmul.f32 %v1222, %v125
    %v1229 = vmul.f32 %v1225, %v125
    %v1230 = vsub.f32 %v1208, %v1226
    %v1231 = vsub.f32 %v1209, %v1227
    %v1232 = vsub.f32 %v1210, %v1228
    %v1233 = vsub.f32 %v1211, %v1229
    %v1234 = vmul.f32 %v1230, %v1230
    %v1235 = vmul.f32 %v1231, %v1231
    %v1236 = vmul.f32 %v1232, %v1232
    %v1237 = vmul.f32 %v1233, %v1233
    %v1238 = vsel %vm112, %v1234, 0.0
    %1239 = vadd.xlane.f32.xlu0 %v1238
    %v1240 = vpop.xlane.xlu0 %1239
    %v1241 = vsel %vm112, %v1235, 0.0
    %1242 = vadd.xlane.f32.xlu0 %v1241
    %v1243 = vpop.xlane.xlu0 %1242
    %v1244 = vsel %vm112, %v1236, 0.0
    %1245 = vadd.xlane.f32.xlu0 %v1244
    %v1246 = vpop.xlane.xlu0 %1245
    %v1247 = vsel %vm112, %v1237, 0.0
    %1248 = vadd.xlane.f32.xlu0 %v1247
    %v1249 = vpop.xlane.xlu0 %1248
    %v1250 = vmul.f32 %v1240, %v125
    %v1251 = vmul.f32 %v1243, %v125
    %v1252 = vmul.f32 %v1246, %v125
    %v1253 = vmul.f32 %v1249, %v125
    %v1254 = vadd.f32 %v1250, 1e-05
    %v1255 = vadd.f32 %v1251, 1e-05
    %v1256 = vadd.f32 %v1252, 1e-05
    %v1257 = vadd.f32 %v1253, 1e-05
    %v1258 = vrsqrt.pop %v1254
    %v1259 = vrsqrt.pop %v1255
    %v1260 = vrsqrt.pop %v1256
    %v1261 = vrsqrt.pop %v1257
    %v1262 = vmul.f32 %v1230, %v1258
    %v1263 = vmul.f32 %v1231, %v1259
    %v1264 = vmul.f32 %v1232, %v1260
    %v1265 = vmul.f32 %v1233, %v1261
    %v1267 = vlaneseq
    %v1268 = vshrl.u32 %v1267, 7
    %v1269 = vsub.s32 0, %v1268
    %v1270 = vrot.slane %v1212, %v1269
    %v1272 = vmul.f32 %v1262, %v1270
    %v1273 = vmul.f32 %v1263, %v1270
    %v1274 = vmul.f32 %v1264, %v1270
    %v1275 = vmul.f32 %v1265, %v1270
    %v1277 = vlaneseq
    %v1278 = vshrl.u32 %v1277, 7
    %v1279 = vsub.s32 0, %v1278
    %v1280 = vrot.slane %v1213, %v1279
    %v1282 = vadd.f32 %v1272, %v1280
    %v1283 = vadd.f32 %v1273, %v1280
    %v1284 = vadd.f32 %v1274, %v1280
    %v1285 = vadd.f32 %v1275, %v1280
    %v1286 = vld [vmem:[%s13] sm:$0xff]
    %v1287 = vld [vmem:[%s13 + $0x8] sm:$0xff]
    %v1288 = vld [vmem:[%s13 + $0x10] sm:$0xff]
    %v1289 = vld [vmem:[%s13 + $0x18] sm:$0xff]
    %v1290 = vld [vmem:[%s13 + $0x20] sm:$0xff]
    %v1291 = vld [vmem:[%s13 + $0x28] sm:$0xff]
    %v1292 = vld [vmem:[%s13 + $0x30] sm:$0xff]
    %v1293 = vld [vmem:[%s13 + $0x38] sm:$0xff]
    %v1294 = vld [vmem:[%s13 + $0x40] sm:$0xff]
    %v1295 = vld [vmem:[%s13 + $0x48] sm:$0xff]
    %v1296 = vld [vmem:[%s13 + $0x50] sm:$0xff]
    %v1297 = vld [vmem:[%s13 + $0x58] sm:$0xff]
    %v1298 = vld [vmem:[%s13 + $0x60] sm:$0xff]
    %v1299 = vld [vmem:[%s13 + $0x68] sm:$0xff]
    %v1300 = vld [vmem:[%s13 + $0x70] sm:$0xff]
    %v1301 = vld [vmem:[%s13 + $0x78] sm:$0xff]
    %v1302 = vld [vmem:[%s14] sm:$0x3]
    %v1304 = vlaneseq
    %v1305 = vshrl.u32 %v1304, 7
    %v1306 = vsub.s32 0, %v1305
    %v1307 = vrot.slane %v1302, %v1306
    %v1308 = vlaneseq
    %v1309 = vshrl.u32 %v1308, 7
    %v1310 = vsub.s32 1, %v1309
    %v1311 = vrot.slane %v1302, %v1310
    %v1315 = vsel %vm112, %v1282, 0
    %v1318 = vsel %vm112, %v1283, 0
    %v1321 = vsel %vm112, %v1284, 0
    %v1324 = vsel %vm112, %v1285, 0
    %1326 = vmatprep.subr.mxu0 %v1287
    %1327 = vmatpush1.msra.mxu0 %v1286
    %1328 = vmatprep.subr.mxu0 %v1289
    %1329 = vmatpush1.msra.mxu0 %v1288
    %1330 = vmatprep.subr.mxu0 %v1291
    %1331 = vmatpush1.msra.mxu0 %v1290
    %1332 = vmatprep.subr.mxu0 %v1293
    %1333 = vmatpush1.msra.mxu0 %v1292
    %1334 = vmatprep.subr.mxu0 %v1295
    %1335 = vmatpush1.msra.mxu0 %v1294
    %1336 = vmatprep.subr.mxu0 %v1297
    %1337 = vmatpush1.msra.mxu0 %v1296
    %1338 = vmatprep.subr.mxu0 %v1299
    %1339 = vmatpush1.msra.mxu0 %v1298
    %1340 = vmatprep.subr.mxu0 %v1301
    %1341 = vmatpush1.msra.mxu0 %v1300
    %1342 = vmatprep.subr.mxu0 0.0
    %1343 = vmatpush1.msra.mxu0 0.0
    %1344 = vmatprep.subr.mxu0 0.0
    %1345 = vmatpush1.msra.mxu0 0.0
    %1346 = vmatprep.subr.mxu0 0.0
    %1347 = vmatpush1.msra.mxu0 0.0
    %1348 = vmatprep.subr.mxu0 0.0
    %1349 = vmatpush1.msra.mxu0 0.0
    %1350 = vmatprep.subr.mxu0 0.0
    %1351 = vmatpush1.msra.mxu0 0.0
    %1352 = vmatprep.subr.mxu0 0.0
    %1353 = vmatpush1.msra.mxu0 0.0
    %1354 = vmatprep.subr.mxu0 0.0
    %1355 = vmatpush1.msra.mxu0 0.0
    %1356 = vmatprep.subr.mxu0 0.0
    %1357 = vmatpush1.msra.mxu0 0.0
    %1358 = vmatprep.subr.mxu0 0.0
    %1359 = vmatpush1.msra.mxu0 0.0
    %1360 = vmatprep.subr.mxu0 0.0
    %1361 = vmatpush1.msra.mxu0 0.0
    %1362 = vmatprep.subr.mxu0 0.0
    %1363 = vmatpush1.msra.mxu0 0.0
    %1364 = vmatprep.subr.mxu0 0.0
    %1365 = vmatpush1.msra.mxu0 0.0
    %1366 = vmatprep.subr.mxu0 0.0
    %1367 = vmatpush1.msra.mxu0 0.0
    %1368 = vmatprep.subr.mxu0 0.0
    %1369 = vmatpush1.msra.mxu0 0.0
    %1370 = vmatprep.subr.mxu0 0.0
    %1371 = vmatpush1.msra.mxu0 0.0
    %1372 = vmatprep.subr.mxu0 0.0
    %1373 = vmatpush1.msra.mxu0 0.0
    %1374 = vmatprep.subr.mxu0 0.0
    %1375 = vmatpush1.msra.mxu0 0.0
    %1376 = vmatprep.subr.mxu0 0.0
    %1377 = vmatpush1.msra.mxu0 0.0
    %1378 = vmatprep.subr.mxu0 0.0
    %1379 = vmatpush1.msra.mxu0 0.0
    %1380 = vmatprep.subr.mxu0 0.0
    %1381 = vmatpush1.msra.mxu0 0.0
    %1382 = vmatprep.subr.mxu0 0.0
    %1383 = vmatpush1.msra.mxu0 0.0
    %1384 = vmatprep.subr.mxu0 0.0
    %1385 = vmatpush1.msra.mxu0 0.0
    %1386 = vmatprep.subr.mxu0 0.0
    %1387 = vmatpush1.msra.mxu0 0.0
    %1388 = vmatprep.subr.mxu0 0.0
    %1389 = vmatpush1.msra.mxu0 0.0
    %1390 = vmatprep.mubr.f32.mxu0 0.0
    %1391 = vmatmul.mubr.f32.gmra.mrb[0].mxu0 %v1315
    %v1392 = vpop.f32.mrb[0].mxu0
    %v1393 = vadd.f32 %v1307, %v1392
    %v1394 = vpop.f32.mrb[0].mxu0
    %v1395 = vadd.f32 %v1311, %v1394
    %1396 = vmatprep.mubr.f32.mxu0 0.0
    %1397 = vmatmul.mubr.f32.gmra.mrb[0].mxu0 %v1318
    %v1398 = vpop.f32.mrb[0].mxu0
    %v1399 = vadd.f32 %v1307, %v1398
    %v1400 = vpop.f32.mrb[0].mxu0
    %v1401 = vadd.f32 %v1311, %v1400
    %1402 = vmatprep.mubr.f32.mxu0 0.0
    %1403 = vmatmul.mubr.f32.gmra.mrb[0].mxu0 %v1321
    %v1404 = vpop.f32.mrb[0].mxu0
    %v1405 = vadd.f32 %v1307, %v1404
    %v1406 = vpop.f32.mrb[0].mxu0
    %v1407 = vadd.f32 %v1311, %v1406
    %1408 = vmatprep.mubr.f32.mxu0 0.0
    %1409 = vmatmul.mubr.f32.gmra.mrb[0].mxu0 %v1324
    %v1410 = vpop.f32.mrb[0].mxu0
    %v1411 = vadd.f32 %v1307, %v1410
    %v1412 = vpop.f32.mrb[0].mxu0
    %v1413 = vadd.f32 %v1311, %v1412
    %1414 = vdwg.mxu0
    %v1415 = vmax.f32 %v1393, 0.0
    %v1416 = vmax.f32 %v1395, 0.0
    %v1417 = vmax.f32 %v1399, 0.0
    %v1418 = vmax.f32 %v1401, 0.0
    %v1419 = vmax.f32 %v1405, 0.0
    %v1420 = vmax.f32 %v1407, 0.0
    %v1421 = vmax.f32 %v1411, 0.0
    %v1422 = vmax.f32 %v1413, 0.0
    %v1423 = vld [vmem:[%s15] sm:$0xff]
    %v1424 = vld [vmem:[%s15 + $0x8] sm:$0xff]
    %v1425 = vld [vmem:[%s15 + $0x10] sm:$0xff]
    %v1426 = vld [vmem:[%s15 + $0x18] sm:$0xff]
    %v1427 = vld [vmem:[%s15 + $0x20] sm:$0xff]
    %v1428 = vld [vmem:[%s15 + $0x28] sm:$0xff]
    %v1429 = vld [vmem:[%s15 + $0x30] sm:$0xff]
    %v1430 = vld [vmem:[%s15 + $0x38] sm:$0xff]
    %v1431 = vld [vmem:[%s15 + $0x40] sm:$0xff]
    %v1432 = vld [vmem:[%s15 + $0x48] sm:$0xff]
    %v1433 = vld [vmem:[%s15 + $0x50] sm:$0xff]
    %v1434 = vld [vmem:[%s15 + $0x58] sm:$0xff]
    %v1435 = vld [vmem:[%s15 + $0x60] sm:$0xff]
    %v1436 = vld [vmem:[%s15 + $0x68] sm:$0xff]
    %v1437 = vld [vmem:[%s15 + $0x70] sm:$0xff]
    %v1438 = vld [vmem:[%s15 + $0x78] sm:$0xff]
    %v1439 = vld [vmem:[%s15 + $0x80] sm:$0xff]
    %v1440 = vld [vmem:[%s15 + $0x88] sm:$0xff]
    %v1441 = vld [vmem:[%s15 + $0x90] sm:$0xff]
    %v1442 = vld [vmem:[%s15 + $0x98] sm:$0xff]
    %v1443 = vld [vmem:[%s15 + $0xa0] sm:$0xff]
    %v1444 = vld [vmem:[%s15 + $0xa8] sm:$0xff]
    %v1445 = vld [vmem:[%s15 + $0xb0] sm:$0xff]
    %v1446 = vld [vmem:[%s15 + $0xb8] sm:$0xff]
    %v1447 = vld [vmem:[%s15 + $0xc0] sm:$0xff]
    %v1448 = vld [vmem:[%s15 + $0xc8] sm:$0xff]
    %v1449 = vld [vmem:[%s15 + $0xd0] sm:$0xff]
    %v1450 = vld [vmem:[%s15 + $0xd8] sm:$0xff]
    %v1451 = vld [vmem:[%s15 + $0xe0] sm:$0xff]
    %v1452 = vld [vmem:[%s15 + $0xe8] sm:$0xff]
    %v1453 = vld [vmem:[%s15 + $0xf0] sm:$0xff]
    %v1454 = vld [vmem:[%s15 + $0xf8] sm:$0xff]
    %v1455 = vld [vmem:[%s16] sm:$0x1]
    %v1457 = vlaneseq
    %v1458 = vshrl.u32 %v1457, 7
    %v1459 = vsub.s32 0, %v1458
    %v1460 = vrot.slane %v1455, %v1459
    %1462 = vmatprep.subr.mxu0 0.0
    %1463 = vmatpush1.msra.mxu0 %v1423
    %1464 = vmatprep.subr.mxu0 0.0
    %1465 = vmatpush1.msra.mxu0 %v1424
    %1466 = vmatprep.subr.mxu0 0.0
    %1467 = vmatpush1.msra.mxu0 %v1425
    %1468 = vmatprep.subr.mxu0 0.0
    %1469 = vmatpush1.msra.mxu0 %v1426
    %1470 = vmatprep.subr.mxu0 0.0
    %1471 = vmatpush1.msra.mxu0 %v1427
    %1472 = vmatprep.subr.mxu0 0.0
    %1473 = vmatpush1.msra.mxu0 %v1428
    %1474 = vmatprep.subr.mxu0 0.0
    %1475 = vmatpush1.msra.mxu0 %v1429
    %1476 = vmatprep.subr.mxu0 0.0
    %1477 = vmatpush1.msra.mxu0 %v1430
    %1478 = vmatprep.subr.mxu0 0.0
    %1479 = vmatpush1.msra.mxu0 %v1431
    %1480 = vmatprep.subr.mxu0 0.0
    %1481 = vmatpush1.msra.mxu0 %v1432
    %1482 = vmatprep.subr.mxu0 0.0
    %1483 = vmatpush1.msra.mxu0 %v1433
    %1484 = vmatprep.subr.mxu0 0.0
    %1485 = vmatpush1.msra.mxu0 %v1434
    %1486 = vmatprep.subr.mxu0 0.0
    %1487 = vmatpush1.msra.mxu0 %v1435
    %1488 = vmatprep.subr.mxu0 0.0
    %1489 = vmatpush1.msra.mxu0 %v1436
    %1490 = vmatprep.subr.mxu0 0.0
    %1491 = vmatpush1.msra.mxu0 %v1437
    %1492 = vmatprep.subr.mxu0 0.0
    %1493 = vmatpush1.msra.mxu0 %v1438
    %1494 = vmatprep.subr.mxu0 0.0
    %1495 = vmatpush1.msra.mxu0 %v1439
    %1496 = vmatprep.subr.mxu0 0.0
    %1497 = vmatpush1.msra.mxu0 %v1440
    %1498 = vmatprep.subr.mxu0 0.0
    %1499 = vmatpush1.msra.mxu0 %v1441
    %1500 = vmatprep.subr.mxu0 0.0
    %1501 = vmatpush1.msra.mxu0 %v1442
    %1502 = vmatprep.subr.mxu0 0.0
    %1503 = vmatpush1.msra.mxu0 %v1443
    %1504 = vmatprep.subr.mxu0 0.0
    %1505 = vmatpush1.msra.mxu0 %v1444
    %1506 = vmatprep.subr.mxu0 0.0
    %1507 = vmatpush1.msra.mxu0 %v1445
    %1508 = vmatprep.subr.mxu0 0.0
    %1509 = vmatpush1.msra.mxu0 %v1446
    %1510 = vmatprep.subr.mxu0 0.0
    %1511 = vmatpush1.msra.mxu0 %v1447
    %1512 = vmatprep.subr.mxu0 0.0
    %1513 = vmatpush1.msra.mxu0 %v1448
    %1514 = vmatprep.subr.mxu0 0.0
    %1515 = vmatpush1.msra.mxu0 %v1449
    %1516 = vmatprep.subr.mxu0 0.0
    %1517 = vmatpush1.msra.mxu0 %v1450
    %1518 = vmatprep.subr.mxu0 0.0
    %1519 = vmatpush1.msra.mxu0 %v1451
    %1520 = vmatprep.subr.mxu0 0.0
    %1521 = vmatpush1.msra.mxu0 %v1452
    %1522 = vmatprep.subr.mxu0 0.0
    %1523 = vmatpush1.msra.mxu0 %v1453
    %1524 = vmatprep.subr.mxu0 0.0
    %1525 = vmatpush1.msra.mxu0 %v1454
    %1526 = vmatprep.mubr.f32.mxu0 %v1416
    %1527 = vmatmul.mubr.f32.gmra.mrb[0].mxu0 %v1415
    %v1528 = vpop.f32.mrb[0].mxu0
    %v1529 = vadd.f32 %v1460, %v1528
    %v1530 = vpop.f32.mrb[0].mxu0
    %1531 = vmatprep.mubr.f32.mxu0 %v1418
    %1532 = vmatmul.mubr.f32.gmra.mrb[0].mxu0 %v1417
    %v1533 = vpop.f32.mrb[0].mxu0
    %v1534 = vadd.f32 %v1460, %v1533
    %v1535 = vpop.f32.mrb[0].mxu0
    %1536 = vmatprep.mubr.f32.mxu0 %v1420
    %1537 = vmatmul.mubr.f32.gmra.mrb[0].mxu0 %v1419
    %v1538 = vpop.f32.mrb[0].mxu0
    %v1539 = vadd.f32 %v1460, %v1538
    %v1540 = vpop.f32.mrb[0].mxu0
    %1541 = vmatprep.mubr.f32.mxu0 %v1422
    %1542 = vmatmul.mubr.f32.gmra.mrb[0].mxu0 %v1421
    %v1543 = vpop.f32.mrb[0].mxu0
    %v1544 = vadd.f32 %v1460, %v1543
    %v1545 = vpop.f32.mrb[0].mxu0
    %1546 = vdwg.mxu0
    %v1547 = vadd.f32 %v1208, %v1529
    %v1548 = vadd.f32 %v1209, %v1534
    %v1549 = vadd.f32 %v1210, %v1539
    %v1550 = vadd.f32 %v1211, %v1544
    %s1551 = scalar_lea.vmem %s9, 1
    %v1552 = vld [vmem:[%s1551] sm:$0x1]
    %s1553 = scalar_lea.vmem %s10, 1
    %v1554 = vld [vmem:[%s1553] sm:$0x1]
    %v1555 = vsel %vm112, %v1547, 0.0
    %1556 = vadd.xlane.f32.xlu0 %v1555
    %v1557 = vpop.xlane.xlu0 %1556
    %v1558 = vsel %vm112, %v1548, 0.0
    %1559 = vadd.xlane.f32.xlu0 %v1558
    %v1560 = vpop.xlane.xlu0 %1559
    %v1561 = vsel %vm112, %v1549, 0.0
    %1562 = vadd.xlane.f32.xlu0 %v1561
    %v1563 = vpop.xlane.xlu0 %1562
    %v1564 = vsel %vm112, %v1550, 0.0
    %1565 = vadd.xlane.f32.xlu0 %v1564
    %v1566 = vpop.xlane.xlu0 %1565
    %v1567 = vmul.f32 %v1557, %v125
    %v1568 = vmul.f32 %v1560, %v125
    %v1569 = vmul.f32 %v1563, %v125
    %v1570 = vmul.f32 %v1566, %v125
    %v1571 = vsub.f32 %v1547, %v1567
    %v1572 = vsub.f32 %v1548, %v1568
    %v1573 = vsub.f32 %v1549, %v1569
    %v1574 = vsub.f32 %v1550, %v1570
    %v1575 = vmul.f32 %v1571, %v1571
    %v1576 = vmul.f32 %v1572, %v1572
    %v1577 = vmul.f32 %v1573, %v1573
    %v1578 = vmul.f32 %v1574, %v1574
    %v1579 = vsel %vm112, %v1575, 0.0
    %1580 = vadd.xlane.f32.xlu0 %v1579
    %v1581 = vpop.xlane.xlu0 %1580
    %v1582 = vsel %vm112, %v1576, 0.0
    %1583 = vadd.xlane.f32.xlu0 %v1582
    %v1584 = vpop.xlane.xlu0 %1583
    %v1585 = vsel %vm112, %v1577, 0.0
    %1586 = vadd.xlane.f32.xlu0 %v1585
    %v1587 = vpop.xlane.xlu0 %1586
    %v1588 = vsel %vm112, %v1578, 0.0
    %1589 = vadd.xlane.f32.xlu0 %v1588
    %v1590 = vpop.xlane.xlu0 %1589
    %v1591 = vmul.f32 %v1581, %v125
    %v1592 = vmul.f32 %v1584, %v125
    %v1593 = vmul.f32 %v1587, %v125
    %v1594 = vmul.f32 %v1590, %v125
    %v1595 = vadd.f32 %v1591, 1e-05
    %v1596 = vadd.f32 %v1592, 1e-05
    %v1597 = vadd.f32 %v1593, 1e-05
    %v1598 = vadd.f32 %v1594, 1e-05
    %v1599 = vrsqrt.pop %v1595
    %v1600 = vrsqrt.pop %v1596
    %v1601 = vrsqrt.pop %v1597
    %v1602 = vrsqrt.pop %v1598
    %v1603 = vmul.f32 %v1571, %v1599
    %v1604 = vmul.f32 %v1572, %v1600
    %v1605 = vmul.f32 %v1573, %v1601
    %v1606 = vmul.f32 %v1574, %v1602
    %v1608 = vlaneseq
    %v1609 = vshrl.u32 %v1608, 7
    %v1610 = vsub.s32 0, %v1609
    %v1611 = vrot.slane %v1552, %v1610
    %v1613 = vmul.f32 %v1603, %v1611
    %v1614 = vmul.f32 %v1604, %v1611
    %v1615 = vmul.f32 %v1605, %v1611
    %v1616 = vmul.f32 %v1606, %v1611
    %v1618 = vlaneseq
    %v1619 = vshrl.u32 %v1618, 7
    %v1620 = vsub.s32 0, %v1619
    %v1621 = vrot.slane %v1554, %v1620
    %v1623 = vadd.f32 %v1613, %v1621
    %v1624 = vadd.f32 %v1614, %v1621
    %v1625 = vadd.f32 %v1615, %v1621
    %v1626 = vadd.f32 %v1616, %v1621
    %s1627 = scalar_lea.vmem %s4, 64
    %v1628 = vld [vmem:[%s1627] sm:$0xff]
    %v1629 = vld [vmem:[%s1627 + $0x8] sm:$0xff]
    %v1630 = vld [vmem:[%s1627 + $0x10] sm:$0xff]
    %v1631 = vld [vmem:[%s1627 + $0x18] sm:$0xff]
    %v1632 = vld [vmem:[%s1627 + $0x20] sm:$0xff]
    %v1633 = vld [vmem:[%s1627 + $0x28] sm:$0xff]
    %v1634 = vld [vmem:[%s1627 + $0x30] sm:$0xff]
    %v1635 = vld [vmem:[%s1627 + $0x38] sm:$0xff]
    %v1637 = vsel %vm112, %v1623, 0
    %v1640 = vsel %vm112, %v1624, 0
    %v1643 = vsel %vm112, %v1625, 0
    %v1646 = vsel %vm112, %v1626, 0
    %1648 = vmatprep.subr.mxu0 0.0
    %1649 = vmatpush1.msra.mxu0 %v1628
    %1650 = vmatprep.subr.mxu0 0.0
    %1651 = vmatpush1.msra.mxu0 %v1629
    %1652 = vmatprep.subr.mxu0 0.0
    %1653 = vmatpush1.msra.mxu0 %v1630
    %1654 = vmatprep.subr.mxu0 0.0
    %1655 = vmatpush1.msra.mxu0 %v1631
    %1656 = vmatprep.subr.mxu0 0.0
    %1657 = vmatpush1.msra.mxu0 %v1632
    %1658 = vmatprep.subr.mxu0 0.0
    %1659 = vmatpush1.msra.mxu0 %v1633
    %1660 = vmatprep.subr.mxu0 0.0
    %1661 = vmatpush1.msra.mxu0 %v1634
    %1662 = vmatprep.subr.mxu0 0.0
    %1663 = vmatpush1.msra.mxu0 %v1635
    %1664 = vmatprep.subr.mxu0 0.0
    %1665 = vmatpush1.msra.mxu0 0.0
    %1666 = vmatprep.subr.mxu0 0.0
    %1667 = vmatpush1.msra.mxu0 0.0
    %1668 = vmatprep.subr.mxu0 0.0
    %1669 = vmatpush1.msra.mxu0 0.0
    %1670 = vmatprep.subr.mxu0 0.0
    %1671 = vmatpush1.msra.mxu0 0.0
    %1672 = vmatprep.subr.mxu0 0.0
    %1673 = vmatpush1.msra.mxu0 0.0
    %1674 = vmatprep.subr.mxu0 0.0
    %1675 = vmatpush1.msra.mxu0 0.0
    %1676 = vmatprep.subr.mxu0 0.0
    %1677 = vmatpush1.msra.mxu0 0.0
    %1678 = vmatprep.subr.mxu0 0.0
    %1679 = vmatpush1.msra.mxu0 0.0
    %1680 = vmatprep.subr.mxu0 0.0
    %1681 = vmatpush1.msra.mxu0 0.0
    %1682 = vmatprep.subr.mxu0 0.0
    %1683 = vmatpush1.msra.mxu0 0.0
    %1684 = vmatprep.subr.mxu0 0.0
    %1685 = vmatpush1.msra.mxu0 0.0
    %1686 = vmatprep.subr.mxu0 0.0
    %1687 = vmatpush1.msra.mxu0 0.0
    %1688 = vmatprep.subr.mxu0 0.0
    %1689 = vmatpush1.msra.mxu0 0.0
    %1690 = vmatprep.subr.mxu0 0.0
    %1691 = vmatpush1.msra.mxu0 0.0
    %1692 = vmatprep.subr.mxu0 0.0
    %1693 = vmatpush1.msra.mxu0 0.0
    %1694 = vmatprep.subr.mxu0 0.0
    %1695 = vmatpush1.msra.mxu0 0.0
    %1696 = vmatprep.subr.mxu0 0.0
    %1697 = vmatpush1.msra.mxu0 0.0
    %1698 = vmatprep.subr.mxu0 0.0
    %1699 = vmatpush1.msra.mxu0 0.0
    %1700 = vmatprep.subr.mxu0 0.0
    %1701 = vmatpush1.msra.mxu0 0.0
    %1702 = vmatprep.subr.mxu0 0.0
    %1703 = vmatpush1.msra.mxu0 0.0
    %1704 = vmatprep.subr.mxu0 0.0
    %1705 = vmatpush1.msra.mxu0 0.0
    %1706 = vmatprep.subr.mxu0 0.0
    %1707 = vmatpush1.msra.mxu0 0.0
    %1708 = vmatprep.subr.mxu0 0.0
    %1709 = vmatpush1.msra.mxu0 0.0
    %1710 = vmatprep.subr.mxu0 0.0
    %1711 = vmatpush1.msra.mxu0 0.0
    %1712 = vmatprep.mubr.f32.mxu0 0.0
    %1713 = vmatmul.mubr.f32.gmra.mrb[0].mxu0 %v1637
    %v1714 = vpop.f32.mrb[0].mxu0
    %v1715 = vadd.f32 0.0, %v1714
    %v1716 = vpop.f32.mrb[0].mxu0
    %1717 = vmatprep.mubr.f32.mxu0 0.0
    %1718 = vmatmul.mubr.f32.gmra.mrb[0].mxu0 %v1640
    %v1719 = vpop.f32.mrb[0].mxu0
    %v1720 = vadd.f32 0.0, %v1719
    %v1721 = vpop.f32.mrb[0].mxu0
    %1722 = vmatprep.mubr.f32.mxu0 0.0
    %1723 = vmatmul.mubr.f32.gmra.mrb[0].mxu0 %v1643
    %v1724 = vpop.f32.mrb[0].mxu0
    %v1725 = vadd.f32 0.0, %v1724
    %v1726 = vpop.f32.mrb[0].mxu0
    %1727 = vmatprep.mubr.f32.mxu0 0.0
    %1728 = vmatmul.mubr.f32.gmra.mrb[0].mxu0 %v1646
    %v1729 = vpop.f32.mrb[0].mxu0
    %v1730 = vadd.f32 0.0, %v1729
    %v1731 = vpop.f32.mrb[0].mxu0
    %1732 = vdwg.mxu0
    %s1733 = scalar_lea.vmem %s5, 64
    %v1734 = vld [vmem:[%s1733] sm:$0xff]
    %v1735 = vld [vmem:[%s1733 + $0x8] sm:$0xff]
    %v1736 = vld [vmem:[%s1733 + $0x10] sm:$0xff]
    %v1737 = vld [vmem:[%s1733 + $0x18] sm:$0xff]
    %v1738 = vld [vmem:[%s1733 + $0x20] sm:$0xff]
    %v1739 = vld [vmem:[%s1733 + $0x28] sm:$0xff]
    %v1740 = vld [vmem:[%s1733 + $0x30] sm:$0xff]
    %v1741 = vld [vmem:[%s1733 + $0x38] sm:$0xff]
    %1742 = vmatprep.subr.mxu0 0.0
    %1743 = vmatpush1.msra.mxu0 %v1734
    %1744 = vmatprep.subr.mxu0 0.0
    %1745 = vmatpush1.msra.mxu0 %v1735
    %1746 = vmatprep.subr.mxu0 0.0
    %1747 = vmatpush1.msra.mxu0 %v1736
    %1748 = vmatprep.subr.mxu0 0.0
    %1749 = vmatpush1.msra.mxu0 %v1737
    %1750 = vmatprep.subr.mxu0 0.0
    %1751 = vmatpush1.msra.mxu0 %v1738
    %1752 = vmatprep.subr.mxu0 0.0
    %1753 = vmatpush1.msra.mxu0 %v1739
    %1754 = vmatprep.subr.mxu0 0.0
    %1755 = vmatpush1.msra.mxu0 %v1740
    %1756 = vmatprep.subr.mxu0 0.0
    %1757 = vmatpush1.msra.mxu0 %v1741
    %1758 = vmatprep.subr.mxu0 0.0
    %1759 = vmatpush1.msra.mxu0 0.0
    %1760 = vmatprep.subr.mxu0 0.0
    %1761 = vmatpush1.msra.mxu0 0.0
    %1762 = vmatprep.subr.mxu0 0.0
    %1763 = vmatpush1.msra.mxu0 0.0
    %1764 = vmatprep.subr.mxu0 0.0
    %1765 = vmatpush1.msra.mxu0 0.0
    %1766 = vmatprep.subr.mxu0 0.0
    %1767 = vmatpush1.msra.mxu0 0.0
    %1768 = vmatprep.subr.mxu0 0.0
    %1769 = vmatpush1.msra.mxu0 0.0
    %1770 = vmatprep.subr.mxu0 0.0
    %1771 = vmatpush1.msra.mxu0 0.0
    %1772 = vmatprep.subr.mxu0 0.0
    %1773 = vmatpush1.msra.mxu0 0.0
    %1774 = vmatprep.subr.mxu0 0.0
    %1775 = vmatpush1.msra.mxu0 0.0
    %1776 = vmatprep.subr.mxu0 0.0
    %1777 = vmatpush1.msra.mxu0 0.0
    %1778 = vmatprep.subr.mxu0 0.0
    %1779 = vmatpush1.msra.mxu0 0.0
    %1780 = vmatprep.subr.mxu0 0.0
    %1781 = vmatpush1.msra.mxu0 0.0
    %1782 = vmatprep.subr.mxu0 0.0
    %1783 = vmatpush1.msra.mxu0 0.0
    %1784 = vmatprep.subr.mxu0 0.0
    %1785 = vmatpush1.msra.mxu0 0.0
    %1786 = vmatprep.subr.mxu0 0.0
    %1787 = vmatpush1.msra.mxu0 0.0
    %1788 = vmatprep.subr.mxu0 0.0
    %1789 = vmatpush1.msra.mxu0 0.0
    %1790 = vmatprep.subr.mxu0 0.0
    %1791 = vmatpush1.msra.mxu0 0.0
    %1792 = vmatprep.subr.mxu0 0.0
    %1793 = vmatpush1.msra.mxu0 0.0
    %1794 = vmatprep.subr.mxu0 0.0
    %1795 = vmatpush1.msra.mxu0 0.0
    %1796 = vmatprep.subr.mxu0 0.0
    %1797 = vmatpush1.msra.mxu0 0.0
    %1798 = vmatprep.subr.mxu0 0.0
    %1799 = vmatpush1.msra.mxu0 0.0
    %1800 = vmatprep.subr.mxu0 0.0
    %1801 = vmatpush1.msra.mxu0 0.0
    %1802 = vmatprep.subr.mxu0 0.0
    %1803 = vmatpush1.msra.mxu0 0.0
    %1804 = vmatprep.subr.mxu0 0.0
    %1805 = vmatpush1.msra.mxu0 0.0
    %1806 = vmatprep.mubr.f32.mxu0 0.0
    %1807 = vmatmul.mubr.f32.gmra.mrb[0].mxu0 %v1637
    %v1808 = vpop.f32.mrb[0].mxu0
    %v1809 = vadd.f32 0.0, %v1808
    %v1810 = vpop.f32.mrb[0].mxu0
    %1811 = vmatprep.mubr.f32.mxu0 0.0
    %1812 = vmatmul.mubr.f32.gmra.mrb[0].mxu0 %v1640
    %v1813 = vpop.f32.mrb[0].mxu0
    %v1814 = vadd.f32 0.0, %v1813
    %v1815 = vpop.f32.mrb[0].mxu0
    %1816 = vmatprep.mubr.f32.mxu0 0.0
    %1817 = vmatmul.mubr.f32.gmra.mrb[0].mxu0 %v1643
    %v1818 = vpop.f32.mrb[0].mxu0
    %v1819 = vadd.f32 0.0, %v1818
    %v1820 = vpop.f32.mrb[0].mxu0
    %1821 = vmatprep.mubr.f32.mxu0 0.0
    %1822 = vmatmul.mubr.f32.gmra.mrb[0].mxu0 %v1646
    %v1823 = vpop.f32.mrb[0].mxu0
    %v1824 = vadd.f32 0.0, %v1823
    %v1825 = vpop.f32.mrb[0].mxu0
    %1826 = vdwg.mxu0
    %s1827 = scalar_lea.vmem %s6, 64
    %v1828 = vld [vmem:[%s1827] sm:$0xff]
    %v1829 = vld [vmem:[%s1827 + $0x8] sm:$0xff]
    %v1830 = vld [vmem:[%s1827 + $0x10] sm:$0xff]
    %v1831 = vld [vmem:[%s1827 + $0x18] sm:$0xff]
    %v1832 = vld [vmem:[%s1827 + $0x20] sm:$0xff]
    %v1833 = vld [vmem:[%s1827 + $0x28] sm:$0xff]
    %v1834 = vld [vmem:[%s1827 + $0x30] sm:$0xff]
    %v1835 = vld [vmem:[%s1827 + $0x38] sm:$0xff]
    %1836 = vmatprep.subr.mxu0 0.0
    %1837 = vmatpush1.msra.mxu0 %v1828
    %1838 = vmatprep.subr.mxu0 0.0
    %1839 = vmatpush1.msra.mxu0 %v1829
    %1840 = vmatprep.subr.mxu0 0.0
    %1841 = vmatpush1.msra.mxu0 %v1830
    %1842 = vmatprep.subr.mxu0 0.0
    %1843 = vmatpush1.msra.mxu0 %v1831
    %1844 = vmatprep.subr.mxu0 0.0
    %1845 = vmatpush1.msra.mxu0 %v1832
    %1846 = vmatprep.subr.mxu0 0.0
    %1847 = vmatpush1.msra.mxu0 %v1833
    %1848 = vmatprep.subr.mxu0 0.0
    %1849 = vmatpush1.msra.mxu0 %v1834
    %1850 = vmatprep.subr.mxu0 0.0
    %1851 = vmatpush1.msra.mxu0 %v1835
    %1852 = vmatprep.subr.mxu0 0.0
    %1853 = vmatpush1.msra.mxu0 0.0
    %1854 = vmatprep.subr.mxu0 0.0
    %1855 = vmatpush1.msra.mxu0 0.0
    %1856 = vmatprep.subr.mxu0 0.0
    %1857 = vmatpush1.msra.mxu0 0.0
    %1858 = vmatprep.subr.mxu0 0.0
    %1859 = vmatpush1.msra.mxu0 0.0
    %1860 = vmatprep.subr.mxu0 0.0
    %1861 = vmatpush1.msra.mxu0 0.0
    %1862 = vmatprep.subr.mxu0 0.0
    %1863 = vmatpush1.msra.mxu0 0.0
    %1864 = vmatprep.subr.mxu0 0.0
    %1865 = vmatpush1.msra.mxu0 0.0
    %1866 = vmatprep.subr.mxu0 0.0
    %1867 = vmatpush1.msra.mxu0 0.0
    %1868 = vmatprep.subr.mxu0 0.0
    %1869 = vmatpush1.msra.mxu0 0.0
    %1870 = vmatprep.subr.mxu0 0.0
    %1871 = vmatpush1.msra.mxu0 0.0
    %1872 = vmatprep.subr.mxu0 0.0
    %1873 = vmatpush1.msra.mxu0 0.0
    %1874 = vmatprep.subr.mxu0 0.0
    %1875 = vmatpush1.msra.mxu0 0.0
    %1876 = vmatprep.subr.mxu0 0.0
    %1877 = vmatpush1.msra.mxu0 0.0
    %1878 = vmatprep.subr.mxu0 0.0
    %1879 = vmatpush1.msra.mxu0 0.0
    %1880 = vmatprep.subr.mxu0 0.0
    %1881 = vmatpush1.msra.mxu0 0.0
    %1882 = vmatprep.subr.mxu0 0.0
    %1883 = vmatpush1.msra.mxu0 0.0
    %1884 = vmatprep.subr.mxu0 0.0
    %1885 = vmatpush1.msra.mxu0 0.0
    %1886 = vmatprep.subr.mxu0 0.0
    %1887 = vmatpush1.msra.mxu0 0.0
    %1888 = vmatprep.subr.mxu0 0.0
    %1889 = vmatpush1.msra.mxu0 0.0
    %1890 = vmatprep.subr.mxu0 0.0
    %1891 = vmatpush1.msra.mxu0 0.0
    %1892 = vmatprep.subr.mxu0 0.0
    %1893 = vmatpush1.msra.mxu0 0.0
    %1894 = vmatprep.subr.mxu0 0.0
    %1895 = vmatpush1.msra.mxu0 0.0
    %1896 = vmatprep.subr.mxu0 0.0
    %1897 = vmatpush1.msra.mxu0 0.0
    %1898 = vmatprep.subr.mxu0 0.0
    %1899 = vmatpush1.msra.mxu0 0.0
    %1900 = vmatprep.mubr.f32.mxu0 0.0
    %1901 = vmatmul.mubr.f32.gmra.mrb[0].mxu0 %v1637
    %v1902 = vpop.f32.mrb[0].mxu0
    %v1903 = vadd.f32 0.0, %v1902
    %v1904 = vpop.f32.mrb[0].mxu0
    %1905 = vmatprep.mubr.f32.mxu0 0.0
    %1906 = vmatmul.mubr.f32.gmra.mrb[0].mxu0 %v1640
    %v1907 = vpop.f32.mrb[0].mxu0
    %v1908 = vadd.f32 0.0, %v1907
    %v1909 = vpop.f32.mrb[0].mxu0
    %1910 = vmatprep.mubr.f32.mxu0 0.0
    %1911 = vmatmul.mubr.f32.gmra.mrb[0].mxu0 %v1643
    %v1912 = vpop.f32.mrb[0].mxu0
    %v1913 = vadd.f32 0.0, %v1912
    %v1914 = vpop.f32.mrb[0].mxu0
    %1915 = vmatprep.mubr.f32.mxu0 0.0
    %1916 = vmatmul.mubr.f32.gmra.mrb[0].mxu0 %v1646
    %v1917 = vpop.f32.mrb[0].mxu0
    %v1918 = vadd.f32 0.0, %v1917
    %v1919 = vpop.f32.mrb[0].mxu0
    %1920 = vdwg.mxu0
    %v1921 = vmul.f32 %v1715, %v94
    %v1922 = vmul.f32 %v1720, %v95
    %v1923 = vmul.f32 %v1725, %v96
    %v1924 = vmul.f32 %v1730, %v97
    %v1925 = vmul.f32 %v1715, %v98
    %v1926 = vmul.f32 %v1720, %v99
    %v1927 = vmul.f32 %v1725, %v100
    %v1928 = vmul.f32 %v1730, %v101
    %v1929 = vmul.f32 %v1715, %v102
    %v1930 = vmul.f32 %v1720, %v103
    %v1931 = vmul.f32 %v1725, %v104
    %v1932 = vmul.f32 %v1730, %v105
    %v1933 = vmul.f32 %v1715, %v106
    %v1934 = vmul.f32 %v1720, %v107
    %v1935 = vmul.f32 %v1725, %v108
    %v1936 = vmul.f32 %v1730, %v109
    %v1938 = vsel %vm112, %v1921, 0
    %v1941 = vsel %vm112, %v1922, 0
    %v1944 = vsel %vm112, %v1923, 0
    %v1947 = vsel %vm112, %v1924, 0
    %v1950 = vsel %vm112, %v1925, 0
    %v1953 = vsel %vm112, %v1926, 0
    %v1956 = vsel %vm112, %v1927, 0
    %v1959 = vsel %vm112, %v1928, 0
    %v1962 = vsel %vm112, %v1929, 0
    %v1965 = vsel %vm112, %v1930, 0
    %v1968 = vsel %vm112, %v1931, 0
    %v1971 = vsel %vm112, %v1932, 0
    %v1974 = vsel %vm112, %v1933, 0
    %v1977 = vsel %vm112, %v1934, 0
    %v1980 = vsel %vm112, %v1935, 0
    %v1983 = vsel %vm112, %v1936, 0
    %v1986 = vsel %vm112, %v1809, 0
    %v1989 = vsel %vm112, %v1814, 0
    %v1992 = vsel %vm112, %v1819, 0
    %v1995 = vsel %vm112, %v1824, 0
    %1997 = vmatprep.subr.mxu0 0.0
    %1998 = vmatpush1.xpose.msra.mxu0 %v1986
    %1999 = vmatprep.subr.mxu0 0.0
    %2000 = vmatpush1.xpose.msra.mxu0 %v1989
    %2001 = vmatprep.subr.mxu0 0.0
    %2002 = vmatpush1.xpose.msra.mxu0 %v1992
    %2003 = vmatprep.subr.mxu0 0.0
    %2004 = vmatpush1.xpose.msra.mxu0 %v1995
    %2005 = vmatprep.subr.mxu0 0.0
    %2006 = vmatpush1.xpose.msra.mxu0 0.0
    %2007 = vmatprep.subr.mxu0 0.0
    %2008 = vmatpush1.xpose.msra.mxu0 0.0
    %2009 = vmatprep.subr.mxu0 0.0
    %2010 = vmatpush1.xpose.msra.mxu0 0.0
    %2011 = vmatprep.subr.mxu0 0.0
    %2012 = vmatpush1.xpose.msra.mxu0 0.0
    %2013 = vmatprep.subr.mxu0 0.0
    %2014 = vmatpush1.xpose.msra.mxu0 0.0
    %2015 = vmatprep.subr.mxu0 0.0
    %2016 = vmatpush1.xpose.msra.mxu0 0.0
    %2017 = vmatprep.subr.mxu0 0.0
    %2018 = vmatpush1.xpose.msra.mxu0 0.0
    %2019 = vmatprep.subr.mxu0 0.0
    %2020 = vmatpush1.xpose.msra.mxu0 0.0
    %2021 = vmatprep.subr.mxu0 0.0
    %2022 = vmatpush1.xpose.msra.mxu0 0.0
    %2023 = vmatprep.subr.mxu0 0.0
    %2024 = vmatpush1.xpose.msra.mxu0 0.0
    %2025 = vmatprep.subr.mxu0 0.0
    %2026 = vmatpush1.xpose.msra.mxu0 0.0
    %2027 = vmatprep.subr.mxu0 0.0
    %2028 = vmatpush1.xpose.msra.mxu0 0.0
    %2029 = vmatprep.subr.mxu0 0.0
    %2030 = vmatpush1.xpose.msra.mxu0 0.0
    %2031 = vmatprep.subr.mxu0 0.0
    %2032 = vmatpush1.xpose.msra.mxu0 0.0
    %2033 = vmatprep.subr.mxu0 0.0
    %2034 = vmatpush1.xpose.msra.mxu0 0.0
    %2035 = vmatprep.subr.mxu0 0.0
    %2036 = vmatpush1.xpose.msra.mxu0 0.0
    %2037 = vmatprep.subr.mxu0 0.0
    %2038 = vmatpush1.xpose.msra.mxu0 0.0
    %2039 = vmatprep.subr.mxu0 0.0
    %2040 = vmatpush1.xpose.msra.mxu0 0.0
    %2041 = vmatprep.subr.mxu0 0.0
    %2042 = vmatpush1.xpose.msra.mxu0 0.0
    %2043 = vmatprep.subr.mxu0 0.0
    %2044 = vmatpush1.xpose.msra.mxu0 0.0
    %2045 = vmatprep.subr.mxu0 0.0
    %2046 = vmatpush1.xpose.msra.mxu0 0.0
    %2047 = vmatprep.subr.mxu0 0.0
    %2048 = vmatpush1.xpose.msra.mxu0 0.0
    %2049 = vmatprep.subr.mxu0 0.0
    %2050 = vmatpush1.xpose.msra.mxu0 0.0
    %2051 = vmatprep.subr.mxu0 0.0
    %2052 = vmatpush1.xpose.msra.mxu0 0.0
    %2053 = vmatprep.subr.mxu0 0.0
    %2054 = vmatpush1.xpose.msra.mxu0 0.0
    %2055 = vmatprep.subr.mxu0 0.0
    %2056 = vmatpush1.xpose.msra.mxu0 0.0
    %2057 = vmatprep.subr.mxu0 0.0
    %2058 = vmatpush1.xpose.msra.mxu0 0.0
    %2059 = vmatprep.subr.mxu0 0.0
    %2060 = vmatpush1.xpose.msra.mxu0 0.0
    %2061 = vmatprep.mubr.f32.mxu0 0.0
    %2062 = vmatmul.mubr.f32.gmra.mrb[0].mxu0 %v1938
    %v2063 = vpop.f32.mrb[0].mxu0
    %v2064 = vadd.f32 %v78, %v2063
    %v2065 = vpop.f32.mrb[0].mxu0
    %2066 = vmatprep.mubr.f32.mxu0 0.0
    %2067 = vmatmul.mubr.f32.gmra.mrb[0].mxu0 %v1941
    %v2068 = vpop.f32.mrb[0].mxu0
    %v2069 = vadd.f32 %v79, %v2068
    %v2070 = vpop.f32.mrb[0].mxu0
    %2071 = vmatprep.mubr.f32.mxu0 0.0
    %2072 = vmatmul.mubr.f32.gmra.mrb[0].mxu0 %v1944
    %v2073 = vpop.f32.mrb[0].mxu0
    %v2074 = vadd.f32 %v80, %v2073
    %v2075 = vpop.f32.mrb[0].mxu0
    %2076 = vmatprep.mubr.f32.mxu0 0.0
    %2077 = vmatmul.mubr.f32.gmra.mrb[0].mxu0 %v1947
    %v2078 = vpop.f32.mrb[0].mxu0
    %v2079 = vadd.f32 %v81, %v2078
    %v2080 = vpop.f32.mrb[0].mxu0
    %2081 = vmatprep.mubr.f32.mxu0 0.0
    %2082 = vmatmul.mubr.f32.gmra.mrb[0].mxu0 %v1950
    %v2083 = vpop.f32.mrb[0].mxu0
    %v2084 = vadd.f32 %v82, %v2083
    %v2085 = vpop.f32.mrb[0].mxu0
    %2086 = vmatprep.mubr.f32.mxu0 0.0
    %2087 = vmatmul.mubr.f32.gmra.mrb[0].mxu0 %v1953
    %v2088 = vpop.f32.mrb[0].mxu0
    %v2089 = vadd.f32 %v83, %v2088
    %v2090 = vpop.f32.mrb[0].mxu0
    %2091 = vmatprep.mubr.f32.mxu0 0.0
    %2092 = vmatmul.mubr.f32.gmra.mrb[0].mxu0 %v1956
    %v2093 = vpop.f32.mrb[0].mxu0
    %v2094 = vadd.f32 %v84, %v2093
    %v2095 = vpop.f32.mrb[0].mxu0
    %2096 = vmatprep.mubr.f32.mxu0 0.0
    %2097 = vmatmul.mubr.f32.gmra.mrb[0].mxu0 %v1959
    %v2098 = vpop.f32.mrb[0].mxu0
    %v2099 = vadd.f32 %v85, %v2098
    %v2100 = vpop.f32.mrb[0].mxu0
    %2101 = vmatprep.mubr.f32.mxu0 0.0
    %2102 = vmatmul.mubr.f32.gmra.mrb[0].mxu0 %v1962
    %v2103 = vpop.f32.mrb[0].mxu0
    %v2104 = vadd.f32 %v86, %v2103
    %v2105 = vpop.f32.mrb[0].mxu0
    %2106 = vmatprep.mubr.f32.mxu0 0.0
    %2107 = vmatmul.mubr.f32.gmra.mrb[0].mxu0 %v1965
    %v2108 = vpop.f32.mrb[0].mxu0
    %v2109 = vadd.f32 %v87, %v2108
    %v2110 = vpop.f32.mrb[0].mxu0
    %2111 = vmatprep.mubr.f32.mxu0 0.0
    %2112 = vmatmul.mubr.f32.gmra.mrb[0].mxu0 %v1968
    %v2113 = vpop.f32.mrb[0].mxu0
    %v2114 = vadd.f32 %v88, %v2113
    %v2115 = vpop.f32.mrb[0].mxu0
    %2116 = vmatprep.mubr.f32.mxu0 0.0
    %2117 = vmatmul.mubr.f32.gmra.mrb[0].mxu0 %v1971
    %v2118 = vpop.f32.mrb[0].mxu0
    %v2119 = vadd.f32 %v89, %v2118
    %v2120 = vpop.f32.mrb[0].mxu0
    %2121 = vmatprep.mubr.f32.mxu0 0.0
    %2122 = vmatmul.mubr.f32.gmra.mrb[0].mxu0 %v1974
    %v2123 = vpop.f32.mrb[0].mxu0
    %v2124 = vadd.f32 %v90, %v2123
    %v2125 = vpop.f32.mrb[0].mxu0
    %2126 = vmatprep.mubr.f32.mxu0 0.0
    %2127 = vmatmul.mubr.f32.gmra.mrb[0].mxu0 %v1977
    %v2128 = vpop.f32.mrb[0].mxu0
    %v2129 = vadd.f32 %v91, %v2128
    %v2130 = vpop.f32.mrb[0].mxu0
    %2131 = vmatprep.mubr.f32.mxu0 0.0
    %2132 = vmatmul.mubr.f32.gmra.mrb[0].mxu0 %v1980
    %v2133 = vpop.f32.mrb[0].mxu0
    %v2134 = vadd.f32 %v92, %v2133
    %v2135 = vpop.f32.mrb[0].mxu0
    %2136 = vmatprep.mubr.f32.mxu0 0.0
    %2137 = vmatmul.mubr.f32.gmra.mrb[0].mxu0 %v1983
    %v2138 = vpop.f32.mrb[0].mxu0
    %v2139 = vadd.f32 %v93, %v2138
    %v2140 = vpop.f32.mrb[0].mxu0
    %2141 = vdwg.mxu0
    %v2142 = vsel %vm698, %v2064, -inf
    %2143 = vmax.xlane.f32.xlu0 %v2142
    %v2144 = vpop.xlane.xlu0 %2143
    %v2145 = vsel %vm698, %v2069, -inf
    %2146 = vmax.xlane.f32.xlu0 %v2145
    %v2147 = vpop.xlane.xlu0 %2146
    %v2148 = vsel %vm698, %v2074, -inf
    %2149 = vmax.xlane.f32.xlu0 %v2148
    %v2150 = vpop.xlane.xlu0 %2149
    %v2151 = vsel %vm698, %v2079, -inf
    %2152 = vmax.xlane.f32.xlu0 %v2151
    %v2153 = vpop.xlane.xlu0 %2152
    %v2154 = vsel %vm698, %v2084, -inf
    %2155 = vmax.xlane.f32.xlu0 %v2154
    %v2156 = vpop.xlane.xlu0 %2155
    %v2157 = vsel %vm698, %v2089, -inf
    %2158 = vmax.xlane.f32.xlu0 %v2157
    %v2159 = vpop.xlane.xlu0 %2158
    %v2160 = vsel %vm698, %v2094, -inf
    %2161 = vmax.xlane.f32.xlu0 %v2160
    %v2162 = vpop.xlane.xlu0 %2161
    %v2163 = vsel %vm698, %v2099, -inf
    %2164 = vmax.xlane.f32.xlu0 %v2163
    %v2165 = vpop.xlane.xlu0 %2164
    %v2166 = vsel %vm698, %v2104, -inf
    %2167 = vmax.xlane.f32.xlu0 %v2166
    %v2168 = vpop.xlane.xlu0 %2167
    %v2169 = vsel %vm698, %v2109, -inf
    %2170 = vmax.xlane.f32.xlu0 %v2169
    %v2171 = vpop.xlane.xlu0 %2170
    %v2172 = vsel %vm698, %v2114, -inf
    %2173 = vmax.xlane.f32.xlu0 %v2172
    %v2174 = vpop.xlane.xlu0 %2173
    %v2175 = vsel %vm698, %v2119, -inf
    %2176 = vmax.xlane.f32.xlu0 %v2175
    %v2177 = vpop.xlane.xlu0 %2176
    %v2178 = vsel %vm698, %v2124, -inf
    %2179 = vmax.xlane.f32.xlu0 %v2178
    %v2180 = vpop.xlane.xlu0 %2179
    %v2181 = vsel %vm698, %v2129, -inf
    %2182 = vmax.xlane.f32.xlu0 %v2181
    %v2183 = vpop.xlane.xlu0 %2182
    %v2184 = vsel %vm698, %v2134, -inf
    %2185 = vmax.xlane.f32.xlu0 %v2184
    %v2186 = vpop.xlane.xlu0 %2185
    %v2187 = vsel %vm698, %v2139, -inf
    %2188 = vmax.xlane.f32.xlu0 %v2187
    %v2189 = vpop.xlane.xlu0 %2188
    %v2190 = vsub.f32 %v2064, %v2144
    %v2191 = vsub.f32 %v2069, %v2147
    %v2192 = vsub.f32 %v2074, %v2150
    %v2193 = vsub.f32 %v2079, %v2153
    %v2194 = vsub.f32 %v2084, %v2156
    %v2195 = vsub.f32 %v2089, %v2159
    %v2196 = vsub.f32 %v2094, %v2162
    %v2197 = vsub.f32 %v2099, %v2165
    %v2198 = vsub.f32 %v2104, %v2168
    %v2199 = vsub.f32 %v2109, %v2171
    %v2200 = vsub.f32 %v2114, %v2174
    %v2201 = vsub.f32 %v2119, %v2177
    %v2202 = vsub.f32 %v2124, %v2180
    %v2203 = vsub.f32 %v2129, %v2183
    %v2204 = vsub.f32 %v2134, %v2186
    %v2205 = vsub.f32 %v2139, %v2189
    %v2206 = vmul.f32 %v2190, 1.442695
    %v2207 = vpow.pop %v2206
    %v2208 = vmul.f32 %v2191, 1.442695
    %v2209 = vpow.pop %v2208
    %v2210 = vmul.f32 %v2192, 1.442695
    %v2211 = vpow.pop %v2210
    %v2212 = vmul.f32 %v2193, 1.442695
    %v2213 = vpow.pop %v2212
    %v2214 = vmul.f32 %v2194, 1.442695
    %v2215 = vpow.pop %v2214
    %v2216 = vmul.f32 %v2195, 1.442695
    %v2217 = vpow.pop %v2216
    %v2218 = vmul.f32 %v2196, 1.442695
    %v2219 = vpow.pop %v2218
    %v2220 = vmul.f32 %v2197, 1.442695
    %v2221 = vpow.pop %v2220
    %v2222 = vmul.f32 %v2198, 1.442695
    %v2223 = vpow.pop %v2222
    %v2224 = vmul.f32 %v2199, 1.442695
    %v2225 = vpow.pop %v2224
    %v2226 = vmul.f32 %v2200, 1.442695
    %v2227 = vpow.pop %v2226
    %v2228 = vmul.f32 %v2201, 1.442695
    %v2229 = vpow.pop %v2228
    %v2230 = vmul.f32 %v2202, 1.442695
    %v2231 = vpow.pop %v2230
    %v2232 = vmul.f32 %v2203, 1.442695
    %v2233 = vpow.pop %v2232
    %v2234 = vmul.f32 %v2204, 1.442695
    %v2235 = vpow.pop %v2234
    %v2236 = vmul.f32 %v2205, 1.442695
    %v2237 = vpow.pop %v2236
    %v2238 = vsel %vm698, %v2207, 0.0
    %2239 = vadd.xlane.f32.xlu0 %v2238
    %v2240 = vpop.xlane.xlu0 %2239
    %v2241 = vsel %vm698, %v2209, 0.0
    %2242 = vadd.xlane.f32.xlu0 %v2241
    %v2243 = vpop.xlane.xlu0 %2242
    %v2244 = vsel %vm698, %v2211, 0.0
    %2245 = vadd.xlane.f32.xlu0 %v2244
    %v2246 = vpop.xlane.xlu0 %2245
    %v2247 = vsel %vm698, %v2213, 0.0
    %2248 = vadd.xlane.f32.xlu0 %v2247
    %v2249 = vpop.xlane.xlu0 %2248
    %v2250 = vsel %vm698, %v2215, 0.0
    %2251 = vadd.xlane.f32.xlu0 %v2250
    %v2252 = vpop.xlane.xlu0 %2251
    %v2253 = vsel %vm698, %v2217, 0.0
    %2254 = vadd.xlane.f32.xlu0 %v2253
    %v2255 = vpop.xlane.xlu0 %2254
    %v2256 = vsel %vm698, %v2219, 0.0
    %2257 = vadd.xlane.f32.xlu0 %v2256
    %v2258 = vpop.xlane.xlu0 %2257
    %v2259 = vsel %vm698, %v2221, 0.0
    %2260 = vadd.xlane.f32.xlu0 %v2259
    %v2261 = vpop.xlane.xlu0 %2260
    %v2262 = vsel %vm698, %v2223, 0.0
    %2263 = vadd.xlane.f32.xlu0 %v2262
    %v2264 = vpop.xlane.xlu0 %2263
    %v2265 = vsel %vm698, %v2225, 0.0
    %2266 = vadd.xlane.f32.xlu0 %v2265
    %v2267 = vpop.xlane.xlu0 %2266
    %v2268 = vsel %vm698, %v2227, 0.0
    %2269 = vadd.xlane.f32.xlu0 %v2268
    %v2270 = vpop.xlane.xlu0 %2269
    %v2271 = vsel %vm698, %v2229, 0.0
    %2272 = vadd.xlane.f32.xlu0 %v2271
    %v2273 = vpop.xlane.xlu0 %2272
    %v2274 = vsel %vm698, %v2231, 0.0
    %2275 = vadd.xlane.f32.xlu0 %v2274
    %v2276 = vpop.xlane.xlu0 %2275
    %v2277 = vsel %vm698, %v2233, 0.0
    %2278 = vadd.xlane.f32.xlu0 %v2277
    %v2279 = vpop.xlane.xlu0 %2278
    %v2280 = vsel %vm698, %v2235, 0.0
    %2281 = vadd.xlane.f32.xlu0 %v2280
    %v2282 = vpop.xlane.xlu0 %2281
    %v2283 = vsel %vm698, %v2237, 0.0
    %2284 = vadd.xlane.f32.xlu0 %v2283
    %v2285 = vpop.xlane.xlu0 %2284
    %v2286 = vrcp.pop %v2240
    %v2287 = vrcp.pop %v2243
    %v2288 = vrcp.pop %v2246
    %v2289 = vrcp.pop %v2249
    %v2290 = vrcp.pop %v2252
    %v2291 = vrcp.pop %v2255
    %v2292 = vrcp.pop %v2258
    %v2293 = vrcp.pop %v2261
    %v2294 = vrcp.pop %v2264
    %v2295 = vrcp.pop %v2267
    %v2296 = vrcp.pop %v2270
    %v2297 = vrcp.pop %v2273
    %v2298 = vrcp.pop %v2276
    %v2299 = vrcp.pop %v2279
    %v2300 = vrcp.pop %v2282
    %v2301 = vrcp.pop %v2285
    %v2302 = vmul.f32 %v2207, %v2286
    %v2303 = vmul.f32 %v2209, %v2287
    %v2304 = vmul.f32 %v2211, %v2288
    %v2305 = vmul.f32 %v2213, %v2289
    %v2306 = vmul.f32 %v2215, %v2290
    %v2307 = vmul.f32 %v2217, %v2291
    %v2308 = vmul.f32 %v2219, %v2292
    %v2309 = vmul.f32 %v2221, %v2293
    %v2310 = vmul.f32 %v2223, %v2294
    %v2311 = vmul.f32 %v2225, %v2295
    %v2312 = vmul.f32 %v2227, %v2296
    %v2313 = vmul.f32 %v2229, %v2297
    %v2314 = vmul.f32 %v2231, %v2298
    %v2315 = vmul.f32 %v2233, %v2299
    %v2316 = vmul.f32 %v2235, %v2300
    %v2317 = vmul.f32 %v2237, %v2301
    %v2319 = vsel %vm698, %v2302, 0
    %v2322 = vsel %vm698, %v2303, 0
    %v2325 = vsel %vm698, %v2304, 0
    %v2328 = vsel %vm698, %v2305, 0
    %v2331 = vsel %vm698, %v2306, 0
    %v2334 = vsel %vm698, %v2307, 0
    %v2337 = vsel %vm698, %v2308, 0
    %v2340 = vsel %vm698, %v2309, 0
    %v2343 = vsel %vm698, %v2310, 0
    %v2346 = vsel %vm698, %v2311, 0
    %v2349 = vsel %vm698, %v2312, 0
    %v2352 = vsel %vm698, %v2313, 0
    %v2355 = vsel %vm698, %v2314, 0
    %v2358 = vsel %vm698, %v2315, 0
    %v2361 = vsel %vm698, %v2316, 0
    %v2364 = vsel %vm698, %v2317, 0
    %2366 = vmatprep.subr.mxu0 0.0
    %2367 = vmatpush1.msra.mxu0 %v1903
    %2368 = vmatprep.subr.mxu0 0.0
    %2369 = vmatpush1.msra.mxu0 %v1908
    %2370 = vmatprep.subr.mxu0 0.0
    %2371 = vmatpush1.msra.mxu0 %v1913
    %2372 = vmatprep.subr.mxu0 0.0
    %2373 = vmatpush1.msra.mxu0 %v1918
    %2374 = vmatprep.subr.mxu0 0.0
    %2375 = vmatpush1.msra.mxu0 0.0
    %2376 = vmatprep.subr.mxu0 0.0
    %2377 = vmatpush1.msra.mxu0 0.0
    %2378 = vmatprep.subr.mxu0 0.0
    %2379 = vmatpush1.msra.mxu0 0.0
    %2380 = vmatprep.subr.mxu0 0.0
    %2381 = vmatpush1.msra.mxu0 0.0
    %2382 = vmatprep.subr.mxu0 0.0
    %2383 = vmatpush1.msra.mxu0 0.0
    %2384 = vmatprep.subr.mxu0 0.0
    %2385 = vmatpush1.msra.mxu0 0.0
    %2386 = vmatprep.subr.mxu0 0.0
    %2387 = vmatpush1.msra.mxu0 0.0
    %2388 = vmatprep.subr.mxu0 0.0
    %2389 = vmatpush1.msra.mxu0 0.0
    %2390 = vmatprep.subr.mxu0 0.0
    %2391 = vmatpush1.msra.mxu0 0.0
    %2392 = vmatprep.subr.mxu0 0.0
    %2393 = vmatpush1.msra.mxu0 0.0
    %2394 = vmatprep.subr.mxu0 0.0
    %2395 = vmatpush1.msra.mxu0 0.0
    %2396 = vmatprep.subr.mxu0 0.0
    %2397 = vmatpush1.msra.mxu0 0.0
    %2398 = vmatprep.subr.mxu0 0.0
    %2399 = vmatpush1.msra.mxu0 0.0
    %2400 = vmatprep.subr.mxu0 0.0
    %2401 = vmatpush1.msra.mxu0 0.0
    %2402 = vmatprep.subr.mxu0 0.0
    %2403 = vmatpush1.msra.mxu0 0.0
    %2404 = vmatprep.subr.mxu0 0.0
    %2405 = vmatpush1.msra.mxu0 0.0
    %2406 = vmatprep.subr.mxu0 0.0
    %2407 = vmatpush1.msra.mxu0 0.0
    %2408 = vmatprep.subr.mxu0 0.0
    %2409 = vmatpush1.msra.mxu0 0.0
    %2410 = vmatprep.subr.mxu0 0.0
    %2411 = vmatpush1.msra.mxu0 0.0
    %2412 = vmatprep.subr.mxu0 0.0
    %2413 = vmatpush1.msra.mxu0 0.0
    %2414 = vmatprep.subr.mxu0 0.0
    %2415 = vmatpush1.msra.mxu0 0.0
    %2416 = vmatprep.subr.mxu0 0.0
    %2417 = vmatpush1.msra.mxu0 0.0
    %2418 = vmatprep.subr.mxu0 0.0
    %2419 = vmatpush1.msra.mxu0 0.0
    %2420 = vmatprep.subr.mxu0 0.0
    %2421 = vmatpush1.msra.mxu0 0.0
    %2422 = vmatprep.subr.mxu0 0.0
    %2423 = vmatpush1.msra.mxu0 0.0
    %2424 = vmatprep.subr.mxu0 0.0
    %2425 = vmatpush1.msra.mxu0 0.0
    %2426 = vmatprep.subr.mxu0 0.0
    %2427 = vmatpush1.msra.mxu0 0.0
    %2428 = vmatprep.subr.mxu0 0.0
    %2429 = vmatpush1.msra.mxu0 0.0
    %2430 = vmatprep.mubr.f32.mxu0 0.0
    %2431 = vmatmul.mubr.f32.gmra.mrb[0].mxu0 %v2319
    %v2432 = vpop.f32.mrb[0].mxu0
    %v2433 = vadd.f32 0.0, %v2432
    %v2434 = vpop.f32.mrb[0].mxu0
    %2435 = vmatprep.mubr.f32.mxu0 0.0
    %2436 = vmatmul.mubr.f32.gmra.mrb[0].mxu0 %v2322
    %v2437 = vpop.f32.mrb[0].mxu0
    %v2438 = vadd.f32 0.0, %v2437
    %v2439 = vpop.f32.mrb[0].mxu0
    %2440 = vmatprep.mubr.f32.mxu0 0.0
    %2441 = vmatmul.mubr.f32.gmra.mrb[0].mxu0 %v2325
    %v2442 = vpop.f32.mrb[0].mxu0
    %v2443 = vadd.f32 0.0, %v2442
    %v2444 = vpop.f32.mrb[0].mxu0
    %2445 = vmatprep.mubr.f32.mxu0 0.0
    %2446 = vmatmul.mubr.f32.gmra.mrb[0].mxu0 %v2328
    %v2447 = vpop.f32.mrb[0].mxu0
    %v2448 = vadd.f32 0.0, %v2447
    %v2449 = vpop.f32.mrb[0].mxu0
    %2450 = vmatprep.mubr.f32.mxu0 0.0
    %2451 = vmatmul.mubr.f32.gmra.mrb[0].mxu0 %v2331
    %v2452 = vpop.f32.mrb[0].mxu0
    %v2453 = vadd.f32 0.0, %v2452
    %v2454 = vpop.f32.mrb[0].mxu0
    %2455 = vmatprep.mubr.f32.mxu0 0.0
    %2456 = vmatmul.mubr.f32.gmra.mrb[0].mxu0 %v2334
    %v2457 = vpop.f32.mrb[0].mxu0
    %v2458 = vadd.f32 0.0, %v2457
    %v2459 = vpop.f32.mrb[0].mxu0
    %2460 = vmatprep.mubr.f32.mxu0 0.0
    %2461 = vmatmul.mubr.f32.gmra.mrb[0].mxu0 %v2337
    %v2462 = vpop.f32.mrb[0].mxu0
    %v2463 = vadd.f32 0.0, %v2462
    %v2464 = vpop.f32.mrb[0].mxu0
    %2465 = vmatprep.mubr.f32.mxu0 0.0
    %2466 = vmatmul.mubr.f32.gmra.mrb[0].mxu0 %v2340
    %v2467 = vpop.f32.mrb[0].mxu0
    %v2468 = vadd.f32 0.0, %v2467
    %v2469 = vpop.f32.mrb[0].mxu0
    %2470 = vmatprep.mubr.f32.mxu0 0.0
    %2471 = vmatmul.mubr.f32.gmra.mrb[0].mxu0 %v2343
    %v2472 = vpop.f32.mrb[0].mxu0
    %v2473 = vadd.f32 0.0, %v2472
    %v2474 = vpop.f32.mrb[0].mxu0
    %2475 = vmatprep.mubr.f32.mxu0 0.0
    %2476 = vmatmul.mubr.f32.gmra.mrb[0].mxu0 %v2346
    %v2477 = vpop.f32.mrb[0].mxu0
    %v2478 = vadd.f32 0.0, %v2477
    %v2479 = vpop.f32.mrb[0].mxu0
    %2480 = vmatprep.mubr.f32.mxu0 0.0
    %2481 = vmatmul.mubr.f32.gmra.mrb[0].mxu0 %v2349
    %v2482 = vpop.f32.mrb[0].mxu0
    %v2483 = vadd.f32 0.0, %v2482
    %v2484 = vpop.f32.mrb[0].mxu0
    %2485 = vmatprep.mubr.f32.mxu0 0.0
    %2486 = vmatmul.mubr.f32.gmra.mrb[0].mxu0 %v2352
    %v2487 = vpop.f32.mrb[0].mxu0
    %v2488 = vadd.f32 0.0, %v2487
    %v2489 = vpop.f32.mrb[0].mxu0
    %2490 = vmatprep.mubr.f32.mxu0 0.0
    %2491 = vmatmul.mubr.f32.gmra.mrb[0].mxu0 %v2355
    %v2492 = vpop.f32.mrb[0].mxu0
    %v2493 = vadd.f32 0.0, %v2492
    %v2494 = vpop.f32.mrb[0].mxu0
    %2495 = vmatprep.mubr.f32.mxu0 0.0
    %2496 = vmatmul.mubr.f32.gmra.mrb[0].mxu0 %v2358
    %v2497 = vpop.f32.mrb[0].mxu0
    %v2498 = vadd.f32 0.0, %v2497
    %v2499 = vpop.f32.mrb[0].mxu0
    %2500 = vmatprep.mubr.f32.mxu0 0.0
    %2501 = vmatmul.mubr.f32.gmra.mrb[0].mxu0 %v2361
    %v2502 = vpop.f32.mrb[0].mxu0
    %v2503 = vadd.f32 0.0, %v2502
    %v2504 = vpop.f32.mrb[0].mxu0
    %2505 = vmatprep.mubr.f32.mxu0 0.0
    %2506 = vmatmul.mubr.f32.gmra.mrb[0].mxu0 %v2364
    %v2507 = vpop.f32.mrb[0].mxu0
    %v2508 = vadd.f32 0.0, %v2507
    %v2509 = vpop.f32.mrb[0].mxu0
    %2510 = vdwg.mxu0
    %v2511 = vmul.f32 %v2433, %v94
    %v2512 = vmul.f32 %v2438, %v95
    %v2513 = vmul.f32 %v2443, %v96
    %v2514 = vmul.f32 %v2448, %v97
    %v2515 = vmul.f32 %v2453, %v98
    %v2516 = vmul.f32 %v2458, %v99
    %v2517 = vmul.f32 %v2463, %v100
    %v2518 = vmul.f32 %v2468, %v101
    %v2519 = vmul.f32 %v2473, %v102
    %v2520 = vmul.f32 %v2478, %v103
    %v2521 = vmul.f32 %v2483, %v104
    %v2522 = vmul.f32 %v2488, %v105
    %v2523 = vmul.f32 %v2493, %v106
    %v2524 = vmul.f32 %v2498, %v107
    %v2525 = vmul.f32 %v2503, %v108
    %v2526 = vmul.f32 %v2508, %v109
    %v2527 = vadd.f32 %v2511, %v2515
    %v2528 = vadd.f32 %v2512, %v2516
    %v2529 = vadd.f32 %v2513, %v2517
    %v2530 = vadd.f32 %v2514, %v2518
    %v2531 = vadd.f32 %v2527, %v2519
    %v2532 = vadd.f32 %v2528, %v2520
    %v2533 = vadd.f32 %v2529, %v2521
    %v2534 = vadd.f32 %v2530, %v2522
    %v2535 = vadd.f32 %v2531, %v2523
    %v2536 = vadd.f32 %v2532, %v2524
    %v2537 = vadd.f32 %v2533, %v2525
    %v2538 = vadd.f32 %v2534, %v2526
    %s2539 = scalar_lea.vmem %s7, 64
    %v2540 = vld [vmem:[%s2539] sm:$0xff]
    %v2541 = vld [vmem:[%s2539 + $0x8] sm:$0xff]
    %v2542 = vld [vmem:[%s2539 + $0x10] sm:$0xff]
    %v2543 = vld [vmem:[%s2539 + $0x18] sm:$0xff]
    %v2544 = vld [vmem:[%s2539 + $0x20] sm:$0xff]
    %v2545 = vld [vmem:[%s2539 + $0x28] sm:$0xff]
    %v2546 = vld [vmem:[%s2539 + $0x30] sm:$0xff]
    %v2547 = vld [vmem:[%s2539 + $0x38] sm:$0xff]
    %s2548 = scalar_lea.vmem %s8, 1
    %v2549 = vld [vmem:[%s2548] sm:$0x1]
    %v2551 = vlaneseq
    %v2552 = vshrl.u32 %v2551, 7
    %v2553 = vsub.s32 0, %v2552
    %v2554 = vrot.slane %v2549, %v2553
    %v2557 = vsel %vm112, %v2535, 0
    %v2560 = vsel %vm112, %v2536, 0
    %v2563 = vsel %vm112, %v2537, 0
    %v2566 = vsel %vm112, %v2538, 0
    %2568 = vmatprep.subr.mxu0 0.0
    %2569 = vmatpush1.msra.mxu0 %v2540
    %2570 = vmatprep.subr.mxu0 0.0
    %2571 = vmatpush1.msra.mxu0 %v2541
    %2572 = vmatprep.subr.mxu0 0.0
    %2573 = vmatpush1.msra.mxu0 %v2542
    %2574 = vmatprep.subr.mxu0 0.0
    %2575 = vmatpush1.msra.mxu0 %v2543
    %2576 = vmatprep.subr.mxu0 0.0
    %2577 = vmatpush1.msra.mxu0 %v2544
    %2578 = vmatprep.subr.mxu0 0.0
    %2579 = vmatpush1.msra.mxu0 %v2545
    %2580 = vmatprep.subr.mxu0 0.0
    %2581 = vmatpush1.msra.mxu0 %v2546
    %2582 = vmatprep.subr.mxu0 0.0
    %2583 = vmatpush1.msra.mxu0 %v2547
    %2584 = vmatprep.subr.mxu0 0.0
    %2585 = vmatpush1.msra.mxu0 0.0
    %2586 = vmatprep.subr.mxu0 0.0
    %2587 = vmatpush1.msra.mxu0 0.0
    %2588 = vmatprep.subr.mxu0 0.0
    %2589 = vmatpush1.msra.mxu0 0.0
    %2590 = vmatprep.subr.mxu0 0.0
    %2591 = vmatpush1.msra.mxu0 0.0
    %2592 = vmatprep.subr.mxu0 0.0
    %2593 = vmatpush1.msra.mxu0 0.0
    %2594 = vmatprep.subr.mxu0 0.0
    %2595 = vmatpush1.msra.mxu0 0.0
    %2596 = vmatprep.subr.mxu0 0.0
    %2597 = vmatpush1.msra.mxu0 0.0
    %2598 = vmatprep.subr.mxu0 0.0
    %2599 = vmatpush1.msra.mxu0 0.0
    %2600 = vmatprep.subr.mxu0 0.0
    %2601 = vmatpush1.msra.mxu0 0.0
    %2602 = vmatprep.subr.mxu0 0.0
    %2603 = vmatpush1.msra.mxu0 0.0
    %2604 = vmatprep.subr.mxu0 0.0
    %2605 = vmatpush1.msra.mxu0 0.0
    %2606 = vmatprep.subr.mxu0 0.0
    %2607 = vmatpush1.msra.mxu0 0.0
    %2608 = vmatprep.subr.mxu0 0.0
    %2609 = vmatpush1.msra.mxu0 0.0
    %2610 = vmatprep.subr.mxu0 0.0
    %2611 = vmatpush1.msra.mxu0 0.0
    %2612 = vmatprep.subr.mxu0 0.0
    %2613 = vmatpush1.msra.mxu0 0.0
    %2614 = vmatprep.subr.mxu0 0.0
    %2615 = vmatpush1.msra.mxu0 0.0
    %2616 = vmatprep.subr.mxu0 0.0
    %2617 = vmatpush1.msra.mxu0 0.0
    %2618 = vmatprep.subr.mxu0 0.0
    %2619 = vmatpush1.msra.mxu0 0.0
    %2620 = vmatprep.subr.mxu0 0.0
    %2621 = vmatpush1.msra.mxu0 0.0
    %2622 = vmatprep.subr.mxu0 0.0
    %2623 = vmatpush1.msra.mxu0 0.0
    %2624 = vmatprep.subr.mxu0 0.0
    %2625 = vmatpush1.msra.mxu0 0.0
    %2626 = vmatprep.subr.mxu0 0.0
    %2627 = vmatpush1.msra.mxu0 0.0
    %2628 = vmatprep.subr.mxu0 0.0
    %2629 = vmatpush1.msra.mxu0 0.0
    %2630 = vmatprep.subr.mxu0 0.0
    %2631 = vmatpush1.msra.mxu0 0.0
    %2632 = vmatprep.mubr.f32.mxu0 0.0
    %2633 = vmatmul.mubr.f32.gmra.mrb[0].mxu0 %v2557
    %v2634 = vpop.f32.mrb[0].mxu0
    %v2635 = vadd.f32 %v2554, %v2634
    %v2636 = vpop.f32.mrb[0].mxu0
    %2637 = vmatprep.mubr.f32.mxu0 0.0
    %2638 = vmatmul.mubr.f32.gmra.mrb[0].mxu0 %v2560
    %v2639 = vpop.f32.mrb[0].mxu0
    %v2640 = vadd.f32 %v2554, %v2639
    %v2641 = vpop.f32.mrb[0].mxu0
    %2642 = vmatprep.mubr.f32.mxu0 0.0
    %2643 = vmatmul.mubr.f32.gmra.mrb[0].mxu0 %v2563
    %v2644 = vpop.f32.mrb[0].mxu0
    %v2645 = vadd.f32 %v2554, %v2644
    %v2646 = vpop.f32.mrb[0].mxu0
    %2647 = vmatprep.mubr.f32.mxu0 0.0
    %2648 = vmatmul.mubr.f32.gmra.mrb[0].mxu0 %v2566
    %v2649 = vpop.f32.mrb[0].mxu0
    %v2650 = vadd.f32 %v2554, %v2649
    %v2651 = vpop.f32.mrb[0].mxu0
    %2652 = vdwg.mxu0
    %v2653 = vadd.f32 %v1547, %v2635
    %v2654 = vadd.f32 %v1548, %v2640
    %v2655 = vadd.f32 %v1549, %v2645
    %v2656 = vadd.f32 %v1550, %v2650
    %s2657 = scalar_lea.vmem %s11, 1
    %v2658 = vld [vmem:[%s2657] sm:$0x1]
    %s2659 = scalar_lea.vmem %s12, 1
    %v2660 = vld [vmem:[%s2659] sm:$0x1]
    %v2661 = vsel %vm112, %v2653, 0.0
    %2662 = vadd.xlane.f32.xlu0 %v2661
    %v2663 = vpop.xlane.xlu0 %2662
    %v2664 = vsel %vm112, %v2654, 0.0
    %2665 = vadd.xlane.f32.xlu0 %v2664
    %v2666 = vpop.xlane.xlu0 %2665
    %v2667 = vsel %vm112, %v2655, 0.0
    %2668 = vadd.xlane.f32.xlu0 %v2667
    %v2669 = vpop.xlane.xlu0 %2668
    %v2670 = vsel %vm112, %v2656, 0.0
    %2671 = vadd.xlane.f32.xlu0 %v2670
    %v2672 = vpop.xlane.xlu0 %2671
    %v2673 = vmul.f32 %v2663, %v125
    %v2674 = vmul.f32 %v2666, %v125
    %v2675 = vmul.f32 %v2669, %v125
    %v2676 = vmul.f32 %v2672, %v125
    %v2677 = vsub.f32 %v2653, %v2673
    %v2678 = vsub.f32 %v2654, %v2674
    %v2679 = vsub.f32 %v2655, %v2675
    %v2680 = vsub.f32 %v2656, %v2676
    %v2681 = vmul.f32 %v2677, %v2677
    %v2682 = vmul.f32 %v2678, %v2678
    %v2683 = vmul.f32 %v2679, %v2679
    %v2684 = vmul.f32 %v2680, %v2680
    %v2685 = vsel %vm112, %v2681, 0.0
    %2686 = vadd.xlane.f32.xlu0 %v2685
    %v2687 = vpop.xlane.xlu0 %2686
    %v2688 = vsel %vm112, %v2682, 0.0
    %2689 = vadd.xlane.f32.xlu0 %v2688
    %v2690 = vpop.xlane.xlu0 %2689
    %v2691 = vsel %vm112, %v2683, 0.0
    %2692 = vadd.xlane.f32.xlu0 %v2691
    %v2693 = vpop.xlane.xlu0 %2692
    %v2694 = vsel %vm112, %v2684, 0.0
    %2695 = vadd.xlane.f32.xlu0 %v2694
    %v2696 = vpop.xlane.xlu0 %2695
    %v2697 = vmul.f32 %v2687, %v125
    %v2698 = vmul.f32 %v2690, %v125
    %v2699 = vmul.f32 %v2693, %v125
    %v2700 = vmul.f32 %v2696, %v125
    %v2701 = vadd.f32 %v2697, 1e-05
    %v2702 = vadd.f32 %v2698, 1e-05
    %v2703 = vadd.f32 %v2699, 1e-05
    %v2704 = vadd.f32 %v2700, 1e-05
    %v2705 = vrsqrt.pop %v2701
    %v2706 = vrsqrt.pop %v2702
    %v2707 = vrsqrt.pop %v2703
    %v2708 = vrsqrt.pop %v2704
    %v2709 = vmul.f32 %v2677, %v2705
    %v2710 = vmul.f32 %v2678, %v2706
    %v2711 = vmul.f32 %v2679, %v2707
    %v2712 = vmul.f32 %v2680, %v2708
    %v2714 = vlaneseq
    %v2715 = vshrl.u32 %v2714, 7
    %v2716 = vsub.s32 0, %v2715
    %v2717 = vrot.slane %v2658, %v2716
    %v2719 = vmul.f32 %v2709, %v2717
    %v2720 = vmul.f32 %v2710, %v2717
    %v2721 = vmul.f32 %v2711, %v2717
    %v2722 = vmul.f32 %v2712, %v2717
    %v2724 = vlaneseq
    %v2725 = vshrl.u32 %v2724, 7
    %v2726 = vsub.s32 0, %v2725
    %v2727 = vrot.slane %v2660, %v2726
    %v2729 = vadd.f32 %v2719, %v2727
    %v2730 = vadd.f32 %v2720, %v2727
    %v2731 = vadd.f32 %v2721, %v2727
    %v2732 = vadd.f32 %v2722, %v2727
    %s2733 = scalar_lea.vmem %s13, 128
    %v2734 = vld [vmem:[%s2733] sm:$0xff]
    %v2735 = vld [vmem:[%s2733 + $0x8] sm:$0xff]
    %v2736 = vld [vmem:[%s2733 + $0x10] sm:$0xff]
    %v2737 = vld [vmem:[%s2733 + $0x18] sm:$0xff]
    %v2738 = vld [vmem:[%s2733 + $0x20] sm:$0xff]
    %v2739 = vld [vmem:[%s2733 + $0x28] sm:$0xff]
    %v2740 = vld [vmem:[%s2733 + $0x30] sm:$0xff]
    %v2741 = vld [vmem:[%s2733 + $0x38] sm:$0xff]
    %v2742 = vld [vmem:[%s2733 + $0x40] sm:$0xff]
    %v2743 = vld [vmem:[%s2733 + $0x48] sm:$0xff]
    %v2744 = vld [vmem:[%s2733 + $0x50] sm:$0xff]
    %v2745 = vld [vmem:[%s2733 + $0x58] sm:$0xff]
    %v2746 = vld [vmem:[%s2733 + $0x60] sm:$0xff]
    %v2747 = vld [vmem:[%s2733 + $0x68] sm:$0xff]
    %v2748 = vld [vmem:[%s2733 + $0x70] sm:$0xff]
    %v2749 = vld [vmem:[%s2733 + $0x78] sm:$0xff]
    %s2750 = scalar_lea.vmem %s14, 2
    %v2751 = vld [vmem:[%s2750] sm:$0x3]
    %v2753 = vlaneseq
    %v2754 = vshrl.u32 %v2753, 7
    %v2755 = vsub.s32 0, %v2754
    %v2756 = vrot.slane %v2751, %v2755
    %v2757 = vlaneseq
    %v2758 = vshrl.u32 %v2757, 7
    %v2759 = vsub.s32 1, %v2758
    %v2760 = vrot.slane %v2751, %v2759
    %v2764 = vsel %vm112, %v2729, 0
    %v2767 = vsel %vm112, %v2730, 0
    %v2770 = vsel %vm112, %v2731, 0
    %v2773 = vsel %vm112, %v2732, 0
    %2775 = vmatprep.subr.mxu0 %v2735
    %2776 = vmatpush1.msra.mxu0 %v2734
    %2777 = vmatprep.subr.mxu0 %v2737
    %2778 = vmatpush1.msra.mxu0 %v2736
    %2779 = vmatprep.subr.mxu0 %v2739
    %2780 = vmatpush1.msra.mxu0 %v2738
    %2781 = vmatprep.subr.mxu0 %v2741
    %2782 = vmatpush1.msra.mxu0 %v2740
    %2783 = vmatprep.subr.mxu0 %v2743
    %2784 = vmatpush1.msra.mxu0 %v2742
    %2785 = vmatprep.subr.mxu0 %v2745
    %2786 = vmatpush1.msra.mxu0 %v2744
    %2787 = vmatprep.subr.mxu0 %v2747
    %2788 = vmatpush1.msra.mxu0 %v2746
    %2789 = vmatprep.subr.mxu0 %v2749
    %2790 = vmatpush1.msra.mxu0 %v2748
    %2791 = vmatprep.subr.mxu0 0.0
    %2792 = vmatpush1.msra.mxu0 0.0
    %2793 = vmatprep.subr.mxu0 0.0
    %2794 = vmatpush1.msra.mxu0 0.0
    %2795 = vmatprep.subr.mxu0 0.0
    %2796 = vmatpush1.msra.mxu0 0.0
    %2797 = vmatprep.subr.mxu0 0.0
    %2798 = vmatpush1.msra.mxu0 0.0
    %2799 = vmatprep.subr.mxu0 0.0
    %2800 = vmatpush1.msra.mxu0 0.0
    %2801 = vmatprep.subr.mxu0 0.0
    %2802 = vmatpush1.msra.mxu0 0.0
    %2803 = vmatprep.subr.mxu0 0.0
    %2804 = vmatpush1.msra.mxu0 0.0
    %2805 = vmatprep.subr.mxu0 0.0
    %2806 = vmatpush1.msra.mxu0 0.0
    %2807 = vmatprep.subr.mxu0 0.0
    %2808 = vmatpush1.msra.mxu0 0.0
    %2809 = vmatprep.subr.mxu0 0.0
    %2810 = vmatpush1.msra.mxu0 0.0
    %2811 = vmatprep.subr.mxu0 0.0
    %2812 = vmatpush1.msra.mxu0 0.0
    %2813 = vmatprep.subr.mxu0 0.0
    %2814 = vmatpush1.msra.mxu0 0.0
    %2815 = vmatprep.subr.mxu0 0.0
    %2816 = vmatpush1.msra.mxu0 0.0
    %2817 = vmatprep.subr.mxu0 0.0
    %2818 = vmatpush1.msra.mxu0 0.0
    %2819 = vmatprep.subr.mxu0 0.0
    %2820 = vmatpush1.msra.mxu0 0.0
    %2821 = vmatprep.subr.mxu0 0.0
    %2822 = vmatpush1.msra.mxu0 0.0
    %2823 = vmatprep.subr.mxu0 0.0
    %2824 = vmatpush1.msra.mxu0 0.0
    %2825 = vmatprep.subr.mxu0 0.0
    %2826 = vmatpush1.msra.mxu0 0.0
    %2827 = vmatprep.subr.mxu0 0.0
    %2828 = vmatpush1.msra.mxu0 0.0
    %2829 = vmatprep.subr.mxu0 0.0
    %2830 = vmatpush1.msra.mxu0 0.0
    %2831 = vmatprep.subr.mxu0 0.0
    %2832 = vmatpush1.msra.mxu0 0.0
    %2833 = vmatprep.subr.mxu0 0.0
    %2834 = vmatpush1.msra.mxu0 0.0
    %2835 = vmatprep.subr.mxu0 0.0
    %2836 = vmatpush1.msra.mxu0 0.0
    %2837 = vmatprep.subr.mxu0 0.0
    %2838 = vmatpush1.msra.mxu0 0.0
    %2839 = vmatprep.mubr.f32.mxu0 0.0
    %2840 = vmatmul.mubr.f32.gmra.mrb[0].mxu0 %v2764
    %v2841 = vpop.f32.mrb[0].mxu0
    %v2842 = vadd.f32 %v2756, %v2841
    %v2843 = vpop.f32.mrb[0].mxu0
    %v2844 = vadd.f32 %v2760, %v2843
    %2845 = vmatprep.mubr.f32.mxu0 0.0
    %2846 = vmatmul.mubr.f32.gmra.mrb[0].mxu0 %v2767
    %v2847 = vpop.f32.mrb[0].mxu0
    %v2848 = vadd.f32 %v2756, %v2847
    %v2849 = vpop.f32.mrb[0].mxu0
    %v2850 = vadd.f32 %v2760, %v2849
    %2851 = vmatprep.mubr.f32.mxu0 0.0
    %2852 = vmatmul.mubr.f32.gmra.mrb[0].mxu0 %v2770
    %v2853 = vpop.f32.mrb[0].mxu0
    %v2854 = vadd.f32 %v2756, %v2853
    %v2855 = vpop.f32.mrb[0].mxu0
    %v2856 = vadd.f32 %v2760, %v2855
    %2857 = vmatprep.mubr.f32.mxu0 0.0
    %2858 = vmatmul.mubr.f32.gmra.mrb[0].mxu0 %v2773
    %v2859 = vpop.f32.mrb[0].mxu0
    %v2860 = vadd.f32 %v2756, %v2859
    %v2861 = vpop.f32.mrb[0].mxu0
    %v2862 = vadd.f32 %v2760, %v2861
    %2863 = vdwg.mxu0
    %v2864 = vmax.f32 %v2842, 0.0
    %v2865 = vmax.f32 %v2844, 0.0
    %v2866 = vmax.f32 %v2848, 0.0
    %v2867 = vmax.f32 %v2850, 0.0
    %v2868 = vmax.f32 %v2854, 0.0
    %v2869 = vmax.f32 %v2856, 0.0
    %v2870 = vmax.f32 %v2860, 0.0
    %v2871 = vmax.f32 %v2862, 0.0
    %s2872 = scalar_lea.vmem %s15, 256
    %v2873 = vld [vmem:[%s2872] sm:$0xff]
    %v2874 = vld [vmem:[%s2872 + $0x8] sm:$0xff]
    %v2875 = vld [vmem:[%s2872 + $0x10] sm:$0xff]
    %v2876 = vld [vmem:[%s2872 + $0x18] sm:$0xff]
    %v2877 = vld [vmem:[%s2872 + $0x20] sm:$0xff]
    %v2878 = vld [vmem:[%s2872 + $0x28] sm:$0xff]
    %v2879 = vld [vmem:[%s2872 + $0x30] sm:$0xff]
    %v2880 = vld [vmem:[%s2872 + $0x38] sm:$0xff]
    %v2881 = vld [vmem:[%s2872 + $0x40] sm:$0xff]
    %v2882 = vld [vmem:[%s2872 + $0x48] sm:$0xff]
    %v2883 = vld [vmem:[%s2872 + $0x50] sm:$0xff]
    %v2884 = vld [vmem:[%s2872 + $0x58] sm:$0xff]
    %v2885 = vld [vmem:[%s2872 + $0x60] sm:$0xff]
    %v2886 = vld [vmem:[%s2872 + $0x68] sm:$0xff]
    %v2887 = vld [vmem:[%s2872 + $0x70] sm:$0xff]
    %v2888 = vld [vmem:[%s2872 + $0x78] sm:$0xff]
    %v2889 = vld [vmem:[%s2872 + $0x80] sm:$0xff]
    %v2890 = vld [vmem:[%s2872 + $0x88] sm:$0xff]
    %v2891 = vld [vmem:[%s2872 + $0x90] sm:$0xff]
    %v2892 = vld [vmem:[%s2872 + $0x98] sm:$0xff]
    %v2893 = vld [vmem:[%s2872 + $0xa0] sm:$0xff]
    %v2894 = vld [vmem:[%s2872 + $0xa8] sm:$0xff]
    %v2895 = vld [vmem:[%s2872 + $0xb0] sm:$0xff]
    %v2896 = vld [vmem:[%s2872 + $0xb8] sm:$0xff]
    %v2897 = vld [vmem:[%s2872 + $0xc0] sm:$0xff]
    %v2898 = vld [vmem:[%s2872 + $0xc8] sm:$0xff]
    %v2899 = vld [vmem:[%s2872 + $0xd0] sm:$0xff]
    %v2900 = vld [vmem:[%s2872 + $0xd8] sm:$0xff]
    %v2901 = vld [vmem:[%s2872 + $0xe0] sm:$0xff]
    %v2902 = vld [vmem:[%s2872 + $0xe8] sm:$0xff]
    %v2903 = vld [vmem:[%s2872 + $0xf0] sm:$0xff]
    %v2904 = vld [vmem:[%s2872 + $0xf8] sm:$0xff]
    %s2905 = scalar_lea.vmem %s16, 1
    %v2906 = vld [vmem:[%s2905] sm:$0x1]
    %v2908 = vlaneseq
    %v2909 = vshrl.u32 %v2908, 7
    %v2910 = vsub.s32 0, %v2909
    %v2911 = vrot.slane %v2906, %v2910
    %2913 = vmatprep.subr.mxu0 0.0
    %2914 = vmatpush1.msra.mxu0 %v2873
    %2915 = vmatprep.subr.mxu0 0.0
    %2916 = vmatpush1.msra.mxu0 %v2874
    %2917 = vmatprep.subr.mxu0 0.0
    %2918 = vmatpush1.msra.mxu0 %v2875
    %2919 = vmatprep.subr.mxu0 0.0
    %2920 = vmatpush1.msra.mxu0 %v2876
    %2921 = vmatprep.subr.mxu0 0.0
    %2922 = vmatpush1.msra.mxu0 %v2877
    %2923 = vmatprep.subr.mxu0 0.0
    %2924 = vmatpush1.msra.mxu0 %v2878
    %2925 = vmatprep.subr.mxu0 0.0
    %2926 = vmatpush1.msra.mxu0 %v2879
    %2927 = vmatprep.subr.mxu0 0.0
    %2928 = vmatpush1.msra.mxu0 %v2880
    %2929 = vmatprep.subr.mxu0 0.0
    %2930 = vmatpush1.msra.mxu0 %v2881
    %2931 = vmatprep.subr.mxu0 0.0
    %2932 = vmatpush1.msra.mxu0 %v2882
    %2933 = vmatprep.subr.mxu0 0.0
    %2934 = vmatpush1.msra.mxu0 %v2883
    %2935 = vmatprep.subr.mxu0 0.0
    %2936 = vmatpush1.msra.mxu0 %v2884
    %2937 = vmatprep.subr.mxu0 0.0
    %2938 = vmatpush1.msra.mxu0 %v2885
    %2939 = vmatprep.subr.mxu0 0.0
    %2940 = vmatpush1.msra.mxu0 %v2886
    %2941 = vmatprep.subr.mxu0 0.0
    %2942 = vmatpush1.msra.mxu0 %v2887
    %2943 = vmatprep.subr.mxu0 0.0
    %2944 = vmatpush1.msra.mxu0 %v2888
    %2945 = vmatprep.subr.mxu0 0.0
    %2946 = vmatpush1.msra.mxu0 %v2889
    %2947 = vmatprep.subr.mxu0 0.0
    %2948 = vmatpush1.msra.mxu0 %v2890
    %2949 = vmatprep.subr.mxu0 0.0
    %2950 = vmatpush1.msra.mxu0 %v2891
    %2951 = vmatprep.subr.mxu0 0.0
    %2952 = vmatpush1.msra.mxu0 %v2892
    %2953 = vmatprep.subr.mxu0 0.0
    %2954 = vmatpush1.msra.mxu0 %v2893
    %2955 = vmatprep.subr.mxu0 0.0
    %2956 = vmatpush1.msra.mxu0 %v2894
    %2957 = vmatprep.subr.mxu0 0.0
    %2958 = vmatpush1.msra.mxu0 %v2895
    %2959 = vmatprep.subr.mxu0 0.0
    %2960 = vmatpush1.msra.mxu0 %v2896
    %2961 = vmatprep.subr.mxu0 0.0
    %2962 = vmatpush1.msra.mxu0 %v2897
    %2963 = vmatprep.subr.mxu0 0.0
    %2964 = vmatpush1.msra.mxu0 %v2898
    %2965 = vmatprep.subr.mxu0 0.0
    %2966 = vmatpush1.msra.mxu0 %v2899
    %2967 = vmatprep.subr.mxu0 0.0
    %2968 = vmatpush1.msra.mxu0 %v2900
    %2969 = vmatprep.subr.mxu0 0.0
    %2970 = vmatpush1.msra.mxu0 %v2901
    %2971 = vmatprep.subr.mxu0 0.0
    %2972 = vmatpush1.msra.mxu0 %v2902
    %2973 = vmatprep.subr.mxu0 0.0
    %2974 = vmatpush1.msra.mxu0 %v2903
    %2975 = vmatprep.subr.mxu0 0.0
    %2976 = vmatpush1.msra.mxu0 %v2904
    %2977 = vmatprep.mubr.f32.mxu0 %v2865
    %2978 = vmatmul.mubr.f32.gmra.mrb[0].mxu0 %v2864
    %v2979 = vpop.f32.mrb[0].mxu0
    %v2980 = vadd.f32 %v2911, %v2979
    %v2981 = vpop.f32.mrb[0].mxu0
    %2982 = vmatprep.mubr.f32.mxu0 %v2867
    %2983 = vmatmul.mubr.f32.gmra.mrb[0].mxu0 %v2866
    %v2984 = vpop.f32.mrb[0].mxu0
    %v2985 = vadd.f32 %v2911, %v2984
    %v2986 = vpop.f32.mrb[0].mxu0
    %2987 = vmatprep.mubr.f32.mxu0 %v2869
    %2988 = vmatmul.mubr.f32.gmra.mrb[0].mxu0 %v2868
    %v2989 = vpop.f32.mrb[0].mxu0
    %v2990 = vadd.f32 %v2911, %v2989
    %v2991 = vpop.f32.mrb[0].mxu0
    %2992 = vmatprep.mubr.f32.mxu0 %v2871
    %2993 = vmatmul.mubr.f32.gmra.mrb[0].mxu0 %v2870
    %v2994 = vpop.f32.mrb[0].mxu0
    %v2995 = vadd.f32 %v2911, %v2994
    %v2996 = vpop.f32.mrb[0].mxu0
    %2997 = vdwg.mxu0
    %v2998 = vadd.f32 %v2653, %v2980
    %v2999 = vadd.f32 %v2654, %v2985
    %v3000 = vadd.f32 %v2655, %v2990
    %v3001 = vadd.f32 %v2656, %v2995
    %3002 = vst.msk [vmem:[#allocation2] sm:$0xff] %vm112, %v2998
    %3003 = vst.msk [vmem:[#allocation2 + $0x8] sm:$0xff] %vm112, %v2999
    %3004 = vst.msk [vmem:[#allocation2 + $0x10] sm:$0xff] %vm112, %v3000
    %3005 = vst.msk [vmem:[#allocation2 + $0x18] sm:$0xff] %vm112, %v3001
    %v3006 = vld [vmem:[%s17] sm:$0xff]
    %v3007 = vld [vmem:[%s17 + $0x8] sm:$0xff]
    %v3008 = vld [vmem:[%s17 + $0x10] sm:$0xff]
    %v3009 = vld [vmem:[%s17 + $0x18] sm:$0xff]
    %v3010 = vld [vmem:[%s17 + $0x20] sm:$0xff]
    %v3011 = vld [vmem:[%s17 + $0x28] sm:$0xff]
    %v3012 = vld [vmem:[%s17 + $0x30] sm:$0xff]
    %v3013 = vld [vmem:[%s17 + $0x38] sm:$0xff]
    %v3014 = vld [vmem:[%s18] sm:$0x1]
    %v3016 = vlaneseq
    %v3017 = vshrl.u32 %v3016, 7
    %v3018 = vsub.s32 0, %v3017
    %v3019 = vrot.slane %v3014, %v3018
    %v3022 = vsel %vm112, %v66, 0
    %v3025 = vsel %vm112, %v67, 0
    %v3028 = vsel %vm112, %v68, 0
    %v3031 = vsel %vm112, %v69, 0
    %3033 = vmatprep.subr.mxu0 0.0
    %3034 = vmatpush1.msra.mxu0 %v3006
    %3035 = vmatprep.subr.mxu0 0.0
    %3036 = vmatpush1.msra.mxu0 %v3007
    %3037 = vmatprep.subr.mxu0 0.0
    %3038 = vmatpush1.msra.mxu0 %v3008
    %3039 = vmatprep.subr.mxu0 0.0
    %3040 = vmatpush1.msra.mxu0 %v3009
    %3041 = vmatprep.subr.mxu0 0.0
    %3042 = vmatpush1.msra.mxu0 %v3010
    %3043 = vmatprep.subr.mxu0 0.0
    %3044 = vmatpush1.msra.mxu0 %v3011
    %3045 = vmatprep.subr.mxu0 0.0
    %3046 = vmatpush1.msra.mxu0 %v3012
    %3047 = vmatprep.subr.mxu0 0.0
    %3048 = vmatpush1.msra.mxu0 %v3013
    %3049 = vmatprep.subr.mxu0 0.0
    %3050 = vmatpush1.msra.mxu0 0.0
    %3051 = vmatprep.subr.mxu0 0.0
    %3052 = vmatpush1.msra.mxu0 0.0
    %3053 = vmatprep.subr.mxu0 0.0
    %3054 = vmatpush1.msra.mxu0 0.0
    %3055 = vmatprep.subr.mxu0 0.0
    %3056 = vmatpush1.msra.mxu0 0.0
    %3057 = vmatprep.subr.mxu0 0.0
    %3058 = vmatpush1.msra.mxu0 0.0
    %3059 = vmatprep.subr.mxu0 0.0
    %3060 = vmatpush1.msra.mxu0 0.0
    %3061 = vmatprep.subr.mxu0 0.0
    %3062 = vmatpush1.msra.mxu0 0.0
    %3063 = vmatprep.subr.mxu0 0.0
    %3064 = vmatpush1.msra.mxu0 0.0
    %3065 = vmatprep.subr.mxu0 0.0
    %3066 = vmatpush1.msra.mxu0 0.0
    %3067 = vmatprep.subr.mxu0 0.0
    %3068 = vmatpush1.msra.mxu0 0.0
    %3069 = vmatprep.subr.mxu0 0.0
    %3070 = vmatpush1.msra.mxu0 0.0
    %3071 = vmatprep.subr.mxu0 0.0
    %3072 = vmatpush1.msra.mxu0 0.0
    %3073 = vmatprep.subr.mxu0 0.0
    %3074 = vmatpush1.msra.mxu0 0.0
    %3075 = vmatprep.subr.mxu0 0.0
    %3076 = vmatpush1.msra.mxu0 0.0
    %3077 = vmatprep.subr.mxu0 0.0
    %3078 = vmatpush1.msra.mxu0 0.0
    %3079 = vmatprep.subr.mxu0 0.0
    %3080 = vmatpush1.msra.mxu0 0.0
    %3081 = vmatprep.subr.mxu0 0.0
    %3082 = vmatpush1.msra.mxu0 0.0
    %3083 = vmatprep.subr.mxu0 0.0
    %3084 = vmatpush1.msra.mxu0 0.0
    %3085 = vmatprep.subr.mxu0 0.0
    %3086 = vmatpush1.msra.mxu0 0.0
    %3087 = vmatprep.subr.mxu0 0.0
    %3088 = vmatpush1.msra.mxu0 0.0
    %3089 = vmatprep.subr.mxu0 0.0
    %3090 = vmatpush1.msra.mxu0 0.0
    %3091 = vmatprep.subr.mxu0 0.0
    %3092 = vmatpush1.msra.mxu0 0.0
    %3093 = vmatprep.subr.mxu0 0.0
    %3094 = vmatpush1.msra.mxu0 0.0
    %3095 = vmatprep.subr.mxu0 0.0
    %3096 = vmatpush1.msra.mxu0 0.0
    %3097 = vmatprep.mubr.f32.mxu0 0.0
    %3098 = vmatmul.mubr.f32.gmra.mrb[0].mxu0 %v3022
    %v3099 = vpop.f32.mrb[0].mxu0
    %v3100 = vadd.f32 %v3019, %v3099
    %v3101 = vpop.f32.mrb[0].mxu0
    %3102 = vmatprep.mubr.f32.mxu0 0.0
    %3103 = vmatmul.mubr.f32.gmra.mrb[0].mxu0 %v3025
    %v3104 = vpop.f32.mrb[0].mxu0
    %v3105 = vadd.f32 %v3019, %v3104
    %v3106 = vpop.f32.mrb[0].mxu0
    %3107 = vmatprep.mubr.f32.mxu0 0.0
    %3108 = vmatmul.mubr.f32.gmra.mrb[0].mxu0 %v3028
    %v3109 = vpop.f32.mrb[0].mxu0
    %v3110 = vadd.f32 %v3019, %v3109
    %v3111 = vpop.f32.mrb[0].mxu0
    %3112 = vmatprep.mubr.f32.mxu0 0.0
    %3113 = vmatmul.mubr.f32.gmra.mrb[0].mxu0 %v3031
    %v3114 = vpop.f32.mrb[0].mxu0
    %v3115 = vadd.f32 %v3019, %v3114
    %v3116 = vpop.f32.mrb[0].mxu0
    %3117 = vdwg.mxu0
    %3118 = vst [vmem:[#allocation4] sm:$0xff] %v3100
    %3119 = vst [vmem:[#allocation4 + $0x8] sm:$0xff] %v3105
    %3120 = vst [vmem:[#allocation4 + $0x10] sm:$0xff] %v3110
    %3121 = vst [vmem:[#allocation4 + $0x18] sm:$0xff] %v3115
    // Predicated region
    $region78: #{_lambda_.1} parent=1 // pred_check
      _
    $region79: #{_lambda_.1} parent=1 // pred_check_branch
      %3123 = sbr.rel (0) target = $region81
    $region80: #{_lambda_.1} parent=1 // pred_region
      %s3125 = ssub.s32 512, 512
      %3126 = vsyncadd [#allocation3], %s3125
      %s3127 = sshll.u32 [#allocation2], 4
      %s3128 = int_to_ptr.vmem [resolvable:$true] %s3127
      %3133 = dma.vmem_to_hbm [thread:$0]  %s3128, 512, %s19, [#allocation3], 128, 128, 8
    $region81: #{_lambda_.1} parent=1 // pred_fallthru
      _
    // Predicated region
    $region82: #{_lambda_.1} parent=1 // pred_check
      _
    $region83: #{_lambda_.1} parent=1 // pred_check_branch
      %3135 = sbr.rel (0) target = $region85
    $region84: #{_lambda_.1} parent=1 // pred_region
      %s3137 = ssub.s32 512, 512
      %3138 = vsyncadd [#allocation5], %s3137
      %s3139 = sshll.u32 [#allocation4], 4
      %s3140 = int_to_ptr.vmem [resolvable:$true] %s3139
      %3145 = dma.vmem_to_hbm [thread:$0]  %s3140, 512, %s20, [#allocation5], 128, 128, 8
    $region85: #{_lambda_.1} parent=1 // pred_fallthru
      _
    // Predicated region
    $region86: #{_lambda_.1} parent=1 // pred_check
      _
    $region87: #{_lambda_.1} parent=1 // pred_check_branch
      %3147 = sbr.rel (0) target = $region89
    $region88: #{_lambda_.1} parent=1 // pred_region
      %3148 = dma.done [#allocation3], 512
    $region89: #{_lambda_.1} parent=1 // pred_fallthru
      _
    // Predicated region
    $region90: #{_lambda_.1} parent=1 // pred_check
      _
    $region91: #{_lambda_.1} parent=1 // pred_check_branch
      %3150 = sbr.rel (0) target = $region93
    $region92: #{_lambda_.1} parent=1 // pred_region
      %3151 = dma.done [#allocation5], 512
    $region93: #{_lambda_.1} parent=1 // pred_fallthru
      _
    %3152 = vsyncpa [#allocation3], 1
    %3153 = vsyncpa [#allocation5], 1

</llo_original>
